<compile_context>
chip_gen: v6e
topology: v6e:2x2x1
jax: 0.10.0
libtpu: 0.0.40
codegen_flags: <defaults>
</compile_context>

<pallas_src>
import numpy as np
import jax
import jax.numpy as jnp
from jax import lax
from jax.experimental import pallas as pl
from jax.experimental.pallas import tpu as pltpu

NUM_LAYERS = 3          # FandD_M.forward uses F1..F3 (+D1..D3); F4/D4 exist but are unused.
VMEM_LIMIT = 32 * 1024 * 1024


# ---------------------------------------------------------------------------
# Deterministic separable operator matrices (built once, plain numpy)
# ---------------------------------------------------------------------------

def avg_down_matrix(n_out):
    m = np.zeros((n_out, 2 * n_out), np.float32)
    m[np.arange(n_out), 2 * np.arange(n_out)] = 0.5
    m[np.arange(n_out), 2 * np.arange(n_out) + 1] = 0.5
    return jnp.asarray(m)


def bilinear_up2_matrix(n_in):
    n_out = 2 * n_in
    m = np.zeros((n_out, n_in), np.float32)
    for d in range(n_out):
        src = (d + 0.5) / 2.0 - 0.5          # align_corners=False mapping
        i0 = int(np.floor(src))
        t = src - i0
        for idx, wgt in ((i0, 1.0 - t), (i0 + 1, t)):
            m[d, min(max(idx, 0), n_in - 1)] += wgt
    return jnp.asarray(m)


def _cub1(x, A=-0.75):
    return ((A + 2.0) * x - (A + 3.0)) * x * x + 1.0


def _cub2(x, A=-0.75):
    return ((A * x - 5.0 * A) * x + 8.0 * A) * x - 4.0 * A


def bicubic_up2_matrix(n_in):
    n_out = 2 * n_in
    m = np.zeros((n_out, n_in), np.float32)
    for d in range(n_out):
        src = (d + 0.5) / 2.0 - 0.5
        i0 = int(np.floor(src))
        t = src - i0
        ws = (_cub2(t + 1.0), _cub1(t), _cub1(1.0 - t), _cub2(2.0 - t))
        for k, wgt in enumerate(ws):
            m[d, min(max(i0 - 1 + k, 0), n_in - 1)] += wgt
    return jnp.asarray(m)


# ---------------------------------------------------------------------------
# Kernel 1: I / DSP / X0 precompute — lane-dense flat layouts, full-lane stores
# ---------------------------------------------------------------------------

def _pre_kernel(wreg_ref, hs_ref, preg_ref, mcp_ref, kbl_ref, kbc_ref,
                i_ref, dsp_ref, x0_ref):
    hs = hs_ref[...]                                                        # (NC, hw)
    # conv_p channel reduction as a single matmul (all n at once)
    ilo = jnp.dot(mcp_ref[...], hs, preferred_element_type=jnp.float32)     # (N, hw)
    # bilinear x2 upsample as a kron operator: (N, hw) @ (hw, HW)
    ihi = jnp.dot(ilo, kbl_ref[...], preferred_element_type=jnp.float32)    # (N, HW)
    i_ref[...] = ihi
    # DSP = tanh(REG([I, PAN_reg])) — EUP tanh, 256-lane stores
    preg = preg_ref[...]                                                    # (N, HW)
    dsp_ref[0] = jnp.tanh(wreg_ref[0] * ihi + wreg_ref[1] * preg)
    dsp_ref[1] = jnp.tanh(wreg_ref[2] * ihi + wreg_ref[3] * preg)
    # X0 = bicubic x2 upsample of HS, all (n, c) in one lane-dense matmul
    x0_ref[...] = jnp.dot(hs, kbc_ref[...], preferred_element_type=jnp.float32)


def fused_pre(p, HS, PAN_reg):
    N, C, h, w = HS.shape
    H, W = 2 * h, 2 * w
    hw, HW, NC = h * w, H * W, N * C
    hs_flat = HS.reshape(NC, hw)
    preg_flat = PAN_reg.reshape(N, HW)
    mm = lambda i: (0, 0)
    return pl.pallas_call(
        _pre_kernel,
        out_shape=(jax.ShapeDtypeStruct((N, HW), jnp.float32),     # I   (flat)
                   jax.ShapeDtypeStruct((2, N, HW), jnp.float32),  # DSP (d, n, HW)
                   jax.ShapeDtypeStruct((NC, HW), jnp.float32)),   # X0  (flat)
        grid=(1,),
        in_specs=[pl.BlockSpec(memory_space=pltpu.MemorySpace.SMEM),   # w_reg (4,)
                  pl.BlockSpec((NC, hw), mm),
                  pl.BlockSpec((N, HW), mm),
                  pl.BlockSpec((N, NC), mm),
                  pl.BlockSpec((hw, HW), mm),
                  pl.BlockSpec((hw, HW), mm)],
        out_specs=(pl.BlockSpec((N, HW), mm),
                   pl.BlockSpec((2, N, HW), lambda i: (0, 0, 0)),
                   pl.BlockSpec((NC, HW), mm)),
        compiler_params=pltpu.CompilerParams(
            dimension_semantics=("arbitrary",),
            vmem_limit_bytes=VMEM_LIMIT),
    )(p['w_reg'].reshape(-1), hs_flat, preg_flat, p['Mcp'], p['KBL'], p['KBC'])


# ---------------------------------------------------------------------------
# Kernel 2: all three FusionM layers + Denoise, one pallas_call, grid=(N, 3)
# ---------------------------------------------------------------------------

def _layers_kernel(eta_ref, hs_ref, pan_ref, x0_ref, ww_ref, wwt_ref, kie_ref,
                   kbb_ref, kup_ref, wrtr_ref, wden_ref, wr_ref,
                   o_ref, x_sc, s_sc, g_sc):
    k = pl.program_id(1)

    @pl.when(k == 0)
    def _init():
        kie = kie_ref[0]                                                    # (HW, HW)
        # Per-batch composed operator: warp -> B(B_T(.)) -> @E_as_D, reused by all layers.
        t = jnp.dot(ww_ref[0], kbb_ref[...], preferred_element_type=jnp.float32)
        g_sc[...] = jnp.dot(t, kie, preferred_element_type=jnp.float32)
        # S = B_T(HS) @ E_as_D + R_T(PAN), fixed across layers.
        sbt = jnp.dot(hs_ref[0], kup_ref[...], preferred_element_type=jnp.float32)  # (C, HW)
        s_sc[...] = (jnp.dot(sbt, kie, preferred_element_type=jnp.float32)
                     + wr_ref[...] * pan_ref[0])                            # (C,1)*(1,HW)
        # Layer-1 pre-warp of X0 by DSP_T (detached in the original).
        x_sc[...] = jnp.dot(x0_ref[0], wwt_ref[0], preferred_element_type=jnp.float32)

    eta = eta_ref[k]
    xp = x_sc[...]                                                          # (C, HW)
    xp1 = jnp.dot(xp, g_sc[...], preferred_element_type=jnp.float32)        # B(B_T(warp(X)))@E
    xp2 = jnp.dot(wrtr_ref[...], xp, preferred_element_type=jnp.float32)    # R_T(R(X))
    uk = xp + eta * (s_sc[...] - xp1 - xp2)
    xn = jnp.dot(wden_ref[...], uk, preferred_element_type=jnp.float32)     # Denoise (I+Wd)Uk
    x_sc[...] = xn
    o_ref[0] = xn


def fused_layers(p, HS, PAN, X0_flat, Ww, WwT, KIE):
    N, C, h, w = HS.shape
    H, W = 2 * h, 2 * w
    hw, HW = h * w, H * W
    hs3 = HS.reshape(N, C, hw)
    pan3 = PAN.reshape(N, 1, HW)
    x03 = X0_flat.reshape(N, C, HW)
    per_n = lambda n, k: (n, 0, 0)
    const = lambda n, k: (0, 0)
    return pl.pallas_call(
        _layers_kernel,
        out_shape=jax.ShapeDtypeStruct((N, C, HW), jnp.float32),
        grid=(N, NUM_LAYERS),
        in_specs=[pl.BlockSpec(memory_space=pltpu.MemorySpace.SMEM),   # eta (NUM_LAYERS,)
                  pl.BlockSpec((1, C, hw), per_n),                      # HS
                  pl.BlockSpec((1, 1, HW), per_n),                      # PAN
                  pl.BlockSpec((1, C, HW), per_n),                      # X0
                  pl.BlockSpec((1, HW, HW), per_n),                     # Ww  (warp by DSP)
                  pl.BlockSpec((1, HW, HW), per_n),                     # WwT (warp by DSP_T)
                  pl.BlockSpec((1, HW, HW), per_n),                     # kron(I_H, E_as_D)
                  pl.BlockSpec((HW, HW), const),                        # kron(L_bbt, R_bbt)
                  pl.BlockSpec((hw, HW), const),                        # kron(D_h, D_w) = B_T
                  pl.BlockSpec((C, C), const),                          # R_T o R channel mix
                  pl.BlockSpec((C, C), const),                          # I + Wd (Denoise)
                  pl.BlockSpec((C, 1), const)],                         # w_R column (R_T(PAN))
        out_specs=pl.BlockSpec((1, C, HW), per_n),
        scratch_shapes=[pltpu.VMEM((C, HW), jnp.float32),   # X  (layer state)
                        pltpu.VMEM((C, HW), jnp.float32),   # S
                        pltpu.VMEM((HW, HW), jnp.float32)], # composed G
        compiler_params=pltpu.CompilerParams(
            dimension_semantics=("parallel", "arbitrary"),
            vmem_limit_bytes=VMEM_LIMIT),
    )(p['eta'][:NUM_LAYERS], hs3, pan3, x03, Ww, WwT, KIE,
      p['KBB'], p['KUP'], p['w_RtR'], p['w_den'], p['wr_col'])


# ---------------------------------------------------------------------------
# XLA glue: bilinear warp -> dense per-batch linear operator
# ---------------------------------------------------------------------------

def build_warp(dsp):
    """Flat bilinear gather indices/weights from a displacement field (N,2,H,W)."""
    n, _, hh, ww = dsp.shape
    yy = jnp.arange(hh, dtype=jnp.float32)[None, :, None]
    xx = jnp.arange(ww, dtype=jnp.float32)[None, None, :]
    sy = yy + dsp[:, 0]
    sx = xx + dsp[:, 1]
    y0f, x0f = jnp.floor(sy), jnp.floor(sx)
    ty, tx = sy - y0f, sx - x0f
    y0 = jnp.clip(y0f.astype(jnp.int32), 0, hh - 1)
    y1 = jnp.clip(y0f.astype(jnp.int32) + 1, 0, hh - 1)
    x0 = jnp.clip(x0f.astype(jnp.int32), 0, ww - 1)
    x1 = jnp.clip(x0f.astype(jnp.int32) + 1, 0, ww - 1)
    idx = jnp.stack([y0 * ww + x0, y0 * ww + x1, y1 * ww + x0, y1 * ww + x1], axis=1)
    wts = jnp.stack([(1 - ty) * (1 - tx), (1 - ty) * tx, ty * (1 - tx), ty * tx], axis=1)
    return idx.reshape(n, 4, hh * ww), wts.reshape(n, 4, hh * ww)


def warp_matrix(dsp):
    # TODO(synk): bilinear grid-sample is a data-dependent per-pixel gather with no clean,
    # portable Pallas-TPU expression; it is converted here (XLA) into a dense per-batch
    # linear operator so the warp itself runs as MXU matmuls inside the fused layer kernel.
    n, _, hh, ww = dsp.shape
    hw = hh * ww
    idx, wts = build_warp(dsp)
    oh = jax.nn.one_hot(idx, hw, dtype=jnp.float32)        # (n, 4, dst, src)
    return jnp.einsum('nkpq,nkp->nqp', oh, wts)            # (n, src, dst): x_flat @ M = warp(x)


def apply_warp(x, idx, wts):
    """Gather-based warp — only used by the pure-JAX reference."""
    n, c, hh, ww = x.shape
    xf = x.reshape(n, c, hh * ww)
    out = jnp.zeros_like(xf)
    for k in range(4):
        g = jnp.take_along_axis(
            xf, jnp.broadcast_to(idx[:, k][:, None, :], xf.shape), axis=2)
        out = out + wts[:, k][:, None, :] * g
    return out.reshape(n, c, hh, ww)


# ---------------------------------------------------------------------------
# FandD_M forward (3 FusionM layers + Denoise), fully fused path
# ---------------------------------------------------------------------------

@jax.jit
def fandd_forward(p, PAN, PAN_reg, HS, DSP_T):
    N, C, h, w = HS.shape
    H, W = 2 * h, 2 * w
    HW = H * W

    # Kernel 1: I, DSP, X0 in flat lane-dense layouts.
    I_flat, DSP2, X0_flat = fused_pre(p, HS, PAN_reg)
    I = I_flat.reshape(N, 1, H, W)
    DSP = jnp.transpose(DSP2, (1, 0, 2)).reshape(N, 2, H, W)

    # Warp operators from the (detached) displacement fields.
    Ww = warp_matrix(lax.stop_gradient(DSP))       # (N, HW, HW)
    WwT = warp_matrix(lax.stop_gradient(DSP_T))    # (N, HW, HW)

    # E_as_D = warp(eye(size_E)); valid because size_E == H == W (as in the original module).
    E = jnp.einsum('niiab->nab', Ww.reshape(N, H, W, H, W))                      # (N, W, W)
    KIE = jnp.einsum('ia,njb->nijab',
                     jnp.eye(H, dtype=jnp.float32), E).reshape(N, HW, HW)        # kron(I_H, E)

    # Kernel 2: all three FusionM layers + Denoise.
    X3_flat = fused_layers(p, HS, PAN, X0_flat, Ww, WwT, KIE)
    return X3_flat.reshape(N, C, H, W), DSP, I


# ---------------------------------------------------------------------------
# Parameters (incl. fused/derived constants, built once)
# ---------------------------------------------------------------------------

def make_params(key, N, C, h, w):
    H, W = 2 * h, 2 * w
    f32 = jnp.float32
    ks = jax.random.split(key, 4)
    conv_p = 0.3 * jax.random.normal(ks[0], (1, C), f32)
    w_R = (jnp.full((1, C), 1.0 / C, f32)
           + 0.05 * jax.random.normal(ks[1], (1, C), f32))
    w_reg = 0.3 * jax.random.normal(ks[2], (2, 2), f32)
    w_d = 0.05 * jax.random.normal(ks[3], (C, C), f32)
    # Per-layer FusionM.eta (original inits all to 2.0; distinct values here to make the
    # layer-indexing validation meaningful).
    eta = jnp.array([2.0, 1.7, 2.3, 2.0], f32)

    D_h, D_w = avg_down_matrix(h), avg_down_matrix(w)
    D_H, D_W = avg_down_matrix(H), avg_down_matrix(W)
    bilin_L, bilin_R = bilinear_up2_matrix(h), bilinear_up2_matrix(w).T
    bicub_L, bicub_R = bicubic_up2_matrix(h), bicubic_up2_matrix(w).T
    L_bbt = D_H @ D_H.T                      # (H, H)
    R_bbt = D_W @ D_W.T                      # (W, W)

    p = dict(
        conv_p=conv_p, w_R=w_R, w_reg=w_reg, w_d=w_d, eta=eta,
        # unfused separable matrices (used by the pure-JAX reference)
        bilin_L=bilin_L, bilin_R=bilin_R, bicub_L=bicub_L, bicub_R=bicub_R,
        up_L_lo=D_h.T, up_R_lo=D_w, up_L_hi=D_H.T, up_R_hi=D_W,
        down_L_hi=D_H, down_R_hi=D_W.T,
        # fused flat operators (built once; structured — no NCW x NCW krons)
        Mcp=jnp.kron(jnp.eye(N, dtype=f32), conv_p),    # (N, NC)   conv_p over channels
        KBL=jnp.kron(bilin_L.T, bilin_R),               # (hw, HW)  bilinear x2
        KBC=jnp.kron(bicub_L.T, bicub_R),               # (hw, HW)  bicubic  x2
        KUP=jnp.kron(D_h, D_w),                         # (hw, HW)  B_T on lo-res
        KBB=jnp.kron(L_bbt, R_bbt),                     # (HW, HW)  B(B_T(.)) on hi-res
        w_RtR=w_R.T @ w_R,                              # (C, C)    R_T o R
        w_den=jnp.eye(C, dtype=f32) + w_d,              # (C, C)    Denoise: I + Wd
        wr_col=w_R.reshape(C, 1),                       # (C, 1)    R_T(PAN) weights
    )
    return p


# ---------------------------------------------------------------------------
# Pure-JAX reference (mirrors the original unfused PyTorch graph) for validation
# ---------------------------------------------------------------------------

def ref_forward(p, PAN, PAN_reg, HS, DSP_T):
    N, C, h, w = HS.shape
    H, W = 2 * h, 2 * w
    chan = lambda x, m: jnp.einsum('oc,nchw->nohw', m, x)
    sep = lambda x, L, R: jnp.einsum('ah,nchw,wb->ncab', L, x, R)

    def warp(x, dsp):
        idx, wts = build_warp(dsp)
        return apply_warp(x, idx, wts)

    ones = jnp.broadcast_to(jnp.eye(W, dtype=jnp.float32)[None, None], (N, C, W, W))

    def fusion(layer, Xpk, eta):
        I = sep(chan(HS, p['conv_p']), p['bilin_L'], p['bilin_R'])
        DSP = jnp.tanh(chan(jnp.concatenate([I, PAN_reg], axis=1), p['w_reg']))
        if layer == 1:
            Xpk = warp(Xpk, DSP_T)
        E = warp(ones, DSP)
        HS_p = jnp.matmul(sep(HS, p['up_L_lo'], p['up_R_lo']), E)
        PAN_p = chan(PAN, p['w_R'].T)
        Xp1 = warp(Xpk, DSP)
        Xp1 = sep(sep(Xp1, p['up_L_hi'], p['up_R_hi']), p['down_L_hi'], p['down_R_hi'])
        Xp1 = jnp.matmul(Xp1, E)
        Xp2 = chan(chan(Xpk, p['w_R']), p['w_R'].T)
        Uk = eta * HS_p + eta * PAN_p + Xpk - eta * Xp1 - eta * Xp2
        return Uk, DSP, I

    den = lambda x: x + chan(x, p['w_d'])
    X0 = sep(HS, p['bicub_L'], p['bicub_R'])
    X1, DSP1, I = fusion(1, X0, p['eta'][0]); X1 = den(X1)
    X2, _, _ = fusion(2, X1, p['eta'][1]); X2 = den(X2)
    X3, _, _ = fusion(3, X2, p['eta'][2]); X3 = den(X3)
    return X3, DSP1, I


# ---------------------------------------------------------------------------
# Main
# ---------------------------------------------------------------------------

if __name__ == "__main__":
    N, C, h, w = 2, 4, 8, 8          # batch, bands, low-res spatial
    H, W = 2 * h, 2 * w              # high-res spatial (scale_factor=2), size_E = W
    assert H == W, "original FusionM (Generate_ONES/STF) assumes size_E == H == W"

    key = jax.random.PRNGKey(0)
    kp, k1, k2, k3, k4 = jax.random.split(key, 5)
    p = make_params(kp, N, C, h, w)

    PAN = jax.random.normal(k1, (N, 1, H, W), jnp.float32)
    PAN_reg = jax.random.normal(k2, (N, 1, H, W), jnp.float32)
    HS = jax.random.normal(k3, (N, C, h, w), jnp.float32)
    DSP_T = 0.5 * jax.random.normal(k4, (N, 2, H, W), jnp.float32)

    X3, DSP1, I = fandd_forward(p, PAN, PAN_reg, HS, DSP_T)
    jax.block_until_ready((X3, DSP1, I))

    assert X3.shape == (N, C, H, W)
    assert DSP1.shape == (N, 2, H, W)
    assert I.shape == (N, 1, H, W)
    assert bool(jnp.all(jnp.isfinite(X3)))

    # Validate the fused Pallas path against a pure-JAX reference of the original graph.
    X3r, DSP1r, Ir = ref_forward(p, PAN, PAN_reg, HS, DSP_T)

    def rel_err(a, b):
        return float(jnp.linalg.norm(a - b) / (jnp.linalg.norm(b) + 1e-8))

    assert rel_err(I, Ir) < 1e-4, rel_err(I, Ir)
    assert rel_err(DSP1, DSP1r) < 1e-4, rel_err(DSP1, DSP1r)
    assert rel_err(X3, X3r) < 5e-4, rel_err(X3, X3r)

    print("KERNEL_OK")
</pallas_src>

<mosaic_0001>
module attributes {stable_mosaic.version = 11 : i64} {
  func.func @_pre_kernel(%arg0: i32, %arg1: memref<4xf32, #tpu.memory_space<smem>>, %arg2: memref<8x64xf32, #tpu.memory_space<vmem>>, %arg3: memref<2x256xf32, #tpu.memory_space<vmem>>, %arg4: memref<2x8xf32, #tpu.memory_space<vmem>>, %arg5: memref<64x256xf32, #tpu.memory_space<vmem>>, %arg6: memref<64x256xf32, #tpu.memory_space<vmem>>, %arg7: memref<2x256xf32, #tpu.memory_space<vmem>>, %arg8: memref<2x2x256xf32, #tpu.memory_space<vmem>>, %arg9: memref<8x256xf32, #tpu.memory_space<vmem>>) attributes {dimension_semantics = [#tpu.dimension_semantics<arbitrary>], iteration_bounds = array<i64: 1>, scalar_prefetch = 0 : i64, scratch_operands = 0 : i64, tpu.core_type = #tpu.core_type<tc>, window_params = [{transform_indices = @transform_0, window_bounds = array<i64: 4>}, {pipeline_mode = #tpu.pipeline_mode<synchronous>, transform_indices = @transform_1, window_bounds = array<i64: 8, 64>}, {pipeline_mode = #tpu.pipeline_mode<synchronous>, transform_indices = @transform_2, window_bounds = array<i64: 2, 256>}, {pipeline_mode = #tpu.pipeline_mode<synchronous>, transform_indices = @transform_3, window_bounds = array<i64: 2, 8>}, {pipeline_mode = #tpu.pipeline_mode<synchronous>, transform_indices = @transform_4, window_bounds = array<i64: 64, 256>}, {pipeline_mode = #tpu.pipeline_mode<synchronous>, transform_indices = @transform_5, window_bounds = array<i64: 64, 256>}, {pipeline_mode = #tpu.pipeline_mode<synchronous>, transform_indices = @transform_6, window_bounds = array<i64: 2, 256>}, {pipeline_mode = #tpu.pipeline_mode<synchronous>, transform_indices = @transform_7, window_bounds = array<i64: 2, 2, 256>}, {pipeline_mode = #tpu.pipeline_mode<synchronous>, transform_indices = @transform_8, window_bounds = array<i64: 8, 256>}]} {
    %c0 = arith.constant 0 : index
    %c0_0 = arith.constant 0 : index
    %0 = vector.load %arg2[%c0, %c0_0] : memref<8x64xf32, #tpu.memory_space<vmem>>, vector<8x64xf32>
    %c0_1 = arith.constant 0 : index
    %c0_2 = arith.constant 0 : index
    %1 = vector.load %arg4[%c0_1, %c0_2] : memref<2x8xf32, #tpu.memory_space<vmem>>, vector<2x8xf32>
    %cst = arith.constant dense<0.000000e+00> : vector<2x64xf32>
    %2 = tpu.matmul %1, %0, %cst {dimension_numbers = #tpu.dot_dimension_numbers<[1], [0], [0], [1], [0, 0, 1, 1], [], []>} : vector<2x8xf32>, vector<8x64xf32>, vector<2x64xf32> -> vector<2x64xf32>
    %c0_3 = arith.constant 0 : index
    %c0_4 = arith.constant 0 : index
    %3 = vector.load %arg5[%c0_3, %c0_4] : memref<64x256xf32, #tpu.memory_space<vmem>>, vector<64x256xf32>
    %cst_5 = arith.constant dense<0.000000e+00> : vector<2x256xf32>
    %4 = tpu.matmul %2, %3, %cst_5 {dimension_numbers = #tpu.dot_dimension_numbers<[1], [0], [0], [1], [0, 0, 1, 1], [], []>} : vector<2x64xf32>, vector<64x256xf32>, vector<2x256xf32> -> vector<2x256xf32>
    %c0_6 = arith.constant 0 : index
    %c0_7 = arith.constant 0 : index
    %5 = vector.load %arg7[%c0_6, %c0_7] : memref<2x256xf32, #tpu.memory_space<vmem>>, vector<2x256xf32>
    tpu.vector_store %arg7[%c0_6, %c0_7], %4 {strides = array<i32>} : memref<2x256xf32, #tpu.memory_space<vmem>>, vector<2x256xf32>,
    %c0_8 = arith.constant 0 : index
    %c0_9 = arith.constant 0 : index
    %6 = vector.load %arg3[%c0_8, %c0_9] : memref<2x256xf32, #tpu.memory_space<vmem>>, vector<2x256xf32>
    %c0_10 = arith.constant 0 : index
    %7 = memref.load %arg1[%c0_10] : memref<4xf32, #tpu.memory_space<smem>>
    %8 = vector.broadcast %7 : f32 to vector<2x256xf32>
    %9 = arith.mulf %8, %4 : vector<2x256xf32>
    %c1 = arith.constant 1 : index
    %10 = memref.load %arg1[%c1] : memref<4xf32, #tpu.memory_space<smem>>
    %11 = vector.broadcast %10 : f32 to vector<2x256xf32>
    %12 = arith.mulf %11, %6 : vector<2x256xf32>
    %13 = arith.addf %9, %12 : vector<2x256xf32>
    %14 = math.tanh %13 : vector<2x256xf32>
    %c0_11 = arith.constant 0 : index
    %c0_12 = arith.constant 0 : index
    %c0_13 = arith.constant 0 : index
    %15 = vector.load %arg8[%c0_11, %c0_12, %c0_13] : memref<2x2x256xf32, #tpu.memory_space<vmem>>, vector<1x2x256xf32>
    %16 = vector.shape_cast %15 : vector<1x2x256xf32> to vector<2x256xf32>
    %17 = vector.shape_cast %14 : vector<2x256xf32> to vector<1x2x256xf32>
    tpu.vector_store %arg8[%c0_11, %c0_12, %c0_13], %17 {strides = array<i32>} : memref<2x2x256xf32, #tpu.memory_space<vmem>>, vector<1x2x256xf32>,
    %c2 = arith.constant 2 : index
    %18 = memref.load %arg1[%c2] : memref<4xf32, #tpu.memory_space<smem>>
    %19 = vector.broadcast %18 : f32 to vector<2x256xf32>
    %20 = arith.mulf %19, %4 : vector<2x256xf32>
    %c3 = arith.constant 3 : index
    %21 = memref.load %arg1[%c3] : memref<4xf32, #tpu.memory_space<smem>>
    %22 = vector.broadcast %21 : f32 to vector<2x256xf32>
    %23 = arith.mulf %22, %6 : vector<2x256xf32>
    %24 = arith.addf %20, %23 : vector<2x256xf32>
    %25 = math.tanh %24 : vector<2x256xf32>
    %c1_14 = arith.constant 1 : index
    %c0_15 = arith.constant 0 : index
    %c0_16 = arith.constant 0 : index
    %26 = vector.load %arg8[%c1_14, %c0_15, %c0_16] : memref<2x2x256xf32, #tpu.memory_space<vmem>>, vector<1x2x256xf32>
    %27 = vector.shape_cast %26 : vector<1x2x256xf32> to vector<2x256xf32>
    %28 = vector.shape_cast %25 : vector<2x256xf32> to vector<1x2x256xf32>
    tpu.vector_store %arg8[%c1_14, %c0_15, %c0_16], %28 {strides = array<i32>} : memref<2x2x256xf32, #tpu.memory_space<vmem>>, vector<1x2x256xf32>,
    %c0_17 = arith.constant 0 : index
    %c0_18 = arith.constant 0 : index
    %29 = vector.load %arg6[%c0_17, %c0_18] : memref<64x256xf32, #tpu.memory_space<vmem>>, vector<64x256xf32>
    %cst_19 = arith.constant dense<0.000000e+00> : vector<8x256xf32>
    %30 = tpu.matmul %0, %29, %cst_19 {dimension_numbers = #tpu.dot_dimension_numbers<[1], [0], [0], [1], [0, 0, 1, 1], [], []>} : vector<8x64xf32>, vector<64x256xf32>, vector<8x256xf32> -> vector<8x256xf32>
    %c0_20 = arith.constant 0 : index
    %c0_21 = arith.constant 0 : index
    %31 = vector.load %arg9[%c0_20, %c0_21] : memref<8x256xf32, #tpu.memory_space<vmem>>, vector<8x256xf32>
    tpu.vector_store %arg9[%c0_20, %c0_21], %30 {strides = array<i32>} : memref<8x256xf32, #tpu.memory_space<vmem>>, vector<8x256xf32>,
    return
  }
  func.func @transform_0(%arg0: i32) -> i32 {
    %c0_i32 = arith.constant 0 : i32
    %c0_i32_0 = arith.constant 0 : i32
    return %c0_i32 : i32
  }
  func.func @transform_1(%arg0: i32) -> (i32, i32) {
    %c0_i32 = arith.constant 0 : i32
    %c0_i32_0 = arith.constant 0 : i32
    %c0_i32_1 = arith.constant 0 : i32
    return %c0_i32, %c0_i32_0 : i32, i32
  }
  func.func @transform_2(%arg0: i32) -> (i32, i32) {
    %c0_i32 = arith.constant 0 : i32
    %c0_i32_0 = arith.constant 0 : i32
    %c0_i32_1 = arith.constant 0 : i32
    return %c0_i32, %c0_i32_0 : i32, i32
  }
  func.func @transform_3(%arg0: i32) -> (i32, i32) {
    %c0_i32 = arith.constant 0 : i32
    %c0_i32_0 = arith.constant 0 : i32
    %c0_i32_1 = arith.constant 0 : i32
    return %c0_i32, %c0_i32_0 : i32, i32
  }
  func.func @transform_4(%arg0: i32) -> (i32, i32) {
    %c0_i32 = arith.constant 0 : i32
    %c0_i32_0 = arith.constant 0 : i32
    %c0_i32_1 = arith.constant 0 : i32
    return %c0_i32, %c0_i32_0 : i32, i32
  }
  func.func @transform_5(%arg0: i32) -> (i32, i32) {
    %c0_i32 = arith.constant 0 : i32
    %c0_i32_0 = arith.constant 0 : i32
    %c0_i32_1 = arith.constant 0 : i32
    return %c0_i32, %c0_i32_0 : i32, i32
  }
  func.func @transform_6(%arg0: i32) -> (i32, i32) {
    %c0_i32 = arith.constant 0 : i32
    %c0_i32_0 = arith.constant 0 : i32
    %c0_i32_1 = arith.constant 0 : i32
    return %c0_i32, %c0_i32_0 : i32, i32
  }
  func.func @transform_7(%arg0: i32) -> (i32, i32, i32) {
    %c0_i32 = arith.constant 0 : i32
    %c0_i32_0 = arith.constant 0 : i32
    %c0_i32_1 = arith.constant 0 : i32
    %c0_i32_2 = arith.constant 0 : i32
    return %c0_i32, %c0_i32_0, %c0_i32_1 : i32, i32, i32
  }
  func.func @transform_8(%arg0: i32) -> (i32, i32) {
    %c0_i32 = arith.constant 0 : i32
    %c0_i32_0 = arith.constant 0 : i32
    %c0_i32_1 = arith.constant 0 : i32
    return %c0_i32, %c0_i32_0 : i32, i32
  }
}

module attributes {stable_mosaic.version = 11 : i64} {
  func.func @_layers_kernel(%arg0: i32, %arg1: i32, %arg2: memref<3xf32, #tpu.memory_space<smem>>, %arg3: memref<1x4x64xf32, #tpu.memory_space<vmem>>, %arg4: memref<1x1x256xf32, #tpu.memory_space<vmem>>, %arg5: memref<1x4x256xf32, #tpu.memory_space<vmem>>, %arg6: memref<1x256x256xf32, #tpu.memory_space<vmem>>, %arg7: memref<1x256x256xf32, #tpu.memory_space<vmem>>, %arg8: memref<1x256x256xf32, #tpu.memory_space<vmem>>, %arg9: memref<256x256xf32, #tpu.memory_space<vmem>>, %arg10: memref<64x256xf32, #tpu.memory_space<vmem>>, %arg11: memref<4x4xf32, #tpu.memory_space<vmem>>, %arg12: memref<4x4xf32, #tpu.memory_space<vmem>>, %arg13: memref<4x1xf32, #tpu.memory_space<vmem>>, %arg14: memref<1x4x256xf32, #tpu.memory_space<vmem>>, %arg15: memref<4x256xf32, #tpu.memory_space<vmem>>, %arg16: memref<4x256xf32, #tpu.memory_space<vmem>>, %arg17: memref<256x256xf32, #tpu.memory_space<vmem>>) attributes {dimension_semantics = [#tpu.dimension_semantics<parallel>, #tpu.dimension_semantics<arbitrary>], iteration_bounds = array<i64: 2, 3>, scalar_prefetch = 0 : i64, scratch_operands = 3 : i64, tpu.core_type = #tpu.core_type<tc>, window_params = [{transform_indices = @transform_0, window_bounds = array<i64: 3>}, {transform_indices = @transform_1, window_bounds = array<i64: 1, 4, 64>}, {transform_indices = @transform_2, window_bounds = array<i64: 1, 1, 256>}, {transform_indices = @transform_3, window_bounds = array<i64: 1, 4, 256>}, {transform_indices = @transform_4, window_bounds = array<i64: 1, 256, 256>}, {transform_indices = @transform_5, window_bounds = array<i64: 1, 256, 256>}, {transform_indices = @transform_6, window_bounds = array<i64: 1, 256, 256>}, {pipeline_mode = #tpu.pipeline_mode<synchronous>, transform_indices = @transform_7, window_bounds = array<i64: 256, 256>}, {pipeline_mode = #tpu.pipeline_mode<synchronous>, transform_indices = @transform_8, window_bounds = array<i64: 64, 256>}, {pipeline_mode = #tpu.pipeline_mode<synchronous>, transform_indices = @transform_9, window_bounds = array<i64: 4, 4>}, {pipeline_mode = #tpu.pipeline_mode<synchronous>, transform_indices = @transform_10, window_bounds = array<i64: 4, 4>}, {pipeline_mode = #tpu.pipeline_mode<synchronous>, transform_indices = @transform_11, window_bounds = array<i64: 4, 1>}, {transform_indices = @transform_12, window_bounds = array<i64: 1, 4, 256>}]} {
    %c0_i32 = arith.constant 0 : i32
    %0 = arith.cmpi eq, %arg1, %c0_i32 : i32
    %1 = arith.extui %0 : i1 to i32
    %c0_i32_0 = arith.constant 0 : i32
    %2 = arith.cmpi ne, %1, %c0_i32_0 : i32
    scf.if %2 {
      %c0_17 = arith.constant 0 : index
      %c0_18 = arith.constant 0 : index
      %c0_19 = arith.constant 0 : index
      %22 = vector.load %arg8[%c0_17, %c0_18, %c0_19] : memref<1x256x256xf32, #tpu.memory_space<vmem>>, vector<1x256x256xf32>
      %23 = vector.shape_cast %22 : vector<1x256x256xf32> to vector<256x256xf32>
      %c0_20 = arith.constant 0 : index
      %c0_21 = arith.constant 0 : index
      %c0_22 = arith.constant 0 : index
      %24 = vector.load %arg6[%c0_20, %c0_21, %c0_22] : memref<1x256x256xf32, #tpu.memory_space<vmem>>, vector<1x256x256xf32>
      %25 = vector.shape_cast %24 : vector<1x256x256xf32> to vector<256x256xf32>
      %c0_23 = arith.constant 0 : index
      %c0_24 = arith.constant 0 : index
      %26 = vector.load %arg9[%c0_23, %c0_24] : memref<256x256xf32, #tpu.memory_space<vmem>>, vector<256x256xf32>
      %cst_25 = arith.constant dense<0.000000e+00> : vector<256x256xf32>
      %27 = tpu.matmul %25, %26, %cst_25 {dimension_numbers = #tpu.dot_dimension_numbers<[1], [0], [0], [1], [0, 0, 1, 1], [], []>} : vector<256x256xf32>, vector<256x256xf32>, vector<256x256xf32> -> vector<256x256xf32>
      %cst_26 = arith.constant dense<0.000000e+00> : vector<256x256xf32>
      %28 = tpu.matmul %27, %23, %cst_26 {dimension_numbers = #tpu.dot_dimension_numbers<[1], [0], [0], [1], [0, 0, 1, 1], [], []>} : vector<256x256xf32>, vector<256x256xf32>, vector<256x256xf32> -> vector<256x256xf32>
      %c0_27 = arith.constant 0 : index
      %c0_28 = arith.constant 0 : index
      %29 = vector.load %arg17[%c0_27, %c0_28] : memref<256x256xf32, #tpu.memory_space<vmem>>, vector<256x256xf32>
      tpu.vector_store %arg17[%c0_27, %c0_28], %28 {strides = array<i32>} : memref<256x256xf32, #tpu.memory_space<vmem>>, vector<256x256xf32>,
      %c0_29 = arith.constant 0 : index
      %c0_30 = arith.constant 0 : index
      %c0_31 = arith.constant 0 : index
      %30 = vector.load %arg3[%c0_29, %c0_30, %c0_31] : memref<1x4x64xf32, #tpu.memory_space<vmem>>, vector<1x4x64xf32>
      %31 = vector.shape_cast %30 : vector<1x4x64xf32> to vector<4x64xf32>
      %c0_32 = arith.constant 0 : index
      %c0_33 = arith.constant 0 : index
      %32 = vector.load %arg10[%c0_32, %c0_33] : memref<64x256xf32, #tpu.memory_space<vmem>>, vector<64x256xf32>
      %cst_34 = arith.constant dense<0.000000e+00> : vector<4x256xf32>
      %33 = tpu.matmul %31, %32, %cst_34 {dimension_numbers = #tpu.dot_dimension_numbers<[1], [0], [0], [1], [0, 0, 1, 1], [], []>} : vector<4x64xf32>, vector<64x256xf32>, vector<4x256xf32> -> vector<4x256xf32>
      %cst_35 = arith.constant dense<0.000000e+00> : vector<4x256xf32>
      %34 = tpu.matmul %33, %23, %cst_35 {dimension_numbers = #tpu.dot_dimension_numbers<[1], [0], [0], [1], [0, 0, 1, 1], [], []>} : vector<4x256xf32>, vector<256x256xf32>, vector<4x256xf32> -> vector<4x256xf32>
      %c0_36 = arith.constant 0 : index
      %c0_37 = arith.constant 0 : index
      %35 = vector.load %arg13[%c0_36, %c0_37] : memref<4x1xf32, #tpu.memory_space<vmem>>, vector<4x1xf32>
      %c0_38 = arith.constant 0 : index
      %c0_39 = arith.constant 0 : index
      %c0_40 = arith.constant 0 : index
      %36 = vector.load %arg4[%c0_38, %c0_39, %c0_40] : memref<1x1x256xf32, #tpu.memory_space<vmem>>, vector<1x1x256xf32>
      %37 = vector.shape_cast %36 : vector<1x1x256xf32> to vector<1x256xf32>
      %38 = vector.broadcast %35 : vector<4x1xf32> to vector<4x256xf32>
      %39 = vector.broadcast %37 : vector<1x256xf32> to vector<4x256xf32>
      %40 = arith.mulf %38, %39 : vector<4x256xf32>
      %41 = arith.addf %34, %40 : vector<4x256xf32>
      %c0_41 = arith.constant 0 : index
      %c0_42 = arith.constant 0 : index
      %42 = vector.load %arg16[%c0_41, %c0_42] : memref<4x256xf32, #tpu.memory_space<vmem>>, vector<4x256xf32>
      tpu.vector_store %arg16[%c0_41, %c0_42], %41 {strides = array<i32>} : memref<4x256xf32, #tpu.memory_space<vmem>>, vector<4x256xf32>,
      %c0_43 = arith.constant 0 : index
      %c0_44 = arith.constant 0 : index
      %c0_45 = arith.constant 0 : index
      %43 = vector.load %arg5[%c0_43, %c0_44, %c0_45] : memref<1x4x256xf32, #tpu.memory_space<vmem>>, vector<1x4x256xf32>
      %44 = vector.shape_cast %43 : vector<1x4x256xf32> to vector<4x256xf32>
      %c0_46 = arith.constant 0 : index
      %c0_47 = arith.constant 0 : index
      %c0_48 = arith.constant 0 : index
      %45 = vector.load %arg7[%c0_46, %c0_47, %c0_48] : memref<1x256x256xf32, #tpu.memory_space<vmem>>, vector<1x256x256xf32>
      %46 = vector.shape_cast %45 : vector<1x256x256xf32> to vector<256x256xf32>
      %cst_49 = arith.constant dense<0.000000e+00> : vector<4x256xf32>
      %47 = tpu.matmul %44, %46, %cst_49 {dimension_numbers = #tpu.dot_dimension_numbers<[1], [0], [0], [1], [0, 0, 1, 1], [], []>} : vector<4x256xf32>, vector<256x256xf32>, vector<4x256xf32> -> vector<4x256xf32>
      %c0_50 = arith.constant 0 : index
      %c0_51 = arith.constant 0 : index
      %48 = vector.load %arg15[%c0_50, %c0_51] : memref<4x256xf32, #tpu.memory_space<vmem>>, vector<4x256xf32>
      tpu.vector_store %arg15[%c0_50, %c0_51], %47 {strides = array<i32>} : memref<4x256xf32, #tpu.memory_space<vmem>>, vector<4x256xf32>,
    } else {
    }
    %3 = arith.index_cast %arg1 : i32 to index
    %4 = memref.load %arg2[%3] : memref<3xf32, #tpu.memory_space<smem>>
    %c0 = arith.constant 0 : index
    %c0_1 = arith.constant 0 : index
    %5 = vector.load %arg15[%c0, %c0_1] : memref<4x256xf32, #tpu.memory_space<vmem>>, vector<4x256xf32>
    %c0_2 = arith.constant 0 : index
    %c0_3 = arith.constant 0 : index
    %6 = vector.load %arg17[%c0_2, %c0_3] : memref<256x256xf32, #tpu.memory_space<vmem>>, vector<256x256xf32>
    %cst = arith.constant dense<0.000000e+00> : vector<4x256xf32>
    %7 = tpu.matmul %5, %6, %cst {dimension_numbers = #tpu.dot_dimension_numbers<[1], [0], [0], [1], [0, 0, 1, 1], [], []>} : vector<4x256xf32>, vector<256x256xf32>, vector<4x256xf32> -> vector<4x256xf32>
    %c0_4 = arith.constant 0 : index
    %c0_5 = arith.constant 0 : index
    %8 = vector.load %arg11[%c0_4, %c0_5] : memref<4x4xf32, #tpu.memory_space<vmem>>, vector<4x4xf32>
    %cst_6 = arith.constant dense<0.000000e+00> : vector<4x256xf32>
    %9 = tpu.matmul %8, %5, %cst_6 {dimension_numbers = #tpu.dot_dimension_numbers<[1], [0], [0], [1], [0, 0, 1, 1], [], []>} : vector<4x4xf32>, vector<4x256xf32>, vector<4x256xf32> -> vector<4x256xf32>
    %c0_7 = arith.constant 0 : index
    %c0_8 = arith.constant 0 : index
    %10 = vector.load %arg16[%c0_7, %c0_8] : memref<4x256xf32, #tpu.memory_space<vmem>>, vector<4x256xf32>
    %11 = arith.subf %10, %7 : vector<4x256xf32>
    %12 = arith.subf %11, %9 : vector<4x256xf32>
    %13 = vector.broadcast %4 : f32 to vector<4x256xf32>
    %14 = arith.mulf %13, %12 : vector<4x256xf32>
    %15 = arith.addf %5, %14 : vector<4x256xf32>
    %c0_9 = arith.constant 0 : index
    %c0_10 = arith.constant 0 : index
    %16 = vector.load %arg12[%c0_9, %c0_10] : memref<4x4xf32, #tpu.memory_space<vmem>>, vector<4x4xf32>
    %cst_11 = arith.constant dense<0.000000e+00> : vector<4x256xf32>
    %17 = tpu.matmul %16, %15, %cst_11 {dimension_numbers = #tpu.dot_dimension_numbers<[1], [0], [0], [1], [0, 0, 1, 1], [], []>} : vector<4x4xf32>, vector<4x256xf32>, vector<4x256xf32> -> vector<4x256xf32>
    %c0_12 = arith.constant 0 : index
    %c0_13 = arith.constant 0 : index
    %18 = vector.load %arg15[%c0_12, %c0_13] : memref<4x256xf32, #tpu.memory_space<vmem>>, vector<4x256xf32>
    tpu.vector_store %arg15[%c0_12, %c0_13], %17 {strides = array<i32>} : memref<4x256xf32, #tpu.memory_space<vmem>>, vector<4x256xf32>,
    %c0_14 = arith.constant 0 : index
    %c0_15 = arith.constant 0 : index
    %c0_16 = arith.constant 0 : index
    %19 = vector.load %arg14[%c0_14, %c0_15, %c0_16] : memref<1x4x256xf32, #tpu.memory_space<vmem>>, vector<1x4x256xf32>
    %20 = vector.shape_cast %19 : vector<1x4x256xf32> to vector<4x256xf32>
    %21 = vector.shape_cast %17 : vector<4x256xf32> to vector<1x4x256xf32>
    tpu.vector_store %arg14[%c0_14, %c0_15, %c0_16], %21 {strides = array<i32>} : memref<1x4x256xf32, #tpu.memory_space<vmem>>, vector<1x4x256xf32>,
    return
  }
  func.func @transform_0(%arg0: i32, %arg1: i32) -> i32 {
    %c0_i32 = arith.constant 0 : i32
    %c0_i32_0 = arith.constant 0 : i32
    return %c0_i32 : i32
  }
  func.func @transform_1(%arg0: i32, %arg1: i32) -> (i32, i32, i32) {
    %c0_i32 = arith.constant 0 : i32
    %c0_i32_0 = arith.constant 0 : i32
    %c0_i32_1 = arith.constant 0 : i32
    return %arg0, %c0_i32, %c0_i32_0 : i32, i32, i32
  }
  func.func @transform_2(%arg0: i32, %arg1: i32) -> (i32, i32, i32) {
    %c0_i32 = arith.constant 0 : i32
    %c0_i32_0 = arith.constant 0 : i32
    %c0_i32_1 = arith.constant 0 : i32
    return %arg0, %c0_i32, %c0_i32_0 : i32, i32, i32
  }
  func.func @transform_3(%arg0: i32, %arg1: i32) -> (i32, i32, i32) {
    %c0_i32 = arith.constant 0 : i32
    %c0_i32_0 = arith.constant 0 : i32
    %c0_i32_1 = arith.constant 0 : i32
    return %arg0, %c0_i32, %c0_i32_0 : i32, i32, i32
  }
  func.func @transform_4(%arg0: i32, %arg1: i32) -> (i32, i32, i32) {
    %c0_i32 = arith.constant 0 : i32
    %c0_i32_0 = arith.constant 0 : i32
    %c0_i32_1 = arith.constant 0 : i32
    return %arg0, %c0_i32, %c0_i32_0 : i32, i32, i32
  }
  func.func @transform_5(%arg0: i32, %arg1: i32) -> (i32, i32, i32) {
    %c0_i32 = arith.constant 0 : i32
    %c0_i32_0 = arith.constant 0 : i32
    %c0_i32_1 = arith.constant 0 : i32
    return %arg0, %c0_i32, %c0_i32_0 : i32, i32, i32
  }
  func.func @transform_6(%arg0: i32, %arg1: i32) -> (i32, i32, i32) {
    %c0_i32 = arith.constant 0 : i32
    %c0_i32_0 = arith.constant 0 : i32
    %c0_i32_1 = arith.constant 0 : i32
    return %arg0, %c0_i32, %c0_i32_0 : i32, i32, i32
  }
  func.func @transform_7(%arg0: i32, %arg1: i32) -> (i32, i32) {
    %c0_i32 = arith.constant 0 : i32
    %c0_i32_0 = arith.constant 0 : i32
    %c0_i32_1 = arith.constant 0 : i32
    return %c0_i32, %c0_i32_0 : i32, i32
  }
  func.func @transform_8(%arg0: i32, %arg1: i32) -> (i32, i32) {
    %c0_i32 = arith.constant 0 : i32
    %c0_i32_0 = arith.constant 0 : i32
    %c0_i32_1 = arith.constant 0 : i32
    return %c0_i32, %c0_i32_0 : i32, i32
  }
  func.func @transform_9(%arg0: i32, %arg1: i32) -> (i32, i32) {
    %c0_i32 = arith.constant 0 : i32
    %c0_i32_0 = arith.constant 0 : i32
    %c0_i32_1 = arith.constant 0 : i32
    return %c0_i32, %c0_i32_0 : i32, i32
  }
  func.func @transform_10(%arg0: i32, %arg1: i32) -> (i32, i32) {
    %c0_i32 = arith.constant 0 : i32
    %c0_i32_0 = arith.constant 0 : i32
    %c0_i32_1 = arith.constant 0 : i32
    return %c0_i32, %c0_i32_0 : i32, i32
  }
  func.func @transform_11(%arg0: i32, %arg1: i32) -> (i32, i32) {
    %c0_i32 = arith.constant 0 : i32
    %c0_i32_0 = arith.constant 0 : i32
    %c0_i32_1 = arith.constant 0 : i32
    return %c0_i32, %c0_i32_0 : i32, i32
  }
  func.func @transform_12(%arg0: i32, %arg1: i32) -> (i32, i32, i32) {
    %c0_i32 = arith.constant 0 : i32
    %c0_i32_0 = arith.constant 0 : i32
    %c0_i32_1 = arith.constant 0 : i32
    return %arg0, %c0_i32, %c0_i32_0 : i32, i32, i32
  }
}

</mosaic_0001>

<llo_original>
// kernel: fandd_forward.2
$region0: #{fandd_forward.2}
  #allocation0 [shape = 'u32[]', space=smem, size = 0x4, offset = 0x4, fixed_abs, tag = 'smem constant byte address 0x4 - core index']
  #allocation1 [shape = 'u32[144,128]{1,0:T(1,128)}', space=vmem, size = 0x12000, scoped, tag = 'internal scratch']
  %s0 = inlined_call_operand.vmem [shape: f32[4], index: 0, kind: input, shape index: {}]
  %s1 = inlined_call_operand.vmem [shape: f32[8,64], index: 1, kind: input, shape index: {}]
  %s2 = inlined_call_operand.vmem [shape: f32[2,256], index: 2, kind: input, shape index: {}]
  %s3 = inlined_call_operand.hbm [shape: f32[2,8], index: 3, kind: input, shape index: {}]
  %s4 = inlined_call_operand.hbm [shape: f32[64,256], index: 4, kind: input, shape index: {}]
  %s5 = inlined_call_operand.hbm [shape: f32[64,256], index: 5, kind: input, shape index: {}]
  %s6 = inlined_call_operand.vmem [shape: f32[2,256], index: 6, kind: output, shape index: {0}]
  %s7 = inlined_call_operand.vmem [shape: f32[2,2,256], index: 7, kind: output, shape index: {1}]
  %s8 = inlined_call_operand.vmem [shape: f32[8,256], index: 8, kind: output, shape index: {2}]
  %9 = xla_tuple %s6, %s7, %s8
  %s10 = sld [smem:[#allocation0]]
  $region66: #{fandd_forward.2} parent=0
    _
  %s12 = ssub.s32 1, %s10
  %s13 = scalar_select 0, %s12, %s10
  $region1: #{fandd_forward.2} parent=0
    #allocation2 [shape = 'u8[512]{0}', space=smem, size = 0x200, scoped, tag = 'input window, operand 0, single buffered']
    #allocation3 [shape = 's32[1]{0}', space=sflag, size = 0x4, scoped, tag = 'scoped memory for fandd_forward.2']
    #allocation4 [shape = 's32[1]{0}', space=sflag, size = 0x4, scoped, tag = 'scoped memory for fandd_forward.2']
    #allocation5 [shape = 'u8[1024]{0}', space=vmem, size = 0x400, scoped, tag = 'input window, operand 3, single buffered']
    #allocation6 [shape = 'u8[65536]{0}', space=vmem, size = 0x10000, scoped, tag = 'input window, operand 4, single buffered']
    #allocation7 [shape = 's32[1]{0}', space=sflag, size = 0x4, scoped, tag = 'scoped memory for fandd_forward.2']
    #allocation8 [shape = 'u8[65536]{0}', space=vmem, size = 0x10000, scoped, tag = 'input window, operand 5, single buffered']
    %14 = vsyncpa [#allocation4], 0
    %15 = vsyncpa [#allocation3], 0
    %16 = vsyncpa [#allocation7], 0
    // Predicated region
    $region2: #{fandd_forward.2} parent=1 // pred_check
      _
    $region3: #{fandd_forward.2} parent=1 // pred_check_branch
      %18 = sbr.rel (0) target = $region5
    $region4: #{fandd_forward.2} parent=1 // pred_region
      %s20 = ssub.s32 16, 16
      %21 = vsyncadd [#allocation4], %s20
      %s23 = sshll.u32 %s0, 4
      %s24 = int_to_ptr.vmem [resolvable:$true] %s23
      %26 = dma.vmem_to_smem %s24, 16, [#allocation2], [#allocation4]
    $region5: #{fandd_forward.2} parent=1 // pred_fallthru
      _
    // Predicated region
    $region6: #{fandd_forward.2} parent=1 // pred_check
      _
    $region7: #{fandd_forward.2} parent=1 // pred_check_branch
      %28 = sbr.rel (0) target = $region9
    $region8: #{fandd_forward.2} parent=1 // pred_region
      _
    $region9: #{fandd_forward.2} parent=1 // pred_fallthru
      _
    // Predicated region
    $region10: #{fandd_forward.2} parent=1 // pred_check
      _
    $region11: #{fandd_forward.2} parent=1 // pred_check_branch
      %30 = sbr.rel (0) target = $region13
    $region12: #{fandd_forward.2} parent=1 // pred_region
      _
    $region13: #{fandd_forward.2} parent=1 // pred_fallthru
      _
    // Predicated region
    $region14: #{fandd_forward.2} parent=1 // pred_check
      _
    $region15: #{fandd_forward.2} parent=1 // pred_check_branch
      %32 = sbr.rel (0) target = $region17
    $region16: #{fandd_forward.2} parent=1 // pred_region
      %s34 = ssub.s32 32, 32
      %35 = vsyncadd [#allocation3], %s34
      %s37 = sshll.u32 [#allocation5], 4
      %s38 = int_to_ptr.vmem [resolvable:$true] %s37
      %40 = dma.hbm_to_vmem [thread:$0]  %s3, 32, %s38, [#allocation3]
    $region17: #{fandd_forward.2} parent=1 // pred_fallthru
      _
    // Predicated region
    $region18: #{fandd_forward.2} parent=1 // pred_check
      _
    $region19: #{fandd_forward.2} parent=1 // pred_check_branch
      %42 = sbr.rel (0) target = $region21
    $region20: #{fandd_forward.2} parent=1 // pred_region
      %s44 = ssub.s32 2048, 2048
      %45 = vsyncadd [#allocation7], %s44
      %s46 = sshll.u32 [#allocation6], 4
      %s47 = int_to_ptr.vmem [resolvable:$true] %s46
      %52 = dma.hbm_to_vmem [thread:$0]  %s4, 2048, %s47, [#allocation7], 256, 256, 16
    $region21: #{fandd_forward.2} parent=1 // pred_fallthru
      _
    // Predicated region
    $region22: #{fandd_forward.2} parent=1 // pred_check
      _
    $region23: #{fandd_forward.2} parent=1 // pred_check_branch
      %54 = sbr.rel (0) target = $region25
    $region24: #{fandd_forward.2} parent=1 // pred_region
      %s56 = ssub.s32 2048, 2048
      %57 = vsyncadd [#allocation7], %s56
      %s58 = sshll.u32 [#allocation8], 4
      %s59 = int_to_ptr.vmem [resolvable:$true] %s58
      %64 = dma.hbm_to_vmem [thread:$0]  %s5, 2048, %s59, [#allocation7], 256, 256, 16
    $region25: #{fandd_forward.2} parent=1 // pred_fallthru
      _
    // Predicated region
    $region26: #{fandd_forward.2} parent=1 // pred_check
      _
    $region27: #{fandd_forward.2} parent=1 // pred_check_branch
      %66 = sbr.rel (0) target = $region29
    $region28: #{fandd_forward.2} parent=1 // pred_region
      %67 = dma.done [#allocation4], 16
    $region29: #{fandd_forward.2} parent=1 // pred_fallthru
      _
    // Predicated region
    $region30: #{fandd_forward.2} parent=1 // pred_check
      _
    $region31: #{fandd_forward.2} parent=1 // pred_check_branch
      %69 = sbr.rel (0) target = $region33
    $region32: #{fandd_forward.2} parent=1 // pred_region
      %70 = dma.done [#allocation3], 32
    $region33: #{fandd_forward.2} parent=1 // pred_fallthru
      _
    // Predicated region
    $region34: #{fandd_forward.2} parent=1 // pred_check
      _
    $region35: #{fandd_forward.2} parent=1 // pred_check_branch
      %72 = sbr.rel (0) target = $region37
    $region36: #{fandd_forward.2} parent=1 // pred_region
      %73 = dma.done [#allocation7], 2048
    $region37: #{fandd_forward.2} parent=1 // pred_fallthru
      _
    // Predicated region
    $region38: #{fandd_forward.2} parent=1 // pred_check
      _
    $region39: #{fandd_forward.2} parent=1 // pred_check_branch
      %75 = sbr.rel (0) target = $region41
    $region40: #{fandd_forward.2} parent=1 // pred_region
      %76 = dma.done [#allocation7], 2048
    $region41: #{fandd_forward.2} parent=1 // pred_fallthru
      _
    %77 = sfence
    %v78 = vld [vmem:[%s1] sm:$0xff]
    %v79 = vld [vmem:[#allocation5] sm:$0x3]
    %vm80 = vcmask 64512
    %v82 = vsel %vm80, %v79, 0
    %84 = vmatprep.subr.mxu0 0.0
    %85 = vmatpush1.msra.mxu0 0.0
    %86 = vmatprep.subr.mxu0 0.0
    %87 = vmatpush1.msra.mxu0 0.0
    %88 = vmatprep.subr.mxu0 0.0
    %89 = vmatpush1.msra.mxu0 0.0
    %90 = vmatprep.subr.mxu0 0.0
    %91 = vmatpush1.msra.mxu0 0.0
    %92 = vmatprep.subr.mxu0 0.0
    %93 = vmatpush1.msra.mxu0 0.0
    %94 = vmatprep.subr.mxu0 0.0
    %95 = vmatpush1.msra.mxu0 0.0
    %96 = vmatprep.subr.mxu0 0.0
    %97 = vmatpush1.msra.mxu0 0.0
    %98 = vmatprep.subr.mxu0 0.0
    %99 = vmatpush1.msra.mxu0 0.0
    %100 = vmatprep.subr.mxu0 0.0
    %101 = vmatpush1.msra.mxu0 0.0
    %102 = vmatprep.subr.mxu0 0.0
    %103 = vmatpush1.msra.mxu0 0.0
    %104 = vmatprep.subr.mxu0 0.0
    %105 = vmatpush1.msra.mxu0 0.0
    %106 = vmatprep.subr.mxu0 0.0
    %107 = vmatpush1.msra.mxu0 0.0
    %108 = vmatprep.subr.mxu0 0.0
    %109 = vmatpush1.msra.mxu0 0.0
    %110 = vmatprep.subr.mxu0 0.0
    %111 = vmatpush1.msra.mxu0 0.0
    %112 = vmatprep.subr.mxu0 0.0
    %113 = vmatpush1.msra.mxu0 0.0
    %114 = vmatprep.subr.mxu0 0.0
    %115 = vmatpush1.msra.mxu0 %v78
    %116 = vmatprep.subr.mxu0 0.0
    %117 = vmatpush2.msra.mxu0 0.0
    %118 = vmatprep.subr.mxu0 0.0
    %119 = vmatpush2.msra.mxu0 0.0
    %120 = vmatprep.subr.mxu0 0.0
    %121 = vmatpush2.msra.mxu0 0.0
    %122 = vmatprep.subr.mxu0 0.0
    %123 = vmatpush2.msra.mxu0 0.0
    %124 = vmatprep.subr.mxu0 0.0
    %125 = vmatpush2.msra.mxu0 0.0
    %126 = vmatprep.subr.mxu0 0.0
    %127 = vmatpush2.msra.mxu0 0.0
    %128 = vmatprep.subr.mxu0 0.0
    %129 = vmatpush2.msra.mxu0 0.0
    %130 = vmatprep.subr.mxu0 0.0
    %131 = vmatpush2.msra.mxu0 0.0
    %132 = vmatprep.subr.mxu0 0.0
    %133 = vmatpush2.msra.mxu0 0.0
    %134 = vmatprep.subr.mxu0 0.0
    %135 = vmatpush2.msra.mxu0 0.0
    %136 = vmatprep.subr.mxu0 0.0
    %137 = vmatpush2.msra.mxu0 0.0
    %138 = vmatprep.subr.mxu0 0.0
    %139 = vmatpush2.msra.mxu0 0.0
    %140 = vmatprep.subr.mxu0 0.0
    %141 = vmatpush2.msra.mxu0 0.0
    %142 = vmatprep.subr.mxu0 0.0
    %143 = vmatpush2.msra.mxu0 0.0
    %144 = vmatprep.subr.mxu0 0.0
    %145 = vmatpush2.msra.mxu0 0.0
    %146 = vmatprep.subr.mxu0 0.0
    %147 = vmatpush2.msra.mxu0 0.0
    %148 = vmatprep.mubr.f32.mxu0 0.0
    %149 = vmatmul.mubr.f32.gmra.mxu0 %v82
    %v150 = vpop.f32.mrf.mxu0
    %v151 = vadd.f32 0.0, %v150
    %v152 = vpop.f32.mrf.mxu0
    %153 = vdwg.mxu0
    %v154 = vld [vmem:[#allocation6] sm:$0xff]
    %v155 = vld [vmem:[#allocation6 + $0x8] sm:$0xff]
    %v156 = vld [vmem:[#allocation6 + $0x10] sm:$0xff]
    %v157 = vld [vmem:[#allocation6 + $0x18] sm:$0xff]
    %v158 = vld [vmem:[#allocation6 + $0x20] sm:$0xff]
    %v159 = vld [vmem:[#allocation6 + $0x28] sm:$0xff]
    %v160 = vld [vmem:[#allocation6 + $0x30] sm:$0xff]
    %v161 = vld [vmem:[#allocation6 + $0x38] sm:$0xff]
    %v162 = vld [vmem:[#allocation6 + $0x40] sm:$0xff]
    %v163 = vld [vmem:[#allocation6 + $0x48] sm:$0xff]
    %v164 = vld [vmem:[#allocation6 + $0x50] sm:$0xff]
    %v165 = vld [vmem:[#allocation6 + $0x58] sm:$0xff]
    %v166 = vld [vmem:[#allocation6 + $0x60] sm:$0xff]
    %v167 = vld [vmem:[#allocation6 + $0x68] sm:$0xff]
    %v168 = vld [vmem:[#allocation6 + $0x70] sm:$0xff]
    %v169 = vld [vmem:[#allocation6 + $0x78] sm:$0xff]
    %vm170 = vcmask 523264
    %v172 = vsel %vm170, %v151, 0
    %174 = vmatprep.subr.mxu0 0.0
    %175 = vmatpush1.msra.mxu0 0.0
    %176 = vmatprep.subr.mxu0 0.0
    %177 = vmatpush1.msra.mxu0 0.0
    %178 = vmatprep.subr.mxu0 0.0
    %179 = vmatpush1.msra.mxu0 0.0
    %180 = vmatprep.subr.mxu0 0.0
    %181 = vmatpush1.msra.mxu0 0.0
    %182 = vmatprep.subr.mxu0 0.0
    %183 = vmatpush1.msra.mxu0 0.0
    %184 = vmatprep.subr.mxu0 0.0
    %185 = vmatpush1.msra.mxu0 0.0
    %186 = vmatprep.subr.mxu0 0.0
    %187 = vmatpush1.msra.mxu0 0.0
    %188 = vmatprep.subr.mxu0 0.0
    %189 = vmatpush1.msra.mxu0 0.0
    %190 = vmatprep.subr.mxu0 %v169
    %191 = vmatpush1.msra.mxu0 %v168
    %192 = vmatprep.subr.mxu0 %v167
    %193 = vmatpush1.msra.mxu0 %v166
    %194 = vmatprep.subr.mxu0 %v165
    %195 = vmatpush1.msra.mxu0 %v164
    %196 = vmatprep.subr.mxu0 %v163
    %197 = vmatpush1.msra.mxu0 %v162
    %198 = vmatprep.subr.mxu0 %v161
    %199 = vmatpush1.msra.mxu0 %v160
    %200 = vmatprep.subr.mxu0 %v159
    %201 = vmatpush1.msra.mxu0 %v158
    %202 = vmatprep.subr.mxu0 %v157
    %203 = vmatpush1.msra.mxu0 %v156
    %204 = vmatprep.subr.mxu0 %v155
    %205 = vmatpush1.msra.mxu0 %v154
    %206 = vmatprep.subr.mxu0 0.0
    %207 = vmatpush2.msra.mxu0 0.0
    %208 = vmatprep.subr.mxu0 0.0
    %209 = vmatpush2.msra.mxu0 0.0
    %210 = vmatprep.subr.mxu0 0.0
    %211 = vmatpush2.msra.mxu0 0.0
    %212 = vmatprep.subr.mxu0 0.0
    %213 = vmatpush2.msra.mxu0 0.0
    %214 = vmatprep.subr.mxu0 0.0
    %215 = vmatpush2.msra.mxu0 0.0
    %216 = vmatprep.subr.mxu0 0.0
    %217 = vmatpush2.msra.mxu0 0.0
    %218 = vmatprep.subr.mxu0 0.0
    %219 = vmatpush2.msra.mxu0 0.0
    %220 = vmatprep.subr.mxu0 0.0
    %221 = vmatpush2.msra.mxu0 0.0
    %222 = vmatprep.subr.mxu0 0.0
    %223 = vmatpush2.msra.mxu0 0.0
    %224 = vmatprep.subr.mxu0 0.0
    %225 = vmatpush2.msra.mxu0 0.0
    %226 = vmatprep.subr.mxu0 0.0
    %227 = vmatpush2.msra.mxu0 0.0
    %228 = vmatprep.subr.mxu0 0.0
    %229 = vmatpush2.msra.mxu0 0.0
    %230 = vmatprep.subr.mxu0 0.0
    %231 = vmatpush2.msra.mxu0 0.0
    %232 = vmatprep.subr.mxu0 0.0
    %233 = vmatpush2.msra.mxu0 0.0
    %234 = vmatprep.subr.mxu0 0.0
    %235 = vmatpush2.msra.mxu0 0.0
    %236 = vmatprep.subr.mxu0 0.0
    %237 = vmatpush2.msra.mxu0 0.0
    %238 = vmatprep.mubr.f32.mxu0 0.0
    %239 = vmatmul.mubr.f32.gmra.mxu0 %v172
    %v240 = vpop.f32.mrf.mxu0
    %v241 = vadd.f32 0.0, %v240
    %v242 = vpop.f32.mrf.mxu0
    %v243 = vadd.f32 0.0, %v242
    %244 = vdwg.mxu0
    %v247 = vcombine.low %v241, %v243
    %v249 = vunpack.c.l.s4 1983009808
    %v250 = vunpack.c.0.s8 %v249
    %v251 = vlaneseq
    %v252 = vshrl.u32 %v251, 7
    %v253 = vsub.s32 %v250, %v252
    %v254 = vrot.slane %v247, %v253
    %256 = vst [vmem:[%s6] sm:$0xf] %v254
    %v257 = vld [vmem:[%s2] sm:$0xf]
    %s258 = sld [smem:[#allocation2]]
    %v259 = vstv %s258
    %v260 = vmul.f32 %v259, %v241
    %v261 = vmul.f32 %v259, %v243
    %s262 = sld [smem:[#allocation2 + $0x1]]
    %v263 = vstv %s262
    %v264 = vmul.f32 %v263, %v257
    %v267 = vunpack.c.l.s4 1983009808
    %v268 = vunpack.c.0.s8 %v267
    %v269 = vlaneseq
    %v270 = vshrl.u32 %v269, 7
    %v271 = vsub.s32 %v268, %v270
    %v272 = vrot.slane %v264, %v271
    %v273 = vcombine.high %v272, %v272
    %v276 = vadd.f32 %v260, %v272
    %v277 = vadd.f32 %v261, %v273
    %v278 = vtanh.pop %v276
    %v279 = vtanh.pop %v277
    %v282 = vcombine.low %v278, %v279
    %v284 = vunpack.c.l.s4 1983009808
    %v285 = vunpack.c.0.s8 %v284
    %v286 = vlaneseq
    %v287 = vshrl.u32 %v286, 7
    %v288 = vsub.s32 %v285, %v287
    %v289 = vrot.slane %v282, %v288
    %291 = vst [vmem:[%s7] sm:$0xf] %v289
    %s292 = sld [smem:[#allocation2 + $0x2]]
    %v293 = vstv %s292
    %v294 = vmul.f32 %v293, %v241
    %v295 = vmul.f32 %v293, %v243
    %s296 = sld [smem:[#allocation2 + $0x3]]
    %v297 = vstv %s296
    %v298 = vmul.f32 %v297, %v257
    %v301 = vunpack.c.l.s4 1983009808
    %v302 = vunpack.c.0.s8 %v301
    %v303 = vlaneseq
    %v304 = vshrl.u32 %v303, 7
    %v305 = vsub.s32 %v302, %v304
    %v306 = vrot.slane %v298, %v305
    %v307 = vcombine.high %v306, %v306
    %v310 = vadd.f32 %v294, %v306
    %v311 = vadd.f32 %v295, %v307
    %v312 = vtanh.pop %v310
    %v313 = vtanh.pop %v311
    %v316 = vcombine.low %v312, %v313
    %v318 = vunpack.c.l.s4 1983009808
    %v319 = vunpack.c.0.s8 %v318
    %v320 = vlaneseq
    %v321 = vshrl.u32 %v320, 7
    %v322 = vsub.s32 %v319, %v321
    %v323 = vrot.slane %v316, %v322
    %s325 = scalar_lea.vmem %s7, 4
    %326 = vst [vmem:[%s325] sm:$0xf] %v323
    %v327 = vld [vmem:[#allocation8] sm:$0xff]
    %v328 = vld [vmem:[#allocation8 + $0x8] sm:$0xff]
    %v329 = vld [vmem:[#allocation8 + $0x10] sm:$0xff]
    %v330 = vld [vmem:[#allocation8 + $0x18] sm:$0xff]
    %v331 = vld [vmem:[#allocation8 + $0x20] sm:$0xff]
    %v332 = vld [vmem:[#allocation8 + $0x28] sm:$0xff]
    %v333 = vld [vmem:[#allocation8 + $0x30] sm:$0xff]
    %v334 = vld [vmem:[#allocation8 + $0x38] sm:$0xff]
    %v335 = vld [vmem:[#allocation8 + $0x40] sm:$0xff]
    %v336 = vld [vmem:[#allocation8 + $0x48] sm:$0xff]
    %v337 = vld [vmem:[#allocation8 + $0x50] sm:$0xff]
    %v338 = vld [vmem:[#allocation8 + $0x58] sm:$0xff]
    %v339 = vld [vmem:[#allocation8 + $0x60] sm:$0xff]
    %v340 = vld [vmem:[#allocation8 + $0x68] sm:$0xff]
    %v341 = vld [vmem:[#allocation8 + $0x70] sm:$0xff]
    %v342 = vld [vmem:[#allocation8 + $0x78] sm:$0xff]
    %v344 = vsel %vm170, %v78, 0
    %346 = vmatprep.subr.mxu0 0.0
    %347 = vmatpush1.msra.mxu0 0.0
    %348 = vmatprep.subr.mxu0 0.0
    %349 = vmatpush1.msra.mxu0 0.0
    %350 = vmatprep.subr.mxu0 0.0
    %351 = vmatpush1.msra.mxu0 0.0
    %352 = vmatprep.subr.mxu0 0.0
    %353 = vmatpush1.msra.mxu0 0.0
    %354 = vmatprep.subr.mxu0 0.0
    %355 = vmatpush1.msra.mxu0 0.0
    %356 = vmatprep.subr.mxu0 0.0
    %357 = vmatpush1.msra.mxu0 0.0
    %358 = vmatprep.subr.mxu0 0.0
    %359 = vmatpush1.msra.mxu0 0.0
    %360 = vmatprep.subr.mxu0 0.0
    %361 = vmatpush1.msra.mxu0 0.0
    %362 = vmatprep.subr.mxu0 %v342
    %363 = vmatpush1.msra.mxu0 %v341
    %364 = vmatprep.subr.mxu0 %v340
    %365 = vmatpush1.msra.mxu0 %v339
    %366 = vmatprep.subr.mxu0 %v338
    %367 = vmatpush1.msra.mxu0 %v337
    %368 = vmatprep.subr.mxu0 %v336
    %369 = vmatpush1.msra.mxu0 %v335
    %370 = vmatprep.subr.mxu0 %v334
    %371 = vmatpush1.msra.mxu0 %v333
    %372 = vmatprep.subr.mxu0 %v332
    %373 = vmatpush1.msra.mxu0 %v331
    %374 = vmatprep.subr.mxu0 %v330
    %375 = vmatpush1.msra.mxu0 %v329
    %376 = vmatprep.subr.mxu0 %v328
    %377 = vmatpush1.msra.mxu0 %v327
    %378 = vmatprep.subr.mxu0 0.0
    %379 = vmatpush2.msra.mxu0 0.0
    %380 = vmatprep.subr.mxu0 0.0
    %381 = vmatpush2.msra.mxu0 0.0
    %382 = vmatprep.subr.mxu0 0.0
    %383 = vmatpush2.msra.mxu0 0.0
    %384 = vmatprep.subr.mxu0 0.0
    %385 = vmatpush2.msra.mxu0 0.0
    %386 = vmatprep.subr.mxu0 0.0
    %387 = vmatpush2.msra.mxu0 0.0
    %388 = vmatprep.subr.mxu0 0.0
    %389 = vmatpush2.msra.mxu0 0.0
    %390 = vmatprep.subr.mxu0 0.0
    %391 = vmatpush2.msra.mxu0 0.0
    %392 = vmatprep.subr.mxu0 0.0
    %393 = vmatpush2.msra.mxu0 0.0
    %394 = vmatprep.subr.mxu0 0.0
    %395 = vmatpush2.msra.mxu0 0.0
    %396 = vmatprep.subr.mxu0 0.0
    %397 = vmatpush2.msra.mxu0 0.0
    %398 = vmatprep.subr.mxu0 0.0
    %399 = vmatpush2.msra.mxu0 0.0
    %400 = vmatprep.subr.mxu0 0.0
    %401 = vmatpush2.msra.mxu0 0.0
    %402 = vmatprep.subr.mxu0 0.0
    %403 = vmatpush2.msra.mxu0 0.0
    %404 = vmatprep.subr.mxu0 0.0
    %405 = vmatpush2.msra.mxu0 0.0
    %406 = vmatprep.subr.mxu0 0.0
    %407 = vmatpush2.msra.mxu0 0.0
    %408 = vmatprep.subr.mxu0 0.0
    %409 = vmatpush2.msra.mxu0 0.0
    %410 = vmatprep.mubr.f32.mxu0 0.0
    %411 = vmatmul.mubr.f32.gmra.mxu0 %v344
    %v412 = vpop.f32.mrf.mxu0
    %v413 = vadd.f32 0.0, %v412
    %v414 = vpop.f32.mrf.mxu0
    %v415 = vadd.f32 0.0, %v414
    %416 = vdwg.mxu0
    %417 = vst [vmem:[%s8] sm:$0xff] %v413
    %418 = vst [vmem:[%s8 + $0x8] sm:$0xff] %v415
    // Predicated region
    $region42: #{fandd_forward.2} parent=1 // pred_check
      _
    $region43: #{fandd_forward.2} parent=1 // pred_check_branch
      %420 = sbr.rel (0) target = $region45
    $region44: #{fandd_forward.2} parent=1 // pred_region
      _
    $region45: #{fandd_forward.2} parent=1 // pred_fallthru
      _
    // Predicated region
    $region46: #{fandd_forward.2} parent=1 // pred_check
      _
    $region47: #{fandd_forward.2} parent=1 // pred_check_branch
      %422 = sbr.rel (0) target = $region49
    $region48: #{fandd_forward.2} parent=1 // pred_region
      _
    $region49: #{fandd_forward.2} parent=1 // pred_fallthru
      _
    // Predicated region
    $region50: #{fandd_forward.2} parent=1 // pred_check
      _
    $region51: #{fandd_forward.2} parent=1 // pred_check_branch
      %424 = sbr.rel (0) target = $region53
    $region52: #{fandd_forward.2} parent=1 // pred_region
      _
    $region53: #{fandd_forward.2} parent=1 // pred_fallthru
      _
    // Predicated region
    $region54: #{fandd_forward.2} parent=1 // pred_check
      _
    $region55: #{fandd_forward.2} parent=1 // pred_check_branch
      %426 = sbr.rel (0) target = $region57
    $region56: #{fandd_forward.2} parent=1 // pred_region
      _
    $region57: #{fandd_forward.2} parent=1 // pred_fallthru
      _
    // Predicated region
    $region58: #{fandd_forward.2} parent=1 // pred_check
      _
    $region59: #{fandd_forward.2} parent=1 // pred_check_branch
      %428 = sbr.rel (0) target = $region61
    $region60: #{fandd_forward.2} parent=1 // pred_region
      _
    $region61: #{fandd_forward.2} parent=1 // pred_fallthru
      _
    // Predicated region
    $region62: #{fandd_forward.2} parent=1 // pred_check
      _
    $region63: #{fandd_forward.2} parent=1 // pred_check_branch
      %430 = sbr.rel (0) target = $region65
    $region64: #{fandd_forward.2} parent=1 // pred_region
      _
    $region65: #{fandd_forward.2} parent=1 // pred_fallthru
      _
    %431 = vsyncpa [#allocation3], 1
    %432 = vsyncpa [#allocation7], 1
    %433 = vsyncpa [#allocation4], 1

// kernel: fandd_forward.3
$region0: #{fandd_forward.3}
  #allocation0 [shape = 'u32[]', space=smem, size = 0x4, offset = 0x4, fixed_abs, tag = 'smem constant byte address 0x4 - core index']
  #allocation1 [shape = 'u32[144,128]{1,0:T(1,128)}', space=vmem, size = 0x12000, scoped, tag = 'internal scratch']
  #allocation2 [shape = 'f32[4,256]{1,0:T(4,128)}', space=vmem, size = 0x1000, scoped, tag = 'scratch operand']
  #allocation3 [shape = 'f32[4,256]{1,0:T(4,128)}', space=vmem, size = 0x1000, scoped, tag = 'scratch operand']
  #allocation4 [shape = 'f32[256,256]{1,0:T(8,128)}', space=vmem, size = 0x40000, scoped, tag = 'scratch operand']
  %s0 = inlined_call_operand.vmem [shape: f32[3], index: 0, kind: input, shape index: {}]
  %s1 = inlined_call_operand.vmem [shape: f32[2,4,64], index: 1, kind: input, shape index: {}]
  %s2 = inlined_call_operand.vmem [shape: f32[2,1,256], index: 2, kind: input, shape index: {}]
  %s3 = inlined_call_operand.vmem [shape: f32[2,4,256], index: 3, kind: input, shape index: {}]
  %s4 = inlined_call_operand.vmem [shape: f32[2,256,256], index: 4, kind: input, shape index: {}]
  %s5 = inlined_call_operand.vmem [shape: f32[2,256,256], index: 5, kind: input, shape index: {}]
  %s6 = inlined_call_operand.vmem [shape: f32[2,256,256], index: 6, kind: input, shape index: {}]
  %s7 = inlined_call_operand.vmem [shape: f32[256,256], index: 7, kind: input, shape index: {}]
  %s8 = inlined_call_operand.vmem [shape: f32[64,256], index: 8, kind: input, shape index: {}]
  %s9 = inlined_call_operand.vmem [shape: f32[4,4], index: 9, kind: input, shape index: {}]
  %s10 = inlined_call_operand.vmem [shape: f32[4,4], index: 10, kind: input, shape index: {}]
  %s11 = inlined_call_operand.vmem [shape: f32[4,1], index: 11, kind: input, shape index: {}]
  %s12 = inlined_call_operand.vmem [shape: f32[2,4,256], index: 12, kind: output, shape index: {}]
  %s13 = sld [smem:[#allocation0]]
  $region89: #{fandd_forward.3} parent=0
    _
  %s15 = ssub.s32 1, %s13
  %s16 = scalar_select 0, %s15, %s13
  $region1: #{fandd_forward.3} parent=0
    #allocation5 [shape = 'u8[512]{0}', space=smem, size = 0x200, scoped, tag = 'input window, operand 0, single buffered']
    #allocation6 [shape = 's32[2]{0}', space=sflag, size = 0x8, scoped, tag = 'scoped memory for fandd_forward.3']
    %17 = vsyncpa [#allocation6], 0
    loop: start=0, step=1, limit=8
    $region2: #{fandd_forward.3} parent=1 // loop_pre_header
      _
    $region3: #{fandd_forward.3} parent=1 // loop_header
      %s19 = sphi 0, %s23
      %p20 = scmp.ge.s32.totalorder %s19, 8
      %s26 = sphi 0, %s38
      %s27 = sphi 0, %s34
      %s28 = sphi 0, %s26
      %s29 = sphi 0, %s27
      %s30 = sphi 0, %s28
      %s31 = sphi 0, %s29
      %s39 = sphi 0, %s39
      %s41 = sphi 0, %s39
      %s42 = sphi 0, %s41
      %s56 = sphi 0, %s42
      %s62 = sphi 0, %s64
      %s65 = sphi 0, %s62
      %s66 = sphi 0, %s65
      %s82 = sphi 0, %s66
      %s88 = sphi 0, %s90
      %s91 = sphi 0, %s88
      %s92 = sphi 0, %s91
      %s108 = sphi 0, %s92
      %s114 = sphi 0, %s116
      %s117 = sphi 0, %s114
      %s118 = sphi 0, %s117
      %s134 = sphi 0, %s118
      %s140 = sphi 0, %s142
      %s143 = sphi 0, %s140
      %s144 = sphi 0, %s143
      %s160 = sphi 0, %s144
      %s166 = sphi 0, %s168
      %s169 = sphi 0, %s166
      %s170 = sphi 0, %s169
      %s186 = sphi 0, %s170
      %s192 = sphi 0, %s194
      %s195 = sphi 0, %s192
      %s196 = sphi 0, %s195
      %s212 = sphi 0, %s196
      %s216 = sphi 0, %s216
      %s218 = sphi 0, %s216
      %s219 = sphi 0, %s218
      %s233 = sphi 0, %s219
      %s237 = sphi 0, %s237
      %s239 = sphi 0, %s237
      %s240 = sphi 0, %s239
      %s254 = sphi 0, %s240
      %s258 = sphi 0, %s258
      %s260 = sphi 0, %s258
      %s261 = sphi 0, %s260
      %s275 = sphi 0, %s261
      %s279 = sphi 0, %s279
      %s281 = sphi 0, %s279
      %s282 = sphi 0, %s281
      %s296 = sphi 0, %s282
      %s300 = sphi 0, %s300
      %s302 = sphi 0, %s300
      %s303 = sphi 0, %s302
      %s317 = sphi 0, %s303
      %s323 = sphi 0, %s325
      %s326 = sphi 0, %s323
      %s327 = sphi 0, %s326
      %s343 = sphi 0, %s327
    $region4: #{fandd_forward.3} parent=1 // loop_header_branch
      %22 = sbr.rel (%p20) target = $region8
    $region5: #{fandd_forward.3} parent=1 // loop_body
      %s24 = ssub.s32 %s19, 1
      %s25 = ssub.s32 %s19, 2
      %s32 = sadd.s32 1, %s27
      %p33 = scmp.ge.s32.totalorder %s32, 3
      %s34 = scalar_select %p33, 0, %s32
      %s35 = sadd.s32 1, %s26
      %s36 = scalar_select %p33, %s35, %s26
      %p37 = scmp.ge.s32.totalorder %s36, 2
      %s38 = scalar_select %p37, 0, %s36
      %s40 = sadd.s32 %s39, 1
      %p43 = scmp.eq.s32.totalorder %s19, 5
      %p44 = scmp.ne.s32.totalorder %s39, %s41
      %p45 = scmp.eq.s32.totalorder %s19, 0
      %p46 = por %p44, %p45
      %p47 = scmp.ne.s32.totalorder %s39, %s41
      %p48 = scmp.eq.s32.totalorder %s24, 5
      %p49 = por %p47, %p48
      %p50 = scmp.ne.s32.totalorder %s41, %s42
      %p51 = scmp.eq.s32.totalorder %s24, 0
      %p52 = por %p50, %p51
      %p53 = scmp.ne.s32.totalorder %s41, %s42
      %p54 = scmp.eq.s32.totalorder %s25, 5
      %p55 = por %p53, %p54
      %p57 = scmp.ne.s32.totalorder %s42, %s56
      %p58 = scmp.eq.s32.totalorder %s25, 0
      %p59 = por %p57, %p58
      %s60 = ssub.s32 %s26, %s38
      %p61 = scmp.eq.s32.totalorder %s60, 0
      %s63 = sadd.s32 %s62, 1
      %s64 = scalar_select %p61, %s62, %s63
      %p67 = pneg %p61
      %p68 = scmp.eq.s32.totalorder %s19, 5
      %p69 = por %p67, %p68
      %p70 = scmp.ne.s32.totalorder %s62, %s65
      %p71 = scmp.eq.s32.totalorder %s19, 0
      %p72 = por %p70, %p71
      %p73 = scmp.ne.s32.totalorder %s62, %s65
      %p74 = scmp.eq.s32.totalorder %s24, 5
      %p75 = por %p73, %p74
      %p76 = scmp.ne.s32.totalorder %s65, %s66
      %p77 = scmp.eq.s32.totalorder %s24, 0
      %p78 = por %p76, %p77
      %p79 = scmp.ne.s32.totalorder %s65, %s66
      %p80 = scmp.eq.s32.totalorder %s25, 5
      %p81 = por %p79, %p80
      %p83 = scmp.ne.s32.totalorder %s66, %s82
      %p84 = scmp.eq.s32.totalorder %s25, 0
      %p85 = por %p83, %p84
      %s86 = ssub.s32 %s26, %s38
      %p87 = scmp.eq.s32.totalorder %s86, 0
      %s89 = sadd.s32 %s88, 1
      %s90 = scalar_select %p87, %s88, %s89
      %p93 = pneg %p87
      %p94 = scmp.eq.s32.totalorder %s19, 5
      %p95 = por %p93, %p94
      %p96 = scmp.ne.s32.totalorder %s88, %s91
      %p97 = scmp.eq.s32.totalorder %s19, 0
      %p98 = por %p96, %p97
      %p99 = scmp.ne.s32.totalorder %s88, %s91
      %p100 = scmp.eq.s32.totalorder %s24, 5
      %p101 = por %p99, %p100
      %p102 = scmp.ne.s32.totalorder %s91, %s92
      %p103 = scmp.eq.s32.totalorder %s24, 0
      %p104 = por %p102, %p103
      %p105 = scmp.ne.s32.totalorder %s91, %s92
      %p106 = scmp.eq.s32.totalorder %s25, 5
      %p107 = por %p105, %p106
      %p109 = scmp.ne.s32.totalorder %s92, %s108
      %p110 = scmp.eq.s32.totalorder %s25, 0
      %p111 = por %p109, %p110
      %s112 = ssub.s32 %s26, %s38
      %p113 = scmp.eq.s32.totalorder %s112, 0
      %s115 = sadd.s32 %s114, 1
      %s116 = scalar_select %p113, %s114, %s115
      %p119 = pneg %p113
      %p120 = scmp.eq.s32.totalorder %s19, 5
      %p121 = por %p119, %p120
      %p122 = scmp.ne.s32.totalorder %s114, %s117
      %p123 = scmp.eq.s32.totalorder %s19, 0
      %p124 = por %p122, %p123
      %p125 = scmp.ne.s32.totalorder %s114, %s117
      %p126 = scmp.eq.s32.totalorder %s24, 5
      %p127 = por %p125, %p126
      %p128 = scmp.ne.s32.totalorder %s117, %s118
      %p129 = scmp.eq.s32.totalorder %s24, 0
      %p130 = por %p128, %p129
      %p131 = scmp.ne.s32.totalorder %s117, %s118
      %p132 = scmp.eq.s32.totalorder %s25, 5
      %p133 = por %p131, %p132
      %p135 = scmp.ne.s32.totalorder %s118, %s134
      %p136 = scmp.eq.s32.totalorder %s25, 0
      %p137 = por %p135, %p136
      %s138 = ssub.s32 %s26, %s38
      %p139 = scmp.eq.s32.totalorder %s138, 0
      %s141 = sadd.s32 %s140, 1
      %s142 = scalar_select %p139, %s140, %s141
      %p145 = pneg %p139
      %p146 = scmp.eq.s32.totalorder %s19, 5
      %p147 = por %p145, %p146
      %p148 = scmp.ne.s32.totalorder %s140, %s143
      %p149 = scmp.eq.s32.totalorder %s19, 0
      %p150 = por %p148, %p149
      %p151 = scmp.ne.s32.totalorder %s140, %s143
      %p152 = scmp.eq.s32.totalorder %s24, 5
      %p153 = por %p151, %p152
      %p154 = scmp.ne.s32.totalorder %s143, %s144
      %p155 = scmp.eq.s32.totalorder %s24, 0
      %p156 = por %p154, %p155
      %p157 = scmp.ne.s32.totalorder %s143, %s144
      %p158 = scmp.eq.s32.totalorder %s25, 5
      %p159 = por %p157, %p158
      %p161 = scmp.ne.s32.totalorder %s144, %s160
      %p162 = scmp.eq.s32.totalorder %s25, 0
      %p163 = por %p161, %p162
      %s164 = ssub.s32 %s26, %s38
      %p165 = scmp.eq.s32.totalorder %s164, 0
      %s167 = sadd.s32 %s166, 1
      %s168 = scalar_select %p165, %s166, %s167
      %p171 = pneg %p165
      %p172 = scmp.eq.s32.totalorder %s19, 5
      %p173 = por %p171, %p172
      %p174 = scmp.ne.s32.totalorder %s166, %s169
      %p175 = scmp.eq.s32.totalorder %s19, 0
      %p176 = por %p174, %p175
      %p177 = scmp.ne.s32.totalorder %s166, %s169
      %p178 = scmp.eq.s32.totalorder %s24, 5
      %p179 = por %p177, %p178
      %p180 = scmp.ne.s32.totalorder %s169, %s170
      %p181 = scmp.eq.s32.totalorder %s24, 0
      %p182 = por %p180, %p181
      %p183 = scmp.ne.s32.totalorder %s169, %s170
      %p184 = scmp.eq.s32.totalorder %s25, 5
      %p185 = por %p183, %p184
      %p187 = scmp.ne.s32.totalorder %s170, %s186
      %p188 = scmp.eq.s32.totalorder %s25, 0
      %p189 = por %p187, %p188
      %s190 = ssub.s32 %s26, %s38
      %p191 = scmp.eq.s32.totalorder %s190, 0
      %s193 = sadd.s32 %s192, 1
      %s194 = scalar_select %p191, %s192, %s193
      %p197 = pneg %p191
      %p198 = scmp.eq.s32.totalorder %s19, 5
      %p199 = por %p197, %p198
      %p200 = scmp.ne.s32.totalorder %s192, %s195
      %p201 = scmp.eq.s32.totalorder %s19, 0
      %p202 = por %p200, %p201
      %p203 = scmp.ne.s32.totalorder %s192, %s195
      %p204 = scmp.eq.s32.totalorder %s24, 5
      %p205 = por %p203, %p204
      %p206 = scmp.ne.s32.totalorder %s195, %s196
      %p207 = scmp.eq.s32.totalorder %s24, 0
      %p208 = por %p206, %p207
      %p209 = scmp.ne.s32.totalorder %s195, %s196
      %p210 = scmp.eq.s32.totalorder %s25, 5
      %p211 = por %p209, %p210
      %p213 = scmp.ne.s32.totalorder %s196, %s212
      %p214 = scmp.eq.s32.totalorder %s25, 0
      %p215 = por %p213, %p214
      %s217 = sadd.s32 %s216, 1
      %p220 = scmp.eq.s32.totalorder %s19, 5
      %p221 = scmp.ne.s32.totalorder %s216, %s218
      %p222 = scmp.eq.s32.totalorder %s19, 0
      %p223 = por %p221, %p222
      %p224 = scmp.ne.s32.totalorder %s216, %s218
      %p225 = scmp.eq.s32.totalorder %s24, 5
      %p226 = por %p224, %p225
      %p227 = scmp.ne.s32.totalorder %s218, %s219
      %p228 = scmp.eq.s32.totalorder %s24, 0
      %p229 = por %p227, %p228
      %p230 = scmp.ne.s32.totalorder %s218, %s219
      %p231 = scmp.eq.s32.totalorder %s25, 5
      %p232 = por %p230, %p231
      %p234 = scmp.ne.s32.totalorder %s219, %s233
      %p235 = scmp.eq.s32.totalorder %s25, 0
      %p236 = por %p234, %p235
      %s238 = sadd.s32 %s237, 1
      %p241 = scmp.eq.s32.totalorder %s19, 5
      %p242 = scmp.ne.s32.totalorder %s237, %s239
      %p243 = scmp.eq.s32.totalorder %s19, 0
      %p244 = por %p242, %p243
      %p245 = scmp.ne.s32.totalorder %s237, %s239
      %p246 = scmp.eq.s32.totalorder %s24, 5
      %p247 = por %p245, %p246
      %p248 = scmp.ne.s32.totalorder %s239, %s240
      %p249 = scmp.eq.s32.totalorder %s24, 0
      %p250 = por %p248, %p249
      %p251 = scmp.ne.s32.totalorder %s239, %s240
      %p252 = scmp.eq.s32.totalorder %s25, 5
      %p253 = por %p251, %p252
      %p255 = scmp.ne.s32.totalorder %s240, %s254
      %p256 = scmp.eq.s32.totalorder %s25, 0
      %p257 = por %p255, %p256
      %s259 = sadd.s32 %s258, 1
      %p262 = scmp.eq.s32.totalorder %s19, 5
      %p263 = scmp.ne.s32.totalorder %s258, %s260
      %p264 = scmp.eq.s32.totalorder %s19, 0
      %p265 = por %p263, %p264
      %p266 = scmp.ne.s32.totalorder %s258, %s260
      %p267 = scmp.eq.s32.totalorder %s24, 5
      %p268 = por %p266, %p267
      %p269 = scmp.ne.s32.totalorder %s260, %s261
      %p270 = scmp.eq.s32.totalorder %s24, 0
      %p271 = por %p269, %p270
      %p272 = scmp.ne.s32.totalorder %s260, %s261
      %p273 = scmp.eq.s32.totalorder %s25, 5
      %p274 = por %p272, %p273
      %p276 = scmp.ne.s32.totalorder %s261, %s275
      %p277 = scmp.eq.s32.totalorder %s25, 0
      %p278 = por %p276, %p277
      %s280 = sadd.s32 %s279, 1
      %p283 = scmp.eq.s32.totalorder %s19, 5
      %p284 = scmp.ne.s32.totalorder %s279, %s281
      %p285 = scmp.eq.s32.totalorder %s19, 0
      %p286 = por %p284, %p285
      %p287 = scmp.ne.s32.totalorder %s279, %s281
      %p288 = scmp.eq.s32.totalorder %s24, 5
      %p289 = por %p287, %p288
      %p290 = scmp.ne.s32.totalorder %s281, %s282
      %p291 = scmp.eq.s32.totalorder %s24, 0
      %p292 = por %p290, %p291
      %p293 = scmp.ne.s32.totalorder %s281, %s282
      %p294 = scmp.eq.s32.totalorder %s25, 5
      %p295 = por %p293, %p294
      %p297 = scmp.ne.s32.totalorder %s282, %s296
      %p298 = scmp.eq.s32.totalorder %s25, 0
      %p299 = por %p297, %p298
      %s301 = sadd.s32 %s300, 1
      %p304 = scmp.eq.s32.totalorder %s19, 5
      %p305 = scmp.ne.s32.totalorder %s300, %s302
      %p306 = scmp.eq.s32.totalorder %s19, 0
      %p307 = por %p305, %p306
      %p308 = scmp.ne.s32.totalorder %s300, %s302
      %p309 = scmp.eq.s32.totalorder %s24, 5
      %p310 = por %p308, %p309
      %p311 = scmp.ne.s32.totalorder %s302, %s303
      %p312 = scmp.eq.s32.totalorder %s24, 0
      %p313 = por %p311, %p312
      %p314 = scmp.ne.s32.totalorder %s302, %s303
      %p315 = scmp.eq.s32.totalorder %s25, 5
      %p316 = por %p314, %p315
      %p318 = scmp.ne.s32.totalorder %s303, %s317
      %p319 = scmp.eq.s32.totalorder %s25, 0
      %p320 = por %p318, %p319
      %s321 = ssub.s32 %s26, %s38
      %p322 = scmp.eq.s32.totalorder %s321, 0
      %s324 = sadd.s32 %s323, 1
      %s325 = scalar_select %p322, %s323, %s324
      %p328 = pneg %p322
      %p329 = scmp.eq.s32.totalorder %s19, 5
      %p330 = por %p328, %p329
      %p331 = scmp.ne.s32.totalorder %s323, %s326
      %p332 = scmp.eq.s32.totalorder %s19, 0
      %p333 = por %p331, %p332
      %p334 = scmp.ne.s32.totalorder %s323, %s326
      %p335 = scmp.eq.s32.totalorder %s24, 5
      %p336 = por %p334, %p335
      %p337 = scmp.ne.s32.totalorder %s326, %s327
      %p338 = scmp.eq.s32.totalorder %s24, 0
      %p339 = por %p337, %p338
      %p340 = scmp.ne.s32.totalorder %s326, %s327
      %p341 = scmp.eq.s32.totalorder %s25, 5
      %p342 = por %p340, %p341
      %p344 = scmp.ne.s32.totalorder %s327, %s343
      %p345 = scmp.eq.s32.totalorder %s25, 0
      %p346 = por %p344, %p345
      %p347 = scmp.le.s32.totalorder 1, %s19
      %p348 = scmp.lt.s32.totalorder %s19, 7
      %p349 = pnand %p347, %p348
      %p350 = pneg %p349
      // Predicated region
      $region9: #{fandd_forward.3} parent=5 // pred_check
        _
      $region10: #{fandd_forward.3} parent=5 // pred_check_branch
        %352 = sbr.rel (%p349) target = $region12
      $region11: #{fandd_forward.3} parent=5 // pred_region
        %s353 = ssub.s32 %s19, 1
        // Predicated region
        $region13: #{fandd_forward.3} parent=11 // pred_check
          %p354 = pneg %p52
        $region14: #{fandd_forward.3} parent=11 // pred_check_branch
          %356 = sbr.rel (%p354) target = $region16
        $region15: #{fandd_forward.3} parent=11 // pred_region
          %s358 = ssub.s32 16, 16
          %359 = vsyncadd [#allocation6], %s358
          %s361 = sshll.u32 %s0, 4
          %s362 = int_to_ptr.vmem [resolvable:$true] %s361
          %364 = dma.vmem_to_smem %s362, 16, [#allocation5], [#allocation6]
        $region16: #{fandd_forward.3} parent=11 // pred_fallthru
          _
        // Predicated region
        $region17: #{fandd_forward.3} parent=11 // pred_check
          %p365 = pneg %p229
        $region18: #{fandd_forward.3} parent=11 // pred_check_branch
          %367 = sbr.rel (%p365) target = $region20
        $region19: #{fandd_forward.3} parent=11 // pred_region
          _
        $region20: #{fandd_forward.3} parent=11 // pred_fallthru
          _
        // Predicated region
        $region21: #{fandd_forward.3} parent=11 // pred_check
          %p368 = pneg %p250
        $region22: #{fandd_forward.3} parent=11 // pred_check_branch
          %370 = sbr.rel (%p368) target = $region24
        $region23: #{fandd_forward.3} parent=11 // pred_region
          _
        $region24: #{fandd_forward.3} parent=11 // pred_fallthru
          _
        // Predicated region
        $region25: #{fandd_forward.3} parent=11 // pred_check
          %p371 = pneg %p271
        $region26: #{fandd_forward.3} parent=11 // pred_check_branch
          %373 = sbr.rel (%p371) target = $region28
        $region27: #{fandd_forward.3} parent=11 // pred_region
          _
        $region28: #{fandd_forward.3} parent=11 // pred_fallthru
          _
        // Predicated region
        $region29: #{fandd_forward.3} parent=11 // pred_check
          %p374 = pneg %p292
        $region30: #{fandd_forward.3} parent=11 // pred_check_branch
          %376 = sbr.rel (%p374) target = $region32
        $region31: #{fandd_forward.3} parent=11 // pred_region
          _
        $region32: #{fandd_forward.3} parent=11 // pred_fallthru
          _
        // Predicated region
        $region33: #{fandd_forward.3} parent=11 // pred_check
          %p377 = pneg %p313
        $region34: #{fandd_forward.3} parent=11 // pred_check_branch
          %379 = sbr.rel (%p377) target = $region36
        $region35: #{fandd_forward.3} parent=11 // pred_region
          _
        $region36: #{fandd_forward.3} parent=11 // pred_fallthru
          _
      $region12: #{fandd_forward.3} parent=5 // pred_fallthru
        _
      %p380 = scmp.lt.s32.totalorder %s19, 6
      // Predicated region
      $region37: #{fandd_forward.3} parent=5 // pred_check
        %p381 = pneg %p380
      $region38: #{fandd_forward.3} parent=5 // pred_check_branch
        %383 = sbr.rel (%p381) target = $region40
      $region39: #{fandd_forward.3} parent=5 // pred_region
        // Predicated region
        $region41: #{fandd_forward.3} parent=39 // pred_check
          %p384 = pneg %p72
        $region42: #{fandd_forward.3} parent=39 // pred_check_branch
          %386 = sbr.rel (%p384) target = $region44
        $region43: #{fandd_forward.3} parent=39 // pred_region
          %p387 = scmp.lt.s32.totalorder %s26, 1
          %s388 = scalar_select %p387, %s26, 1
          %s389 = smul.addr %s388, 4
          %s390 = scalar_lea.vmem %s1, %s389
        $region44: #{fandd_forward.3} parent=39 // pred_fallthru
          _
        // Predicated region
        $region45: #{fandd_forward.3} parent=39 // pred_check
          %p391 = pneg %p98
        $region46: #{fandd_forward.3} parent=39 // pred_check_branch
          %393 = sbr.rel (%p391) target = $region48
        $region47: #{fandd_forward.3} parent=39 // pred_region
          %p394 = scmp.lt.s32.totalorder %s26, 1
          %s395 = scalar_select %p394, %s26, 1
          %s396 = smul.addr %s395, 2
          %s397 = scalar_lea.vmem %s2, %s396
        $region48: #{fandd_forward.3} parent=39 // pred_fallthru
          _
        // Predicated region
        $region49: #{fandd_forward.3} parent=39 // pred_check
          %p398 = pneg %p124
        $region50: #{fandd_forward.3} parent=39 // pred_check_branch
          %400 = sbr.rel (%p398) target = $region52
        $region51: #{fandd_forward.3} parent=39 // pred_region
          %p401 = scmp.lt.s32.totalorder %s26, 1
          %s402 = scalar_select %p401, %s26, 1
          %s403 = smul.addr %s402, 2
          %s404 = smul.addr %s403, 4
          %s405 = scalar_lea.vmem %s3, %s404
        $region52: #{fandd_forward.3} parent=39 // pred_fallthru
          _
        // Predicated region
        $region53: #{fandd_forward.3} parent=39 // pred_check
          %p406 = pneg %p150
        $region54: #{fandd_forward.3} parent=39 // pred_check_branch
          %408 = sbr.rel (%p406) target = $region56
        $region55: #{fandd_forward.3} parent=39 // pred_region
          %p409 = scmp.lt.s32.totalorder %s26, 1
          %s410 = scalar_select %p409, %s26, 1
          %s411 = smul.addr %s410, 64
          %s412 = smul.addr %s411, 8
          %s413 = scalar_lea.vmem %s4, %s412
        $region56: #{fandd_forward.3} parent=39 // pred_fallthru
          _
        // Predicated region
        $region57: #{fandd_forward.3} parent=39 // pred_check
          %p414 = pneg %p176
        $region58: #{fandd_forward.3} parent=39 // pred_check_branch
          %416 = sbr.rel (%p414) target = $region60
        $region59: #{fandd_forward.3} parent=39 // pred_region
          %p417 = scmp.lt.s32.totalorder %s26, 1
          %s418 = scalar_select %p417, %s26, 1
          %s419 = smul.addr %s418, 64
          %s420 = smul.addr %s419, 8
          %s421 = scalar_lea.vmem %s5, %s420
        $region60: #{fandd_forward.3} parent=39 // pred_fallthru
          _
        // Predicated region
        $region61: #{fandd_forward.3} parent=39 // pred_check
          %p422 = pneg %p202
        $region62: #{fandd_forward.3} parent=39 // pred_check_branch
          %424 = sbr.rel (%p422) target = $region64
        $region63: #{fandd_forward.3} parent=39 // pred_region
          %p425 = scmp.lt.s32.totalorder %s26, 1
          %s426 = scalar_select %p425, %s26, 1
          %s427 = smul.addr %s426, 64
          %s428 = smul.addr %s427, 8
          %s429 = scalar_lea.vmem %s6, %s428
        $region64: #{fandd_forward.3} parent=39 // pred_fallthru
          _
      $region40: #{fandd_forward.3} parent=5 // pred_fallthru
        _
      %p430 = scmp.le.s32.totalorder 1, %s19
      %p431 = scmp.lt.s32.totalorder %s19, 7
      %p432 = pnand %p430, %p431
      %p433 = pneg %p432
      // Predicated region
      $region65: #{fandd_forward.3} parent=5 // pred_check
        _
      $region66: #{fandd_forward.3} parent=5 // pred_check_branch
        %435 = sbr.rel (%p432) target = $region68
      $region67: #{fandd_forward.3} parent=5 // pred_region
        %s436 = ssub.s32 %s19, 1
        // Predicated region
        $region69: #{fandd_forward.3} parent=67 // pred_check
          %p437 = pneg %p52
        $region70: #{fandd_forward.3} parent=67 // pred_check_branch
          %439 = sbr.rel (%p437) target = $region72
        $region71: #{fandd_forward.3} parent=67 // pred_region
          %440 = dma.done [#allocation6], 16
        $region72: #{fandd_forward.3} parent=67 // pred_fallthru
          _
        %441 = sfence
        %p442 = pneg %p52
        %p443 = pneg %p49
        %p444 = scmp.lt.s32.totalorder %s28, 1
        %s445 = scalar_select %p444, %s28, 1
        %s446 = smul.addr %s445, 4
        %s447 = scalar_lea.vmem %s1, %s446
        %p448 = pneg %p78
        %p449 = pneg %p75
        %p450 = scmp.lt.s32.totalorder %s28, 1
        %s451 = scalar_select %p450, %s28, 1
        %s452 = smul.addr %s451, 2
        %s453 = scalar_lea.vmem %s2, %s452
        %p454 = pneg %p104
        %p455 = pneg %p101
        %p456 = scmp.lt.s32.totalorder %s28, 1
        %s457 = scalar_select %p456, %s28, 1
        %s458 = smul.addr %s457, 2
        %s459 = smul.addr %s458, 4
        %s460 = scalar_lea.vmem %s3, %s459
        %p461 = pneg %p130
        %p462 = pneg %p127
        %p463 = scmp.lt.s32.totalorder %s28, 1
        %s464 = scalar_select %p463, %s28, 1
        %s465 = smul.addr %s464, 64
        %s466 = smul.addr %s465, 8
        %s467 = scalar_lea.vmem %s4, %s466
        %p468 = pneg %p156
        %p469 = pneg %p153
        %p470 = scmp.lt.s32.totalorder %s28, 1
        %s471 = scalar_select %p470, %s28, 1
        %s472 = smul.addr %s471, 64
        %s473 = smul.addr %s472, 8
        %s474 = scalar_lea.vmem %s5, %s473
        %p475 = pneg %p182
        %p476 = pneg %p179
        %p477 = scmp.lt.s32.totalorder %s28, 1
        %s478 = scalar_select %p477, %s28, 1
        %s479 = smul.addr %s478, 64
        %s480 = smul.addr %s479, 8
        %s481 = scalar_lea.vmem %s6, %s480
        %p482 = pneg %p208
        %p483 = pneg %p205
        %p484 = pneg %p229
        %p485 = pneg %p226
        %p486 = pneg %p250
        %p487 = pneg %p247
        %p488 = pneg %p271
        %p489 = pneg %p268
        %p490 = pneg %p292
        %p491 = pneg %p289
        %p492 = pneg %p313
        %p493 = pneg %p310
        %p494 = pneg %p339
        %p495 = pneg %p336
        %p496 = scmp.lt.s32.totalorder %s28, 1
        %s497 = scalar_select %p496, %s28, 1
        %s498 = smul.addr %s497, 2
        %s499 = smul.addr %s498, 4
        %s500 = scalar_lea.vmem %s12, %s499
        %p501 = scmp.lt.s32.totalorder %s28, 1
        %s502 = scalar_select %p501, %s28, 1
        %s503 = smul.addr %s502, 4
        %s504 = scalar_lea.vmem %s1, %s503
        %p505 = scmp.lt.s32.totalorder %s28, 1
        %s506 = scalar_select %p505, %s28, 1
        %s507 = smul.addr %s506, 2
        %s508 = scalar_lea.vmem %s2, %s507
        %p509 = scmp.lt.s32.totalorder %s28, 1
        %s510 = scalar_select %p509, %s28, 1
        %s511 = smul.addr %s510, 2
        %s512 = smul.addr %s511, 4
        %s513 = scalar_lea.vmem %s3, %s512
        %p514 = scmp.lt.s32.totalorder %s28, 1
        %s515 = scalar_select %p514, %s28, 1
        %s516 = smul.addr %s515, 64
        %s517 = smul.addr %s516, 8
        %s518 = scalar_lea.vmem %s4, %s517
        %p519 = scmp.lt.s32.totalorder %s28, 1
        %s520 = scalar_select %p519, %s28, 1
        %s521 = smul.addr %s520, 64
        %s522 = smul.addr %s521, 8
        %s523 = scalar_lea.vmem %s5, %s522
        %p524 = scmp.lt.s32.totalorder %s28, 1
        %s525 = scalar_select %p524, %s28, 1
        %s526 = smul.addr %s525, 64
        %s527 = smul.addr %s526, 8
        %s528 = scalar_lea.vmem %s6, %s527
        %p529 = scmp.lt.s32.totalorder %s28, 1
        %s530 = scalar_select %p529, %s28, 1
        %s531 = smul.addr %s530, 2
        %s532 = smul.addr %s531, 4
        %s533 = scalar_lea.vmem %s12, %s532
        %p534 = scmp.eq.s32.totalorder %s29, 0
        // Predicated region
        $region73: #{fandd_forward.3} parent=67 // pred_check
          %p535 = pneg %p534
        $region74: #{fandd_forward.3} parent=67 // pred_check_branch
          %537 = sbr.rel (%p535) target = $region76
        $region75: #{fandd_forward.3} parent=67 // pred_region
          %v538 = vld [vmem:[%s528] sm:$0xff]
          %v539 = vld [vmem:[%s528 + $0x8] sm:$0xff]
          %v540 = vld [vmem:[%s528 + $0x10] sm:$0xff]
          %v541 = vld [vmem:[%s528 + $0x18] sm:$0xff]
          %v542 = vld [vmem:[%s528 + $0x20] sm:$0xff]
          %v543 = vld [vmem:[%s528 + $0x28] sm:$0xff]
          %v544 = vld [vmem:[%s528 + $0x30] sm:$0xff]
          %v545 = vld [vmem:[%s528 + $0x38] sm:$0xff]
          %v546 = vld [vmem:[%s528 + $0x40] sm:$0xff]
          %v547 = vld [vmem:[%s528 + $0x48] sm:$0xff]
          %v548 = vld [vmem:[%s528 + $0x50] sm:$0xff]
          %v549 = vld [vmem:[%s528 + $0x58] sm:$0xff]
          %v550 = vld [vmem:[%s528 + $0x60] sm:$0xff]
          %v551 = vld [vmem:[%s528 + $0x68] sm:$0xff]
          %v552 = vld [vmem:[%s528 + $0x70] sm:$0xff]
          %v553 = vld [vmem:[%s528 + $0x78] sm:$0xff]
          %v554 = vld [vmem:[%s528 + $0x80] sm:$0xff]
          %v555 = vld [vmem:[%s528 + $0x88] sm:$0xff]
          %v556 = vld [vmem:[%s528 + $0x90] sm:$0xff]
          %v557 = vld [vmem:[%s528 + $0x98] sm:$0xff]
          %v558 = vld [vmem:[%s528 + $0xa0] sm:$0xff]
          %v559 = vld [vmem:[%s528 + $0xa8] sm:$0xff]
          %v560 = vld [vmem:[%s528 + $0xb0] sm:$0xff]
          %v561 = vld [vmem:[%s528 + $0xb8] sm:$0xff]
          %v562 = vld [vmem:[%s528 + $0xc0] sm:$0xff]
          %v563 = vld [vmem:[%s528 + $0xc8] sm:$0xff]
          %v564 = vld [vmem:[%s528 + $0xd0] sm:$0xff]
          %v565 = vld [vmem:[%s528 + $0xd8] sm:$0xff]
          %v566 = vld [vmem:[%s528 + $0xe0] sm:$0xff]
          %v567 = vld [vmem:[%s528 + $0xe8] sm:$0xff]
          %v568 = vld [vmem:[%s528 + $0xf0] sm:$0xff]
          %v569 = vld [vmem:[%s528 + $0xf8] sm:$0xff]
          %v570 = vld [vmem:[%s528 + $0x100] sm:$0xff]
          %v571 = vld [vmem:[%s528 + $0x108] sm:$0xff]
          %v572 = vld [vmem:[%s528 + $0x110] sm:$0xff]
          %v573 = vld [vmem:[%s528 + $0x118] sm:$0xff]
          %v574 = vld [vmem:[%s528 + $0x120] sm:$0xff]
          %v575 = vld [vmem:[%s528 + $0x128] sm:$0xff]
          %v576 = vld [vmem:[%s528 + $0x130] sm:$0xff]
          %v577 = vld [vmem:[%s528 + $0x138] sm:$0xff]
          %v578 = vld [vmem:[%s528 + $0x140] sm:$0xff]
          %v579 = vld [vmem:[%s528 + $0x148] sm:$0xff]
          %v580 = vld [vmem:[%s528 + $0x150] sm:$0xff]
          %v581 = vld [vmem:[%s528 + $0x158] sm:$0xff]
          %v582 = vld [vmem:[%s528 + $0x160] sm:$0xff]
          %v583 = vld [vmem:[%s528 + $0x168] sm:$0xff]
          %v584 = vld [vmem:[%s528 + $0x170] sm:$0xff]
          %v585 = vld [vmem:[%s528 + $0x178] sm:$0xff]
          %v586 = vld [vmem:[%s528 + $0x180] sm:$0xff]
          %v587 = vld [vmem:[%s528 + $0x188] sm:$0xff]
          %v588 = vld [vmem:[%s528 + $0x190] sm:$0xff]
          %v589 = vld [vmem:[%s528 + $0x198] sm:$0xff]
          %v590 = vld [vmem:[%s528 + $0x1a0] sm:$0xff]
          %v591 = vld [vmem:[%s528 + $0x1a8] sm:$0xff]
          %v592 = vld [vmem:[%s528 + $0x1b0] sm:$0xff]
          %v593 = vld [vmem:[%s528 + $0x1b8] sm:$0xff]
          %v594 = vld [vmem:[%s528 + $0x1c0] sm:$0xff]
          %v595 = vld [vmem:[%s528 + $0x1c8] sm:$0xff]
          %v596 = vld [vmem:[%s528 + $0x1d0] sm:$0xff]
          %v597 = vld [vmem:[%s528 + $0x1d8] sm:$0xff]
          %v598 = vld [vmem:[%s528 + $0x1e0] sm:$0xff]
          %v599 = vld [vmem:[%s528 + $0x1e8] sm:$0xff]
          %v600 = vld [vmem:[%s528 + $0x1f0] sm:$0xff]
          %v601 = vld [vmem:[%s528 + $0x1f8] sm:$0xff]
          %v602 = vld [vmem:[%s518] sm:$0xff]
          %v603 = vld [vmem:[%s518 + $0x8] sm:$0xff]
          %v604 = vld [vmem:[%s518 + $0x10] sm:$0xff]
          %v605 = vld [vmem:[%s518 + $0x18] sm:$0xff]
          %v606 = vld [vmem:[%s518 + $0x20] sm:$0xff]
          %v607 = vld [vmem:[%s518 + $0x28] sm:$0xff]
          %v608 = vld [vmem:[%s518 + $0x30] sm:$0xff]
          %v609 = vld [vmem:[%s518 + $0x38] sm:$0xff]
          %v610 = vld [vmem:[%s518 + $0x40] sm:$0xff]
          %v611 = vld [vmem:[%s518 + $0x48] sm:$0xff]
          %v612 = vld [vmem:[%s518 + $0x50] sm:$0xff]
          %v613 = vld [vmem:[%s518 + $0x58] sm:$0xff]
          %v614 = vld [vmem:[%s518 + $0x60] sm:$0xff]
          %v615 = vld [vmem:[%s518 + $0x68] sm:$0xff]
          %v616 = vld [vmem:[%s518 + $0x70] sm:$0xff]
          %v617 = vld [vmem:[%s518 + $0x78] sm:$0xff]
          %v618 = vld [vmem:[%s518 + $0x80] sm:$0xff]
          %v619 = vld [vmem:[%s518 + $0x88] sm:$0xff]
          %v620 = vld [vmem:[%s518 + $0x90] sm:$0xff]
          %v621 = vld [vmem:[%s518 + $0x98] sm:$0xff]
          %v622 = vld [vmem:[%s518 + $0xa0] sm:$0xff]
          %v623 = vld [vmem:[%s518 + $0xa8] sm:$0xff]
          %v624 = vld [vmem:[%s518 + $0xb0] sm:$0xff]
          %v625 = vld [vmem:[%s518 + $0xb8] sm:$0xff]
          %v626 = vld [vmem:[%s518 + $0xc0] sm:$0xff]
          %v627 = vld [vmem:[%s518 + $0xc8] sm:$0xff]
          %v628 = vld [vmem:[%s518 + $0xd0] sm:$0xff]
          %v629 = vld [vmem:[%s518 + $0xd8] sm:$0xff]
          %v630 = vld [vmem:[%s518 + $0xe0] sm:$0xff]
          %v631 = vld [vmem:[%s518 + $0xe8] sm:$0xff]
          %v632 = vld [vmem:[%s518 + $0xf0] sm:$0xff]
          %v633 = vld [vmem:[%s518 + $0xf8] sm:$0xff]
          %v634 = vld [vmem:[%s518 + $0x100] sm:$0xff]
          %v635 = vld [vmem:[%s518 + $0x108] sm:$0xff]
          %v636 = vld [vmem:[%s518 + $0x110] sm:$0xff]
          %v637 = vld [vmem:[%s518 + $0x118] sm:$0xff]
          %v638 = vld [vmem:[%s518 + $0x120] sm:$0xff]
          %v639 = vld [vmem:[%s518 + $0x128] sm:$0xff]
          %v640 = vld [vmem:[%s518 + $0x130] sm:$0xff]
          %v641 = vld [vmem:[%s518 + $0x138] sm:$0xff]
          %v642 = vld [vmem:[%s518 + $0x140] sm:$0xff]
          %v643 = vld [vmem:[%s518 + $0x148] sm:$0xff]
          %v644 = vld [vmem:[%s518 + $0x150] sm:$0xff]
          %v645 = vld [vmem:[%s518 + $0x158] sm:$0xff]
          %v646 = vld [vmem:[%s518 + $0x160] sm:$0xff]
          %v647 = vld [vmem:[%s518 + $0x168] sm:$0xff]
          %v648 = vld [vmem:[%s518 + $0x170] sm:$0xff]
          %v649 = vld [vmem:[%s518 + $0x178] sm:$0xff]
          %v650 = vld [vmem:[%s518 + $0x180] sm:$0xff]
          %v651 = vld [vmem:[%s518 + $0x188] sm:$0xff]
          %v652 = vld [vmem:[%s518 + $0x190] sm:$0xff]
          %v653 = vld [vmem:[%s518 + $0x198] sm:$0xff]
          %v654 = vld [vmem:[%s518 + $0x1a0] sm:$0xff]
          %v655 = vld [vmem:[%s518 + $0x1a8] sm:$0xff]
          %v656 = vld [vmem:[%s518 + $0x1b0] sm:$0xff]
          %v657 = vld [vmem:[%s518 + $0x1b8] sm:$0xff]
          %v658 = vld [vmem:[%s518 + $0x1c0] sm:$0xff]
          %v659 = vld [vmem:[%s518 + $0x1c8] sm:$0xff]
          %v660 = vld [vmem:[%s518 + $0x1d0] sm:$0xff]
          %v661 = vld [vmem:[%s518 + $0x1d8] sm:$0xff]
          %v662 = vld [vmem:[%s518 + $0x1e0] sm:$0xff]
          %v663 = vld [vmem:[%s518 + $0x1e8] sm:$0xff]
          %v664 = vld [vmem:[%s518 + $0x1f0] sm:$0xff]
          %v665 = vld [vmem:[%s518 + $0x1f8] sm:$0xff]
          %v666 = vld [vmem:[%s7] sm:$0xff]
          %v667 = vld [vmem:[%s7 + $0x8] sm:$0xff]
          %v668 = vld [vmem:[%s7 + $0x10] sm:$0xff]
          %v669 = vld [vmem:[%s7 + $0x18] sm:$0xff]
          %v670 = vld [vmem:[%s7 + $0x20] sm:$0xff]
          %v671 = vld [vmem:[%s7 + $0x28] sm:$0xff]
          %v672 = vld [vmem:[%s7 + $0x30] sm:$0xff]
          %v673 = vld [vmem:[%s7 + $0x38] sm:$0xff]
          %v674 = vld [vmem:[%s7 + $0x40] sm:$0xff]
          %v675 = vld [vmem:[%s7 + $0x48] sm:$0xff]
          %v676 = vld [vmem:[%s7 + $0x50] sm:$0xff]
          %v677 = vld [vmem:[%s7 + $0x58] sm:$0xff]
          %v678 = vld [vmem:[%s7 + $0x60] sm:$0xff]
          %v679 = vld [vmem:[%s7 + $0x68] sm:$0xff]
          %v680 = vld [vmem:[%s7 + $0x70] sm:$0xff]
          %v681 = vld [vmem:[%s7 + $0x78] sm:$0xff]
          %v682 = vld [vmem:[%s7 + $0x80] sm:$0xff]
          %v683 = vld [vmem:[%s7 + $0x88] sm:$0xff]
          %v684 = vld [vmem:[%s7 + $0x90] sm:$0xff]
          %v685 = vld [vmem:[%s7 + $0x98] sm:$0xff]
          %v686 = vld [vmem:[%s7 + $0xa0] sm:$0xff]
          %v687 = vld [vmem:[%s7 + $0xa8] sm:$0xff]
          %v688 = vld [vmem:[%s7 + $0xb0] sm:$0xff]
          %v689 = vld [vmem:[%s7 + $0xb8] sm:$0xff]
          %v690 = vld [vmem:[%s7 + $0xc0] sm:$0xff]
          %v691 = vld [vmem:[%s7 + $0xc8] sm:$0xff]
          %v692 = vld [vmem:[%s7 + $0xd0] sm:$0xff]
          %v693 = vld [vmem:[%s7 + $0xd8] sm:$0xff]
          %v694 = vld [vmem:[%s7 + $0xe0] sm:$0xff]
          %v695 = vld [vmem:[%s7 + $0xe8] sm:$0xff]
          %v696 = vld [vmem:[%s7 + $0xf0] sm:$0xff]
          %v697 = vld [vmem:[%s7 + $0xf8] sm:$0xff]
          %v698 = vld [vmem:[%s7 + $0x100] sm:$0xff]
          %v699 = vld [vmem:[%s7 + $0x108] sm:$0xff]
          %v700 = vld [vmem:[%s7 + $0x110] sm:$0xff]
          %v701 = vld [vmem:[%s7 + $0x118] sm:$0xff]
          %v702 = vld [vmem:[%s7 + $0x120] sm:$0xff]
          %v703 = vld [vmem:[%s7 + $0x128] sm:$0xff]
          %v704 = vld [vmem:[%s7 + $0x130] sm:$0xff]
          %v705 = vld [vmem:[%s7 + $0x138] sm:$0xff]
          %v706 = vld [vmem:[%s7 + $0x140] sm:$0xff]
          %v707 = vld [vmem:[%s7 + $0x148] sm:$0xff]
          %v708 = vld [vmem:[%s7 + $0x150] sm:$0xff]
          %v709 = vld [vmem:[%s7 + $0x158] sm:$0xff]
          %v710 = vld [vmem:[%s7 + $0x160] sm:$0xff]
          %v711 = vld [vmem:[%s7 + $0x168] sm:$0xff]
          %v712 = vld [vmem:[%s7 + $0x170] sm:$0xff]
          %v713 = vld [vmem:[%s7 + $0x178] sm:$0xff]
          %v714 = vld [vmem:[%s7 + $0x180] sm:$0xff]
          %v715 = vld [vmem:[%s7 + $0x188] sm:$0xff]
          %v716 = vld [vmem:[%s7 + $0x190] sm:$0xff]
          %v717 = vld [vmem:[%s7 + $0x198] sm:$0xff]
          %v718 = vld [vmem:[%s7 + $0x1a0] sm:$0xff]
          %v719 = vld [vmem:[%s7 + $0x1a8] sm:$0xff]
          %v720 = vld [vmem:[%s7 + $0x1b0] sm:$0xff]
          %v721 = vld [vmem:[%s7 + $0x1b8] sm:$0xff]
          %v722 = vld [vmem:[%s7 + $0x1c0] sm:$0xff]
          %v723 = vld [vmem:[%s7 + $0x1c8] sm:$0xff]
          %v724 = vld [vmem:[%s7 + $0x1d0] sm:$0xff]
          %v725 = vld [vmem:[%s7 + $0x1d8] sm:$0xff]
          %v726 = vld [vmem:[%s7 + $0x1e0] sm:$0xff]
          %v727 = vld [vmem:[%s7 + $0x1e8] sm:$0xff]
          %v728 = vld [vmem:[%s7 + $0x1f0] sm:$0xff]
          %v729 = vld [vmem:[%s7 + $0x1f8] sm:$0xff]
          %730 = vmatprep.subr.mxu0 %v697
          %731 = vmatpush1.msra.mxu0 %v696
          %732 = vmatprep.subr.mxu0 %v695
          %733 = vmatpush1.msra.mxu0 %v694
          %734 = vmatprep.subr.mxu0 %v693
          %735 = vmatpush1.msra.mxu0 %v692
          %736 = vmatprep.subr.mxu0 %v691
          %737 = vmatpush1.msra.mxu0 %v690
          %738 = vmatprep.subr.mxu0 %v689
          %739 = vmatpush1.msra.mxu0 %v688
          %740 = vmatprep.subr.mxu0 %v687
          %741 = vmatpush1.msra.mxu0 %v686
          %742 = vmatprep.subr.mxu0 %v685
          %743 = vmatpush1.msra.mxu0 %v684
          %744 = vmatprep.subr.mxu0 %v683
          %745 = vmatpush1.msra.mxu0 %v682
          %746 = vmatprep.subr.mxu0 %v681
          %747 = vmatpush1.msra.mxu0 %v680
          %748 = vmatprep.subr.mxu0 %v679
          %749 = vmatpush1.msra.mxu0 %v678
          %750 = vmatprep.subr.mxu0 %v677
          %751 = vmatpush1.msra.mxu0 %v676
          %752 = vmatprep.subr.mxu0 %v675
          %753 = vmatpush1.msra.mxu0 %v674
          %754 = vmatprep.subr.mxu0 %v673
          %755 = vmatpush1.msra.mxu0 %v672
          %756 = vmatprep.subr.mxu0 %v671
          %757 = vmatpush1.msra.mxu0 %v670
          %758 = vmatprep.subr.mxu0 %v669
          %759 = vmatpush1.msra.mxu0 %v668
          %760 = vmatprep.subr.mxu0 %v667
          %761 = vmatpush1.msra.mxu0 %v666
          %762 = vmatprep.subr.mxu0 %v729
          %763 = vmatpush2.msra.mxu0 %v728
          %764 = vmatprep.subr.mxu0 %v727
          %765 = vmatpush2.msra.mxu0 %v726
          %766 = vmatprep.subr.mxu0 %v725
          %767 = vmatpush2.msra.mxu0 %v724
          %768 = vmatprep.subr.mxu0 %v723
          %769 = vmatpush2.msra.mxu0 %v722
          %770 = vmatprep.subr.mxu0 %v721
          %771 = vmatpush2.msra.mxu0 %v720
          %772 = vmatprep.subr.mxu0 %v719
          %773 = vmatpush2.msra.mxu0 %v718
          %774 = vmatprep.subr.mxu0 %v717
          %775 = vmatpush2.msra.mxu0 %v716
          %776 = vmatprep.subr.mxu0 %v715
          %777 = vmatpush2.msra.mxu0 %v714
          %778 = vmatprep.subr.mxu0 %v713
          %779 = vmatpush2.msra.mxu0 %v712
          %780 = vmatprep.subr.mxu0 %v711
          %781 = vmatpush2.msra.mxu0 %v710
          %782 = vmatprep.subr.mxu0 %v709
          %783 = vmatpush2.msra.mxu0 %v708
          %784 = vmatprep.subr.mxu0 %v707
          %785 = vmatpush2.msra.mxu0 %v706
          %786 = vmatprep.subr.mxu0 %v705
          %787 = vmatpush2.msra.mxu0 %v704
          %788 = vmatprep.subr.mxu0 %v703
          %789 = vmatpush2.msra.mxu0 %v702
          %790 = vmatprep.subr.mxu0 %v701
          %791 = vmatpush2.msra.mxu0 %v700
          %792 = vmatprep.subr.mxu0 %v699
          %793 = vmatpush2.msra.mxu0 %v698
          %794 = vmatprep.mubr.f32.mxu0 %v603
          %795 = vmatmul.mubr.f32.gmra.mxu0 %v602
          %v796 = vpop.f32.mrf.mxu0
          %v797 = vadd.f32 0.0, %v796
          %v798 = vpop.f32.mrf.mxu0
          %v799 = vadd.f32 0.0, %v798
          %800 = vmatprep.mubr.f32.mxu0 %v605
          %801 = vmatmul.mubr.f32.gmra.mxu0 %v604
          %v802 = vpop.f32.mrf.mxu0
          %v803 = vadd.f32 0.0, %v802
          %v804 = vpop.f32.mrf.mxu0
          %v805 = vadd.f32 0.0, %v804
          %806 = vmatprep.mubr.f32.mxu0 %v607
          %807 = vmatmul.mubr.f32.gmra.mxu0 %v606
          %v808 = vpop.f32.mrf.mxu0
          %v809 = vadd.f32 0.0, %v808
          %v810 = vpop.f32.mrf.mxu0
          %v811 = vadd.f32 0.0, %v810
          %812 = vmatprep.mubr.f32.mxu0 %v609
          %813 = vmatmul.mubr.f32.gmra.mxu0 %v608
          %v814 = vpop.f32.mrf.mxu0
          %v815 = vadd.f32 0.0, %v814
          %v816 = vpop.f32.mrf.mxu0
          %v817 = vadd.f32 0.0, %v816
          %818 = vmatprep.mubr.f32.mxu0 %v611
          %819 = vmatmul.mubr.f32.gmra.mxu0 %v610
          %v820 = vpop.f32.mrf.mxu0
          %v821 = vadd.f32 0.0, %v820
          %v822 = vpop.f32.mrf.mxu0
          %v823 = vadd.f32 0.0, %v822
          %824 = vmatprep.mubr.f32.mxu0 %v613
          %825 = vmatmul.mubr.f32.gmra.mxu0 %v612
          %v826 = vpop.f32.mrf.mxu0
          %v827 = vadd.f32 0.0, %v826
          %v828 = vpop.f32.mrf.mxu0
          %v829 = vadd.f32 0.0, %v828
          %830 = vmatprep.mubr.f32.mxu0 %v615
          %831 = vmatmul.mubr.f32.gmra.mxu0 %v614
          %v832 = vpop.f32.mrf.mxu0
          %v833 = vadd.f32 0.0, %v832
          %v834 = vpop.f32.mrf.mxu0
          %v835 = vadd.f32 0.0, %v834
          %836 = vmatprep.mubr.f32.mxu0 %v617
          %837 = vmatmul.mubr.f32.gmra.mxu0 %v616
          %v838 = vpop.f32.mrf.mxu0
          %v839 = vadd.f32 0.0, %v838
          %v840 = vpop.f32.mrf.mxu0
          %v841 = vadd.f32 0.0, %v840
          %842 = vmatprep.mubr.f32.mxu0 %v619
          %843 = vmatmul.mubr.f32.gmra.mxu0 %v618
          %v844 = vpop.f32.mrf.mxu0
          %v845 = vadd.f32 0.0, %v844
          %v846 = vpop.f32.mrf.mxu0
          %v847 = vadd.f32 0.0, %v846
          %848 = vmatprep.mubr.f32.mxu0 %v621
          %849 = vmatmul.mubr.f32.gmra.mxu0 %v620
          %v850 = vpop.f32.mrf.mxu0
          %v851 = vadd.f32 0.0, %v850
          %v852 = vpop.f32.mrf.mxu0
          %v853 = vadd.f32 0.0, %v852
          %854 = vmatprep.mubr.f32.mxu0 %v623
          %855 = vmatmul.mubr.f32.gmra.mxu0 %v622
          %v856 = vpop.f32.mrf.mxu0
          %v857 = vadd.f32 0.0, %v856
          %v858 = vpop.f32.mrf.mxu0
          %v859 = vadd.f32 0.0, %v858
          %860 = vmatprep.mubr.f32.mxu0 %v625
          %861 = vmatmul.mubr.f32.gmra.mxu0 %v624
          %v862 = vpop.f32.mrf.mxu0
          %v863 = vadd.f32 0.0, %v862
          %v864 = vpop.f32.mrf.mxu0
          %v865 = vadd.f32 0.0, %v864
          %866 = vmatprep.mubr.f32.mxu0 %v627
          %867 = vmatmul.mubr.f32.gmra.mxu0 %v626
          %v868 = vpop.f32.mrf.mxu0
          %v869 = vadd.f32 0.0, %v868
          %v870 = vpop.f32.mrf.mxu0
          %v871 = vadd.f32 0.0, %v870
          %872 = vmatprep.mubr.f32.mxu0 %v629
          %873 = vmatmul.mubr.f32.gmra.mxu0 %v628
          %v874 = vpop.f32.mrf.mxu0
          %v875 = vadd.f32 0.0, %v874
          %v876 = vpop.f32.mrf.mxu0
          %v877 = vadd.f32 0.0, %v876
          %878 = vmatprep.mubr.f32.mxu0 %v631
          %879 = vmatmul.mubr.f32.gmra.mxu0 %v630
          %v880 = vpop.f32.mrf.mxu0
          %v881 = vadd.f32 0.0, %v880
          %v882 = vpop.f32.mrf.mxu0
          %v883 = vadd.f32 0.0, %v882
          %884 = vmatprep.mubr.f32.mxu0 %v633
          %885 = vmatmul.mubr.f32.gmra.mxu0 %v632
          %v886 = vpop.f32.mrf.mxu0
          %v887 = vadd.f32 0.0, %v886
          %v888 = vpop.f32.mrf.mxu0
          %v889 = vadd.f32 0.0, %v888
          %890 = vmatprep.mubr.f32.mxu0 %v635
          %891 = vmatmul.mubr.f32.gmra.mxu0 %v634
          %v892 = vpop.f32.mrf.mxu0
          %v893 = vadd.f32 0.0, %v892
          %v894 = vpop.f32.mrf.mxu0
          %v895 = vadd.f32 0.0, %v894
          %896 = vmatprep.mubr.f32.mxu0 %v637
          %897 = vmatmul.mubr.f32.gmra.mxu0 %v636
          %v898 = vpop.f32.mrf.mxu0
          %v899 = vadd.f32 0.0, %v898
          %v900 = vpop.f32.mrf.mxu0
          %v901 = vadd.f32 0.0, %v900
          %902 = vmatprep.mubr.f32.mxu0 %v639
          %903 = vmatmul.mubr.f32.gmra.mxu0 %v638
          %v904 = vpop.f32.mrf.mxu0
          %v905 = vadd.f32 0.0, %v904
          %v906 = vpop.f32.mrf.mxu0
          %v907 = vadd.f32 0.0, %v906
          %908 = vmatprep.mubr.f32.mxu0 %v641
          %909 = vmatmul.mubr.f32.gmra.mxu0 %v640
          %v910 = vpop.f32.mrf.mxu0
          %v911 = vadd.f32 0.0, %v910
          %v912 = vpop.f32.mrf.mxu0
          %v913 = vadd.f32 0.0, %v912
          %914 = vmatprep.mubr.f32.mxu0 %v643
          %915 = vmatmul.mubr.f32.gmra.mxu0 %v642
          %v916 = vpop.f32.mrf.mxu0
          %v917 = vadd.f32 0.0, %v916
          %v918 = vpop.f32.mrf.mxu0
          %v919 = vadd.f32 0.0, %v918
          %920 = vmatprep.mubr.f32.mxu0 %v645
          %921 = vmatmul.mubr.f32.gmra.mxu0 %v644
          %v922 = vpop.f32.mrf.mxu0
          %v923 = vadd.f32 0.0, %v922
          %v924 = vpop.f32.mrf.mxu0
          %v925 = vadd.f32 0.0, %v924
          %926 = vmatprep.mubr.f32.mxu0 %v647
          %927 = vmatmul.mubr.f32.gmra.mxu0 %v646
          %v928 = vpop.f32.mrf.mxu0
          %v929 = vadd.f32 0.0, %v928
          %v930 = vpop.f32.mrf.mxu0
          %v931 = vadd.f32 0.0, %v930
          %932 = vmatprep.mubr.f32.mxu0 %v649
          %933 = vmatmul.mubr.f32.gmra.mxu0 %v648
          %v934 = vpop.f32.mrf.mxu0
          %v935 = vadd.f32 0.0, %v934
          %v936 = vpop.f32.mrf.mxu0
          %v937 = vadd.f32 0.0, %v936
          %938 = vmatprep.mubr.f32.mxu0 %v651
          %939 = vmatmul.mubr.f32.gmra.mxu0 %v650
          %v940 = vpop.f32.mrf.mxu0
          %v941 = vadd.f32 0.0, %v940
          %v942 = vpop.f32.mrf.mxu0
          %v943 = vadd.f32 0.0, %v942
          %944 = vmatprep.mubr.f32.mxu0 %v653
          %945 = vmatmul.mubr.f32.gmra.mxu0 %v652
          %v946 = vpop.f32.mrf.mxu0
          %v947 = vadd.f32 0.0, %v946
          %v948 = vpop.f32.mrf.mxu0
          %v949 = vadd.f32 0.0, %v948
          %950 = vmatprep.mubr.f32.mxu0 %v655
          %951 = vmatmul.mubr.f32.gmra.mxu0 %v654
          %v952 = vpop.f32.mrf.mxu0
          %v953 = vadd.f32 0.0, %v952
          %v954 = vpop.f32.mrf.mxu0
          %v955 = vadd.f32 0.0, %v954
          %956 = vmatprep.mubr.f32.mxu0 %v657
          %957 = vmatmul.mubr.f32.gmra.mxu0 %v656
          %v958 = vpop.f32.mrf.mxu0
          %v959 = vadd.f32 0.0, %v958
          %v960 = vpop.f32.mrf.mxu0
          %v961 = vadd.f32 0.0, %v960
          %962 = vmatprep.mubr.f32.mxu0 %v659
          %963 = vmatmul.mubr.f32.gmra.mxu0 %v658
          %v964 = vpop.f32.mrf.mxu0
          %v965 = vadd.f32 0.0, %v964
          %v966 = vpop.f32.mrf.mxu0
          %v967 = vadd.f32 0.0, %v966
          %968 = vmatprep.mubr.f32.mxu0 %v661
          %969 = vmatmul.mubr.f32.gmra.mxu0 %v660
          %v970 = vpop.f32.mrf.mxu0
          %v971 = vadd.f32 0.0, %v970
          %v972 = vpop.f32.mrf.mxu0
          %v973 = vadd.f32 0.0, %v972
          %974 = vmatprep.mubr.f32.mxu0 %v663
          %975 = vmatmul.mubr.f32.gmra.mxu0 %v662
          %v976 = vpop.f32.mrf.mxu0
          %v977 = vadd.f32 0.0, %v976
          %v978 = vpop.f32.mrf.mxu0
          %v979 = vadd.f32 0.0, %v978
          %980 = vmatprep.mubr.f32.mxu0 %v665
          %981 = vmatmul.mubr.f32.gmra.mxu0 %v664
          %v982 = vpop.f32.mrf.mxu0
          %v983 = vadd.f32 0.0, %v982
          %v984 = vpop.f32.mrf.mxu0
          %v985 = vadd.f32 0.0, %v984
          %986 = vdwg.mxu0
          %987 = vmatprep.subr.mxu0 %v569
          %988 = vmatpush1.msra.mxu0 %v568
          %989 = vmatprep.subr.mxu0 %v567
          %990 = vmatpush1.msra.mxu0 %v566
          %991 = vmatprep.subr.mxu0 %v565
          %992 = vmatpush1.msra.mxu0 %v564
          %993 = vmatprep.subr.mxu0 %v563
          %994 = vmatpush1.msra.mxu0 %v562
          %995 = vmatprep.subr.mxu0 %v561
          %996 = vmatpush1.msra.mxu0 %v560
          %997 = vmatprep.subr.mxu0 %v559
          %998 = vmatpush1.msra.mxu0 %v558
          %999 = vmatprep.subr.mxu0 %v557
          %1000 = vmatpush1.msra.mxu0 %v556
          %1001 = vmatprep.subr.mxu0 %v555
          %1002 = vmatpush1.msra.mxu0 %v554
          %1003 = vmatprep.subr.mxu0 %v553
          %1004 = vmatpush1.msra.mxu0 %v552
          %1005 = vmatprep.subr.mxu0 %v551
          %1006 = vmatpush1.msra.mxu0 %v550
          %1007 = vmatprep.subr.mxu0 %v549
          %1008 = vmatpush1.msra.mxu0 %v548
          %1009 = vmatprep.subr.mxu0 %v547
          %1010 = vmatpush1.msra.mxu0 %v546
          %1011 = vmatprep.subr.mxu0 %v545
          %1012 = vmatpush1.msra.mxu0 %v544
          %1013 = vmatprep.subr.mxu0 %v543
          %1014 = vmatpush1.msra.mxu0 %v542
          %1015 = vmatprep.subr.mxu0 %v541
          %1016 = vmatpush1.msra.mxu0 %v540
          %1017 = vmatprep.subr.mxu0 %v539
          %1018 = vmatpush1.msra.mxu0 %v538
          %1019 = vmatprep.subr.mxu0 %v601
          %1020 = vmatpush2.msra.mxu0 %v600
          %1021 = vmatprep.subr.mxu0 %v599
          %1022 = vmatpush2.msra.mxu0 %v598
          %1023 = vmatprep.subr.mxu0 %v597
          %1024 = vmatpush2.msra.mxu0 %v596
          %1025 = vmatprep.subr.mxu0 %v595
          %1026 = vmatpush2.msra.mxu0 %v594
          %1027 = vmatprep.subr.mxu0 %v593
          %1028 = vmatpush2.msra.mxu0 %v592
          %1029 = vmatprep.subr.mxu0 %v591
          %1030 = vmatpush2.msra.mxu0 %v590
          %1031 = vmatprep.subr.mxu0 %v589
          %1032 = vmatpush2.msra.mxu0 %v588
          %1033 = vmatprep.subr.mxu0 %v587
          %1034 = vmatpush2.msra.mxu0 %v586
          %1035 = vmatprep.subr.mxu0 %v585
          %1036 = vmatpush2.msra.mxu0 %v584
          %1037 = vmatprep.subr.mxu0 %v583
          %1038 = vmatpush2.msra.mxu0 %v582
          %1039 = vmatprep.subr.mxu0 %v581
          %1040 = vmatpush2.msra.mxu0 %v580
          %1041 = vmatprep.subr.mxu0 %v579
          %1042 = vmatpush2.msra.mxu0 %v578
          %1043 = vmatprep.subr.mxu0 %v577
          %1044 = vmatpush2.msra.mxu0 %v576
          %1045 = vmatprep.subr.mxu0 %v575
          %1046 = vmatpush2.msra.mxu0 %v574
          %1047 = vmatprep.subr.mxu0 %v573
          %1048 = vmatpush2.msra.mxu0 %v572
          %1049 = vmatprep.subr.mxu0 %v571
          %1050 = vmatpush2.msra.mxu0 %v570
          %1051 = vmatprep.mubr.f32.mxu0 %v799
          %1052 = vmatmul.mubr.f32.gmra.mxu0 %v797
          %v1053 = vpop.f32.mrf.mxu0
          %v1054 = vadd.f32 0.0, %v1053
          %v1055 = vpop.f32.mrf.mxu0
          %v1056 = vadd.f32 0.0, %v1055
          %1057 = vmatprep.mubr.f32.mxu0 %v805
          %1058 = vmatmul.mubr.f32.gmra.mxu0 %v803
          %v1059 = vpop.f32.mrf.mxu0
          %v1060 = vadd.f32 0.0, %v1059
          %v1061 = vpop.f32.mrf.mxu0
          %v1062 = vadd.f32 0.0, %v1061
          %1063 = vmatprep.mubr.f32.mxu0 %v811
          %1064 = vmatmul.mubr.f32.gmra.mxu0 %v809
          %v1065 = vpop.f32.mrf.mxu0
          %v1066 = vadd.f32 0.0, %v1065
          %v1067 = vpop.f32.mrf.mxu0
          %v1068 = vadd.f32 0.0, %v1067
          %1069 = vmatprep.mubr.f32.mxu0 %v817
          %1070 = vmatmul.mubr.f32.gmra.mxu0 %v815
          %v1071 = vpop.f32.mrf.mxu0
          %v1072 = vadd.f32 0.0, %v1071
          %v1073 = vpop.f32.mrf.mxu0
          %v1074 = vadd.f32 0.0, %v1073
          %1075 = vmatprep.mubr.f32.mxu0 %v823
          %1076 = vmatmul.mubr.f32.gmra.mxu0 %v821
          %v1077 = vpop.f32.mrf.mxu0
          %v1078 = vadd.f32 0.0, %v1077
          %v1079 = vpop.f32.mrf.mxu0
          %v1080 = vadd.f32 0.0, %v1079
          %1081 = vmatprep.mubr.f32.mxu0 %v829
          %1082 = vmatmul.mubr.f32.gmra.mxu0 %v827
          %v1083 = vpop.f32.mrf.mxu0
          %v1084 = vadd.f32 0.0, %v1083
          %v1085 = vpop.f32.mrf.mxu0
          %v1086 = vadd.f32 0.0, %v1085
          %1087 = vmatprep.mubr.f32.mxu0 %v835
          %1088 = vmatmul.mubr.f32.gmra.mxu0 %v833
          %v1089 = vpop.f32.mrf.mxu0
          %v1090 = vadd.f32 0.0, %v1089
          %v1091 = vpop.f32.mrf.mxu0
          %v1092 = vadd.f32 0.0, %v1091
          %1093 = vmatprep.mubr.f32.mxu0 %v841
          %1094 = vmatmul.mubr.f32.gmra.mxu0 %v839
          %v1095 = vpop.f32.mrf.mxu0
          %v1096 = vadd.f32 0.0, %v1095
          %v1097 = vpop.f32.mrf.mxu0
          %v1098 = vadd.f32 0.0, %v1097
          %1099 = vmatprep.mubr.f32.mxu0 %v847
          %1100 = vmatmul.mubr.f32.gmra.mxu0 %v845
          %v1101 = vpop.f32.mrf.mxu0
          %v1102 = vadd.f32 0.0, %v1101
          %v1103 = vpop.f32.mrf.mxu0
          %v1104 = vadd.f32 0.0, %v1103
          %1105 = vmatprep.mubr.f32.mxu0 %v853
          %1106 = vmatmul.mubr.f32.gmra.mxu0 %v851
          %v1107 = vpop.f32.mrf.mxu0
          %v1108 = vadd.f32 0.0, %v1107
          %v1109 = vpop.f32.mrf.mxu0
          %v1110 = vadd.f32 0.0, %v1109
          %1111 = vmatprep.mubr.f32.mxu0 %v859
          %1112 = vmatmul.mubr.f32.gmra.mxu0 %v857
          %v1113 = vpop.f32.mrf.mxu0
          %v1114 = vadd.f32 0.0, %v1113
          %v1115 = vpop.f32.mrf.mxu0
          %v1116 = vadd.f32 0.0, %v1115
          %1117 = vmatprep.mubr.f32.mxu0 %v865
          %1118 = vmatmul.mubr.f32.gmra.mxu0 %v863
          %v1119 = vpop.f32.mrf.mxu0
          %v1120 = vadd.f32 0.0, %v1119
          %v1121 = vpop.f32.mrf.mxu0
          %v1122 = vadd.f32 0.0, %v1121
          %1123 = vmatprep.mubr.f32.mxu0 %v871
          %1124 = vmatmul.mubr.f32.gmra.mxu0 %v869
          %v1125 = vpop.f32.mrf.mxu0
          %v1126 = vadd.f32 0.0, %v1125
          %v1127 = vpop.f32.mrf.mxu0
          %v1128 = vadd.f32 0.0, %v1127
          %1129 = vmatprep.mubr.f32.mxu0 %v877
          %1130 = vmatmul.mubr.f32.gmra.mxu0 %v875
          %v1131 = vpop.f32.mrf.mxu0
          %v1132 = vadd.f32 0.0, %v1131
          %v1133 = vpop.f32.mrf.mxu0
          %v1134 = vadd.f32 0.0, %v1133
          %1135 = vmatprep.mubr.f32.mxu0 %v883
          %1136 = vmatmul.mubr.f32.gmra.mxu0 %v881
          %v1137 = vpop.f32.mrf.mxu0
          %v1138 = vadd.f32 0.0, %v1137
          %v1139 = vpop.f32.mrf.mxu0
          %v1140 = vadd.f32 0.0, %v1139
          %1141 = vmatprep.mubr.f32.mxu0 %v889
          %1142 = vmatmul.mubr.f32.gmra.mxu0 %v887
          %v1143 = vpop.f32.mrf.mxu0
          %v1144 = vadd.f32 0.0, %v1143
          %v1145 = vpop.f32.mrf.mxu0
          %v1146 = vadd.f32 0.0, %v1145
          %1147 = vmatprep.mubr.f32.mxu0 %v895
          %1148 = vmatmul.mubr.f32.gmra.mxu0 %v893
          %v1149 = vpop.f32.mrf.mxu0
          %v1150 = vadd.f32 0.0, %v1149
          %v1151 = vpop.f32.mrf.mxu0
          %v1152 = vadd.f32 0.0, %v1151
          %1153 = vmatprep.mubr.f32.mxu0 %v901
          %1154 = vmatmul.mubr.f32.gmra.mxu0 %v899
          %v1155 = vpop.f32.mrf.mxu0
          %v1156 = vadd.f32 0.0, %v1155
          %v1157 = vpop.f32.mrf.mxu0
          %v1158 = vadd.f32 0.0, %v1157
          %1159 = vmatprep.mubr.f32.mxu0 %v907
          %1160 = vmatmul.mubr.f32.gmra.mxu0 %v905
          %v1161 = vpop.f32.mrf.mxu0
          %v1162 = vadd.f32 0.0, %v1161
          %v1163 = vpop.f32.mrf.mxu0
          %v1164 = vadd.f32 0.0, %v1163
          %1165 = vmatprep.mubr.f32.mxu0 %v913
          %1166 = vmatmul.mubr.f32.gmra.mxu0 %v911
          %v1167 = vpop.f32.mrf.mxu0
          %v1168 = vadd.f32 0.0, %v1167
          %v1169 = vpop.f32.mrf.mxu0
          %v1170 = vadd.f32 0.0, %v1169
          %1171 = vmatprep.mubr.f32.mxu0 %v919
          %1172 = vmatmul.mubr.f32.gmra.mxu0 %v917
          %v1173 = vpop.f32.mrf.mxu0
          %v1174 = vadd.f32 0.0, %v1173
          %v1175 = vpop.f32.mrf.mxu0
          %v1176 = vadd.f32 0.0, %v1175
          %1177 = vmatprep.mubr.f32.mxu0 %v925
          %1178 = vmatmul.mubr.f32.gmra.mxu0 %v923
          %v1179 = vpop.f32.mrf.mxu0
          %v1180 = vadd.f32 0.0, %v1179
          %v1181 = vpop.f32.mrf.mxu0
          %v1182 = vadd.f32 0.0, %v1181
          %1183 = vmatprep.mubr.f32.mxu0 %v931
          %1184 = vmatmul.mubr.f32.gmra.mxu0 %v929
          %v1185 = vpop.f32.mrf.mxu0
          %v1186 = vadd.f32 0.0, %v1185
          %v1187 = vpop.f32.mrf.mxu0
          %v1188 = vadd.f32 0.0, %v1187
          %1189 = vmatprep.mubr.f32.mxu0 %v937
          %1190 = vmatmul.mubr.f32.gmra.mxu0 %v935
          %v1191 = vpop.f32.mrf.mxu0
          %v1192 = vadd.f32 0.0, %v1191
          %v1193 = vpop.f32.mrf.mxu0
          %v1194 = vadd.f32 0.0, %v1193
          %1195 = vmatprep.mubr.f32.mxu0 %v943
          %1196 = vmatmul.mubr.f32.gmra.mxu0 %v941
          %v1197 = vpop.f32.mrf.mxu0
          %v1198 = vadd.f32 0.0, %v1197
          %v1199 = vpop.f32.mrf.mxu0
          %v1200 = vadd.f32 0.0, %v1199
          %1201 = vmatprep.mubr.f32.mxu0 %v949
          %1202 = vmatmul.mubr.f32.gmra.mxu0 %v947
          %v1203 = vpop.f32.mrf.mxu0
          %v1204 = vadd.f32 0.0, %v1203
          %v1205 = vpop.f32.mrf.mxu0
          %v1206 = vadd.f32 0.0, %v1205
          %1207 = vmatprep.mubr.f32.mxu0 %v955
          %1208 = vmatmul.mubr.f32.gmra.mxu0 %v953
          %v1209 = vpop.f32.mrf.mxu0
          %v1210 = vadd.f32 0.0, %v1209
          %v1211 = vpop.f32.mrf.mxu0
          %v1212 = vadd.f32 0.0, %v1211
          %1213 = vmatprep.mubr.f32.mxu0 %v961
          %1214 = vmatmul.mubr.f32.gmra.mxu0 %v959
          %v1215 = vpop.f32.mrf.mxu0
          %v1216 = vadd.f32 0.0, %v1215
          %v1217 = vpop.f32.mrf.mxu0
          %v1218 = vadd.f32 0.0, %v1217
          %1219 = vmatprep.mubr.f32.mxu0 %v967
          %1220 = vmatmul.mubr.f32.gmra.mxu0 %v965
          %v1221 = vpop.f32.mrf.mxu0
          %v1222 = vadd.f32 0.0, %v1221
          %v1223 = vpop.f32.mrf.mxu0
          %v1224 = vadd.f32 0.0, %v1223
          %1225 = vmatprep.mubr.f32.mxu0 %v973
          %1226 = vmatmul.mubr.f32.gmra.mxu0 %v971
          %v1227 = vpop.f32.mrf.mxu0
          %v1228 = vadd.f32 0.0, %v1227
          %v1229 = vpop.f32.mrf.mxu0
          %v1230 = vadd.f32 0.0, %v1229
          %1231 = vmatprep.mubr.f32.mxu0 %v979
          %1232 = vmatmul.mubr.f32.gmra.mxu0 %v977
          %v1233 = vpop.f32.mrf.mxu0
          %v1234 = vadd.f32 0.0, %v1233
          %v1235 = vpop.f32.mrf.mxu0
          %v1236 = vadd.f32 0.0, %v1235
          %1237 = vmatprep.mubr.f32.mxu0 %v985
          %1238 = vmatmul.mubr.f32.gmra.mxu0 %v983
          %v1239 = vpop.f32.mrf.mxu0
          %v1240 = vadd.f32 0.0, %v1239
          %v1241 = vpop.f32.mrf.mxu0
          %v1242 = vadd.f32 0.0, %v1241
          %1243 = vdwg.mxu0
          %1244 = vst [vmem:[#allocation4] sm:$0xff] %v1054
          %1245 = vst [vmem:[#allocation4 + $0x8] sm:$0xff] %v1056
          %1246 = vst [vmem:[#allocation4 + $0x10] sm:$0xff] %v1060
          %1247 = vst [vmem:[#allocation4 + $0x18] sm:$0xff] %v1062
          %1248 = vst [vmem:[#allocation4 + $0x20] sm:$0xff] %v1066
          %1249 = vst [vmem:[#allocation4 + $0x28] sm:$0xff] %v1068
          %1250 = vst [vmem:[#allocation4 + $0x30] sm:$0xff] %v1072
          %1251 = vst [vmem:[#allocation4 + $0x38] sm:$0xff] %v1074
          %1252 = vst [vmem:[#allocation4 + $0x40] sm:$0xff] %v1078
          %1253 = vst [vmem:[#allocation4 + $0x48] sm:$0xff] %v1080
          %1254 = vst [vmem:[#allocation4 + $0x50] sm:$0xff] %v1084
          %1255 = vst [vmem:[#allocation4 + $0x58] sm:$0xff] %v1086
          %1256 = vst [vmem:[#allocation4 + $0x60] sm:$0xff] %v1090
          %1257 = vst [vmem:[#allocation4 + $0x68] sm:$0xff] %v1092
          %1258 = vst [vmem:[#allocation4 + $0x70] sm:$0xff] %v1096
          %1259 = vst [vmem:[#allocation4 + $0x78] sm:$0xff] %v1098
          %1260 = vst [vmem:[#allocation4 + $0x80] sm:$0xff] %v1102
          %1261 = vst [vmem:[#allocation4 + $0x88] sm:$0xff] %v1104
          %1262 = vst [vmem:[#allocation4 + $0x90] sm:$0xff] %v1108
          %1263 = vst [vmem:[#allocation4 + $0x98] sm:$0xff] %v1110
          %1264 = vst [vmem:[#allocation4 + $0xa0] sm:$0xff] %v1114
          %1265 = vst [vmem:[#allocation4 + $0xa8] sm:$0xff] %v1116
          %1266 = vst [vmem:[#allocation4 + $0xb0] sm:$0xff] %v1120
          %1267 = vst [vmem:[#allocation4 + $0xb8] sm:$0xff] %v1122
          %1268 = vst [vmem:[#allocation4 + $0xc0] sm:$0xff] %v1126
          %1269 = vst [vmem:[#allocation4 + $0xc8] sm:$0xff] %v1128
          %1270 = vst [vmem:[#allocation4 + $0xd0] sm:$0xff] %v1132
          %1271 = vst [vmem:[#allocation4 + $0xd8] sm:$0xff] %v1134
          %1272 = vst [vmem:[#allocation4 + $0xe0] sm:$0xff] %v1138
          %1273 = vst [vmem:[#allocation4 + $0xe8] sm:$0xff] %v1140
          %1274 = vst [vmem:[#allocation4 + $0xf0] sm:$0xff] %v1144
          %1275 = vst [vmem:[#allocation4 + $0xf8] sm:$0xff] %v1146
          %1276 = vst [vmem:[#allocation4 + $0x100] sm:$0xff] %v1150
          %1277 = vst [vmem:[#allocation4 + $0x108] sm:$0xff] %v1152
          %1278 = vst [vmem:[#allocation4 + $0x110] sm:$0xff] %v1156
          %1279 = vst [vmem:[#allocation4 + $0x118] sm:$0xff] %v1158
          %1280 = vst [vmem:[#allocation4 + $0x120] sm:$0xff] %v1162
          %1281 = vst [vmem:[#allocation4 + $0x128] sm:$0xff] %v1164
          %1282 = vst [vmem:[#allocation4 + $0x130] sm:$0xff] %v1168
          %1283 = vst [vmem:[#allocation4 + $0x138] sm:$0xff] %v1170
          %1284 = vst [vmem:[#allocation4 + $0x140] sm:$0xff] %v1174
          %1285 = vst [vmem:[#allocation4 + $0x148] sm:$0xff] %v1176
          %1286 = vst [vmem:[#allocation4 + $0x150] sm:$0xff] %v1180
          %1287 = vst [vmem:[#allocation4 + $0x158] sm:$0xff] %v1182
          %1288 = vst [vmem:[#allocation4 + $0x160] sm:$0xff] %v1186
          %1289 = vst [vmem:[#allocation4 + $0x168] sm:$0xff] %v1188
          %1290 = vst [vmem:[#allocation4 + $0x170] sm:$0xff] %v1192
          %1291 = vst [vmem:[#allocation4 + $0x178] sm:$0xff] %v1194
          %1292 = vst [vmem:[#allocation4 + $0x180] sm:$0xff] %v1198
          %1293 = vst [vmem:[#allocation4 + $0x188] sm:$0xff] %v1200
          %1294 = vst [vmem:[#allocation4 + $0x190] sm:$0xff] %v1204
          %1295 = vst [vmem:[#allocation4 + $0x198] sm:$0xff] %v1206
          %1296 = vst [vmem:[#allocation4 + $0x1a0] sm:$0xff] %v1210
          %1297 = vst [vmem:[#allocation4 + $0x1a8] sm:$0xff] %v1212
          %1298 = vst [vmem:[#allocation4 + $0x1b0] sm:$0xff] %v1216
          %1299 = vst [vmem:[#allocation4 + $0x1b8] sm:$0xff] %v1218
          %1300 = vst [vmem:[#allocation4 + $0x1c0] sm:$0xff] %v1222
          %1301 = vst [vmem:[#allocation4 + $0x1c8] sm:$0xff] %v1224
          %1302 = vst [vmem:[#allocation4 + $0x1d0] sm:$0xff] %v1228
          %1303 = vst [vmem:[#allocation4 + $0x1d8] sm:$0xff] %v1230
          %1304 = vst [vmem:[#allocation4 + $0x1e0] sm:$0xff] %v1234
          %1305 = vst [vmem:[#allocation4 + $0x1e8] sm:$0xff] %v1236
          %1306 = vst [vmem:[#allocation4 + $0x1f0] sm:$0xff] %v1240
          %1307 = vst [vmem:[#allocation4 + $0x1f8] sm:$0xff] %v1242
          %v1308 = vld [vmem:[%s504] sm:$0xf]
          %v1309 = vld [vmem:[%s8] sm:$0xff]
          %v1310 = vld [vmem:[%s8 + $0x8] sm:$0xff]
          %v1311 = vld [vmem:[%s8 + $0x10] sm:$0xff]
          %v1312 = vld [vmem:[%s8 + $0x18] sm:$0xff]
          %v1313 = vld [vmem:[%s8 + $0x20] sm:$0xff]
          %v1314 = vld [vmem:[%s8 + $0x28] sm:$0xff]
          %v1315 = vld [vmem:[%s8 + $0x30] sm:$0xff]
          %v1316 = vld [vmem:[%s8 + $0x38] sm:$0xff]
          %v1317 = vld [vmem:[%s8 + $0x40] sm:$0xff]
          %v1318 = vld [vmem:[%s8 + $0x48] sm:$0xff]
          %v1319 = vld [vmem:[%s8 + $0x50] sm:$0xff]
          %v1320 = vld [vmem:[%s8 + $0x58] sm:$0xff]
          %v1321 = vld [vmem:[%s8 + $0x60] sm:$0xff]
          %v1322 = vld [vmem:[%s8 + $0x68] sm:$0xff]
          %v1323 = vld [vmem:[%s8 + $0x70] sm:$0xff]
          %v1324 = vld [vmem:[%s8 + $0x78] sm:$0xff]
          %vm1325 = vcmask 523264
          %v1327 = vsel %vm1325, %v1308, 0
          %1329 = vmatprep.subr.mxu0 0.0
          %1330 = vmatpush1.msra.mxu0 0.0
          %1331 = vmatprep.subr.mxu0 0.0
          %1332 = vmatpush1.msra.mxu0 0.0
          %1333 = vmatprep.subr.mxu0 0.0
          %1334 = vmatpush1.msra.mxu0 0.0
          %1335 = vmatprep.subr.mxu0 0.0
          %1336 = vmatpush1.msra.mxu0 0.0
          %1337 = vmatprep.subr.mxu0 0.0
          %1338 = vmatpush1.msra.mxu0 0.0
          %1339 = vmatprep.subr.mxu0 0.0
          %1340 = vmatpush1.msra.mxu0 0.0
          %1341 = vmatprep.subr.mxu0 0.0
          %1342 = vmatpush1.msra.mxu0 0.0
          %1343 = vmatprep.subr.mxu0 0.0
          %1344 = vmatpush1.msra.mxu0 0.0
          %1345 = vmatprep.subr.mxu0 %v1324
          %1346 = vmatpush1.msra.mxu0 %v1323
          %1347 = vmatprep.subr.mxu0 %v1322
          %1348 = vmatpush1.msra.mxu0 %v1321
          %1349 = vmatprep.subr.mxu0 %v1320
          %1350 = vmatpush1.msra.mxu0 %v1319
          %1351 = vmatprep.subr.mxu0 %v1318
          %1352 = vmatpush1.msra.mxu0 %v1317
          %1353 = vmatprep.subr.mxu0 %v1316
          %1354 = vmatpush1.msra.mxu0 %v1315
          %1355 = vmatprep.subr.mxu0 %v1314
          %1356 = vmatpush1.msra.mxu0 %v1313
          %1357 = vmatprep.subr.mxu0 %v1312
          %1358 = vmatpush1.msra.mxu0 %v1311
          %1359 = vmatprep.subr.mxu0 %v1310
          %1360 = vmatpush1.msra.mxu0 %v1309
          %1361 = vmatprep.subr.mxu0 0.0
          %1362 = vmatpush2.msra.mxu0 0.0
          %1363 = vmatprep.subr.mxu0 0.0
          %1364 = vmatpush2.msra.mxu0 0.0
          %1365 = vmatprep.subr.mxu0 0.0
          %1366 = vmatpush2.msra.mxu0 0.0
          %1367 = vmatprep.subr.mxu0 0.0
          %1368 = vmatpush2.msra.mxu0 0.0
          %1369 = vmatprep.subr.mxu0 0.0
          %1370 = vmatpush2.msra.mxu0 0.0
          %1371 = vmatprep.subr.mxu0 0.0
          %1372 = vmatpush2.msra.mxu0 0.0
          %1373 = vmatprep.subr.mxu0 0.0
          %1374 = vmatpush2.msra.mxu0 0.0
          %1375 = vmatprep.subr.mxu0 0.0
          %1376 = vmatpush2.msra.mxu0 0.0
          %1377 = vmatprep.subr.mxu0 0.0
          %1378 = vmatpush2.msra.mxu0 0.0
          %1379 = vmatprep.subr.mxu0 0.0
          %1380 = vmatpush2.msra.mxu0 0.0
          %1381 = vmatprep.subr.mxu0 0.0
          %1382 = vmatpush2.msra.mxu0 0.0
          %1383 = vmatprep.subr.mxu0 0.0
          %1384 = vmatpush2.msra.mxu0 0.0
          %1385 = vmatprep.subr.mxu0 0.0
          %1386 = vmatpush2.msra.mxu0 0.0
          %1387 = vmatprep.subr.mxu0 0.0
          %1388 = vmatpush2.msra.mxu0 0.0
          %1389 = vmatprep.subr.mxu0 0.0
          %1390 = vmatpush2.msra.mxu0 0.0
          %1391 = vmatprep.subr.mxu0 0.0
          %1392 = vmatpush2.msra.mxu0 0.0
          %1393 = vmatprep.mubr.f32.mxu0 0.0
          %1394 = vmatmul.mubr.f32.gmra.mxu0 %v1327
          %v1395 = vpop.f32.mrf.mxu0
          %v1396 = vadd.f32 0.0, %v1395
          %v1397 = vpop.f32.mrf.mxu0
          %v1398 = vadd.f32 0.0, %v1397
          %1399 = vdwg.mxu0
          %v1400 = vld [vmem:[%s11] sm:$0xf]
          %v1401 = vld [vmem:[%s508] sm:$0x3]
          %1403 = vset.pattern.permute.xlu0 0
          %1404 = vperm.xlu0 %1403, %v1400
          %v1405 = vpop.permute.xlu0 %1404
          %v1408 = vlaneseq
          %v1409 = vshrl.u32 %v1408, 7
          %v1410 = vsub.s32 0, %v1409
          %v1411 = vrot.slane %v1401, %v1410
          %v1412 = vlaneseq
          %v1413 = vshrl.u32 %v1412, 7
          %v1414 = vsub.s32 1, %v1413
          %v1415 = vrot.slane %v1401, %v1414
          %v1418 = vmul.f32 %v1405, %v1411
          %v1419 = vmul.f32 %v1405, %v1415
          %1420 = vmatprep.subr.mxu0 %v569
          %1421 = vmatpush1.msra.mxu0 %v568
          %1422 = vmatprep.subr.mxu0 %v567
          %1423 = vmatpush1.msra.mxu0 %v566
          %1424 = vmatprep.subr.mxu0 %v565
          %1425 = vmatpush1.msra.mxu0 %v564
          %1426 = vmatprep.subr.mxu0 %v563
          %1427 = vmatpush1.msra.mxu0 %v562
          %1428 = vmatprep.subr.mxu0 %v561
          %1429 = vmatpush1.msra.mxu0 %v560
          %1430 = vmatprep.subr.mxu0 %v559
          %1431 = vmatpush1.msra.mxu0 %v558
          %1432 = vmatprep.subr.mxu0 %v557
          %1433 = vmatpush1.msra.mxu0 %v556
          %1434 = vmatprep.subr.mxu0 %v555
          %1435 = vmatpush1.msra.mxu0 %v554
          %1436 = vmatprep.subr.mxu0 %v553
          %1437 = vmatpush1.msra.mxu0 %v552
          %1438 = vmatprep.subr.mxu0 %v551
          %1439 = vmatpush1.msra.mxu0 %v550
          %1440 = vmatprep.subr.mxu0 %v549
          %1441 = vmatpush1.msra.mxu0 %v548
          %1442 = vmatprep.subr.mxu0 %v547
          %1443 = vmatpush1.msra.mxu0 %v546
          %1444 = vmatprep.subr.mxu0 %v545
          %1445 = vmatpush1.msra.mxu0 %v544
          %1446 = vmatprep.subr.mxu0 %v543
          %1447 = vmatpush1.msra.mxu0 %v542
          %1448 = vmatprep.subr.mxu0 %v541
          %1449 = vmatpush1.msra.mxu0 %v540
          %1450 = vmatprep.subr.mxu0 %v539
          %1451 = vmatpush1.msra.mxu0 %v538
          %1452 = vmatprep.subr.mxu0 %v601
          %1453 = vmatpush2.msra.mxu0 %v600
          %1454 = vmatprep.subr.mxu0 %v599
          %1455 = vmatpush2.msra.mxu0 %v598
          %1456 = vmatprep.subr.mxu0 %v597
          %1457 = vmatpush2.msra.mxu0 %v596
          %1458 = vmatprep.subr.mxu0 %v595
          %1459 = vmatpush2.msra.mxu0 %v594
          %1460 = vmatprep.subr.mxu0 %v593
          %1461 = vmatpush2.msra.mxu0 %v592
          %1462 = vmatprep.subr.mxu0 %v591
          %1463 = vmatpush2.msra.mxu0 %v590
          %1464 = vmatprep.subr.mxu0 %v589
          %1465 = vmatpush2.msra.mxu0 %v588
          %1466 = vmatprep.subr.mxu0 %v587
          %1467 = vmatpush2.msra.mxu0 %v586
          %1468 = vmatprep.subr.mxu0 %v585
          %1469 = vmatpush2.msra.mxu0 %v584
          %1470 = vmatprep.subr.mxu0 %v583
          %1471 = vmatpush2.msra.mxu0 %v582
          %1472 = vmatprep.subr.mxu0 %v581
          %1473 = vmatpush2.msra.mxu0 %v580
          %1474 = vmatprep.subr.mxu0 %v579
          %1475 = vmatpush2.msra.mxu0 %v578
          %1476 = vmatprep.subr.mxu0 %v577
          %1477 = vmatpush2.msra.mxu0 %v576
          %1478 = vmatprep.subr.mxu0 %v575
          %1479 = vmatpush2.msra.mxu0 %v574
          %1480 = vmatprep.subr.mxu0 %v573
          %1481 = vmatpush2.msra.mxu0 %v572
          %1482 = vmatprep.subr.mxu0 %v571
          %1483 = vmatpush2.msra.mxu0 %v570
          %1484 = vmatprep.mubr.f32.mxu0 %v1398
          %1485 = vmatmul.mubr.f32.gmra.mxu0 %v1396
          %v1486 = vpop.f32.mrf.mxu0
          %v1487 = vadd.f32 %v1418, %v1486
          %v1488 = vpop.f32.mrf.mxu0
          %v1489 = vadd.f32 %v1419, %v1488
          %1490 = vdwg.mxu0
          %v1493 = vcombine.low %v1487, %v1489
          %1495 = vst [vmem:[#allocation3] sm:$0xff] %v1493
          %v1496 = vld [vmem:[%s513] sm:$0xff]
          %v1497 = vld [vmem:[%s523] sm:$0xff]
          %v1498 = vld [vmem:[%s523 + $0x8] sm:$0xff]
          %v1499 = vld [vmem:[%s523 + $0x10] sm:$0xff]
          %v1500 = vld [vmem:[%s523 + $0x18] sm:$0xff]
          %v1501 = vld [vmem:[%s523 + $0x20] sm:$0xff]
          %v1502 = vld [vmem:[%s523 + $0x28] sm:$0xff]
          %v1503 = vld [vmem:[%s523 + $0x30] sm:$0xff]
          %v1504 = vld [vmem:[%s523 + $0x38] sm:$0xff]
          %v1505 = vld [vmem:[%s523 + $0x40] sm:$0xff]
          %v1506 = vld [vmem:[%s523 + $0x48] sm:$0xff]
          %v1507 = vld [vmem:[%s523 + $0x50] sm:$0xff]
          %v1508 = vld [vmem:[%s523 + $0x58] sm:$0xff]
          %v1509 = vld [vmem:[%s523 + $0x60] sm:$0xff]
          %v1510 = vld [vmem:[%s523 + $0x68] sm:$0xff]
          %v1511 = vld [vmem:[%s523 + $0x70] sm:$0xff]
          %v1512 = vld [vmem:[%s523 + $0x78] sm:$0xff]
          %v1513 = vld [vmem:[%s523 + $0x80] sm:$0xff]
          %v1514 = vld [vmem:[%s523 + $0x88] sm:$0xff]
          %v1515 = vld [vmem:[%s523 + $0x90] sm:$0xff]
          %v1516 = vld [vmem:[%s523 + $0x98] sm:$0xff]
          %v1517 = vld [vmem:[%s523 + $0xa0] sm:$0xff]
          %v1518 = vld [vmem:[%s523 + $0xa8] sm:$0xff]
          %v1519 = vld [vmem:[%s523 + $0xb0] sm:$0xff]
          %v1520 = vld [vmem:[%s523 + $0xb8] sm:$0xff]
          %v1521 = vld [vmem:[%s523 + $0xc0] sm:$0xff]
          %v1522 = vld [vmem:[%s523 + $0xc8] sm:$0xff]
          %v1523 = vld [vmem:[%s523 + $0xd0] sm:$0xff]
          %v1524 = vld [vmem:[%s523 + $0xd8] sm:$0xff]
          %v1525 = vld [vmem:[%s523 + $0xe0] sm:$0xff]
          %v1526 = vld [vmem:[%s523 + $0xe8] sm:$0xff]
          %v1527 = vld [vmem:[%s523 + $0xf0] sm:$0xff]
          %v1528 = vld [vmem:[%s523 + $0xf8] sm:$0xff]
          %v1529 = vld [vmem:[%s523 + $0x100] sm:$0xff]
          %v1530 = vld [vmem:[%s523 + $0x108] sm:$0xff]
          %v1531 = vld [vmem:[%s523 + $0x110] sm:$0xff]
          %v1532 = vld [vmem:[%s523 + $0x118] sm:$0xff]
          %v1533 = vld [vmem:[%s523 + $0x120] sm:$0xff]
          %v1534 = vld [vmem:[%s523 + $0x128] sm:$0xff]
          %v1535 = vld [vmem:[%s523 + $0x130] sm:$0xff]
          %v1536 = vld [vmem:[%s523 + $0x138] sm:$0xff]
          %v1537 = vld [vmem:[%s523 + $0x140] sm:$0xff]
          %v1538 = vld [vmem:[%s523 + $0x148] sm:$0xff]
          %v1539 = vld [vmem:[%s523 + $0x150] sm:$0xff]
          %v1540 = vld [vmem:[%s523 + $0x158] sm:$0xff]
          %v1541 = vld [vmem:[%s523 + $0x160] sm:$0xff]
          %v1542 = vld [vmem:[%s523 + $0x168] sm:$0xff]
          %v1543 = vld [vmem:[%s523 + $0x170] sm:$0xff]
          %v1544 = vld [vmem:[%s523 + $0x178] sm:$0xff]
          %v1545 = vld [vmem:[%s523 + $0x180] sm:$0xff]
          %v1546 = vld [vmem:[%s523 + $0x188] sm:$0xff]
          %v1547 = vld [vmem:[%s523 + $0x190] sm:$0xff]
          %v1548 = vld [vmem:[%s523 + $0x198] sm:$0xff]
          %v1549 = vld [vmem:[%s523 + $0x1a0] sm:$0xff]
          %v1550 = vld [vmem:[%s523 + $0x1a8] sm:$0xff]
          %v1551 = vld [vmem:[%s523 + $0x1b0] sm:$0xff]
          %v1552 = vld [vmem:[%s523 + $0x1b8] sm:$0xff]
          %v1553 = vld [vmem:[%s523 + $0x1c0] sm:$0xff]
          %v1554 = vld [vmem:[%s523 + $0x1c8] sm:$0xff]
          %v1555 = vld [vmem:[%s523 + $0x1d0] sm:$0xff]
          %v1556 = vld [vmem:[%s523 + $0x1d8] sm:$0xff]
          %v1557 = vld [vmem:[%s523 + $0x1e0] sm:$0xff]
          %v1558 = vld [vmem:[%s523 + $0x1e8] sm:$0xff]
          %v1559 = vld [vmem:[%s523 + $0x1f0] sm:$0xff]
          %v1560 = vld [vmem:[%s523 + $0x1f8] sm:$0xff]
          %v1562 = vcombine.high %v1496, %v1496
          %1564 = vmatprep.subr.mxu0 %v1528
          %1565 = vmatpush1.msra.mxu0 %v1527
          %1566 = vmatprep.subr.mxu0 %v1526
          %1567 = vmatpush1.msra.mxu0 %v1525
          %1568 = vmatprep.subr.mxu0 %v1524
          %1569 = vmatpush1.msra.mxu0 %v1523
          %1570 = vmatprep.subr.mxu0 %v1522
          %1571 = vmatpush1.msra.mxu0 %v1521
          %1572 = vmatprep.subr.mxu0 %v1520
          %1573 = vmatpush1.msra.mxu0 %v1519
          %1574 = vmatprep.subr.mxu0 %v1518
          %1575 = vmatpush1.msra.mxu0 %v1517
          %1576 = vmatprep.subr.mxu0 %v1516
          %1577 = vmatpush1.msra.mxu0 %v1515
          %1578 = vmatprep.subr.mxu0 %v1514
          %1579 = vmatpush1.msra.mxu0 %v1513
          %1580 = vmatprep.subr.mxu0 %v1512
          %1581 = vmatpush1.msra.mxu0 %v1511
          %1582 = vmatprep.subr.mxu0 %v1510
          %1583 = vmatpush1.msra.mxu0 %v1509
          %1584 = vmatprep.subr.mxu0 %v1508
          %1585 = vmatpush1.msra.mxu0 %v1507
          %1586 = vmatprep.subr.mxu0 %v1506
          %1587 = vmatpush1.msra.mxu0 %v1505
          %1588 = vmatprep.subr.mxu0 %v1504
          %1589 = vmatpush1.msra.mxu0 %v1503
          %1590 = vmatprep.subr.mxu0 %v1502
          %1591 = vmatpush1.msra.mxu0 %v1501
          %1592 = vmatprep.subr.mxu0 %v1500
          %1593 = vmatpush1.msra.mxu0 %v1499
          %1594 = vmatprep.subr.mxu0 %v1498
          %1595 = vmatpush1.msra.mxu0 %v1497
          %1596 = vmatprep.subr.mxu0 %v1560
          %1597 = vmatpush2.msra.mxu0 %v1559
          %1598 = vmatprep.subr.mxu0 %v1558
          %1599 = vmatpush2.msra.mxu0 %v1557
          %1600 = vmatprep.subr.mxu0 %v1556
          %1601 = vmatpush2.msra.mxu0 %v1555
          %1602 = vmatprep.subr.mxu0 %v1554
          %1603 = vmatpush2.msra.mxu0 %v1553
          %1604 = vmatprep.subr.mxu0 %v1552
          %1605 = vmatpush2.msra.mxu0 %v1551
          %1606 = vmatprep.subr.mxu0 %v1550
          %1607 = vmatpush2.msra.mxu0 %v1549
          %1608 = vmatprep.subr.mxu0 %v1548
          %1609 = vmatpush2.msra.mxu0 %v1547
          %1610 = vmatprep.subr.mxu0 %v1546
          %1611 = vmatpush2.msra.mxu0 %v1545
          %1612 = vmatprep.subr.mxu0 %v1544
          %1613 = vmatpush2.msra.mxu0 %v1543
          %1614 = vmatprep.subr.mxu0 %v1542
          %1615 = vmatpush2.msra.mxu0 %v1541
          %1616 = vmatprep.subr.mxu0 %v1540
          %1617 = vmatpush2.msra.mxu0 %v1539
          %1618 = vmatprep.subr.mxu0 %v1538
          %1619 = vmatpush2.msra.mxu0 %v1537
          %1620 = vmatprep.subr.mxu0 %v1536
          %1621 = vmatpush2.msra.mxu0 %v1535
          %1622 = vmatprep.subr.mxu0 %v1534
          %1623 = vmatpush2.msra.mxu0 %v1533
          %1624 = vmatprep.subr.mxu0 %v1532
          %1625 = vmatpush2.msra.mxu0 %v1531
          %1626 = vmatprep.subr.mxu0 %v1530
          %1627 = vmatpush2.msra.mxu0 %v1529
          %1628 = vmatprep.mubr.f32.mxu0 %v1562
          %1629 = vmatmul.mubr.f32.gmra.mxu0 %v1496
          %v1630 = vpop.f32.mrf.mxu0
          %v1631 = vadd.f32 0.0, %v1630
          %v1632 = vpop.f32.mrf.mxu0
          %v1633 = vadd.f32 0.0, %v1632
          %1634 = vdwg.mxu0
          %v1637 = vcombine.low %v1631, %v1633
          %1639 = vst [vmem:[#allocation2] sm:$0xff] %v1637
        $region76: #{fandd_forward.3} parent=67 // pred_fallthru
          _
        %s1640 = sld [smem:[#allocation5 + %s29]]
        %v1641 = vld [vmem:[#allocation2] sm:$0xff]
        %v1642 = vld [vmem:[#allocation4] sm:$0xff]
        %v1643 = vld [vmem:[#allocation4 + $0x8] sm:$0xff]
        %v1644 = vld [vmem:[#allocation4 + $0x10] sm:$0xff]
        %v1645 = vld [vmem:[#allocation4 + $0x18] sm:$0xff]
        %v1646 = vld [vmem:[#allocation4 + $0x20] sm:$0xff]
        %v1647 = vld [vmem:[#allocation4 + $0x28] sm:$0xff]
        %v1648 = vld [vmem:[#allocation4 + $0x30] sm:$0xff]
        %v1649 = vld [vmem:[#allocation4 + $0x38] sm:$0xff]
        %v1650 = vld [vmem:[#allocation4 + $0x40] sm:$0xff]
        %v1651 = vld [vmem:[#allocation4 + $0x48] sm:$0xff]
        %v1652 = vld [vmem:[#allocation4 + $0x50] sm:$0xff]
        %v1653 = vld [vmem:[#allocation4 + $0x58] sm:$0xff]
        %v1654 = vld [vmem:[#allocation4 + $0x60] sm:$0xff]
        %v1655 = vld [vmem:[#allocation4 + $0x68] sm:$0xff]
        %v1656 = vld [vmem:[#allocation4 + $0x70] sm:$0xff]
        %v1657 = vld [vmem:[#allocation4 + $0x78] sm:$0xff]
        %v1658 = vld [vmem:[#allocation4 + $0x80] sm:$0xff]
        %v1659 = vld [vmem:[#allocation4 + $0x88] sm:$0xff]
        %v1660 = vld [vmem:[#allocation4 + $0x90] sm:$0xff]
        %v1661 = vld [vmem:[#allocation4 + $0x98] sm:$0xff]
        %v1662 = vld [vmem:[#allocation4 + $0xa0] sm:$0xff]
        %v1663 = vld [vmem:[#allocation4 + $0xa8] sm:$0xff]
        %v1664 = vld [vmem:[#allocation4 + $0xb0] sm:$0xff]
        %v1665 = vld [vmem:[#allocation4 + $0xb8] sm:$0xff]
        %v1666 = vld [vmem:[#allocation4 + $0xc0] sm:$0xff]
        %v1667 = vld [vmem:[#allocation4 + $0xc8] sm:$0xff]
        %v1668 = vld [vmem:[#allocation4 + $0xd0] sm:$0xff]
        %v1669 = vld [vmem:[#allocation4 + $0xd8] sm:$0xff]
        %v1670 = vld [vmem:[#allocation4 + $0xe0] sm:$0xff]
        %v1671 = vld [vmem:[#allocation4 + $0xe8] sm:$0xff]
        %v1672 = vld [vmem:[#allocation4 + $0xf0] sm:$0xff]
        %v1673 = vld [vmem:[#allocation4 + $0xf8] sm:$0xff]
        %v1674 = vld [vmem:[#allocation4 + $0x100] sm:$0xff]
        %v1675 = vld [vmem:[#allocation4 + $0x108] sm:$0xff]
        %v1676 = vld [vmem:[#allocation4 + $0x110] sm:$0xff]
        %v1677 = vld [vmem:[#allocation4 + $0x118] sm:$0xff]
        %v1678 = vld [vmem:[#allocation4 + $0x120] sm:$0xff]
        %v1679 = vld [vmem:[#allocation4 + $0x128] sm:$0xff]
        %v1680 = vld [vmem:[#allocation4 + $0x130] sm:$0xff]
        %v1681 = vld [vmem:[#allocation4 + $0x138] sm:$0xff]
        %v1682 = vld [vmem:[#allocation4 + $0x140] sm:$0xff]
        %v1683 = vld [vmem:[#allocation4 + $0x148] sm:$0xff]
        %v1684 = vld [vmem:[#allocation4 + $0x150] sm:$0xff]
        %v1685 = vld [vmem:[#allocation4 + $0x158] sm:$0xff]
        %v1686 = vld [vmem:[#allocation4 + $0x160] sm:$0xff]
        %v1687 = vld [vmem:[#allocation4 + $0x168] sm:$0xff]
        %v1688 = vld [vmem:[#allocation4 + $0x170] sm:$0xff]
        %v1689 = vld [vmem:[#allocation4 + $0x178] sm:$0xff]
        %v1690 = vld [vmem:[#allocation4 + $0x180] sm:$0xff]
        %v1691 = vld [vmem:[#allocation4 + $0x188] sm:$0xff]
        %v1692 = vld [vmem:[#allocation4 + $0x190] sm:$0xff]
        %v1693 = vld [vmem:[#allocation4 + $0x198] sm:$0xff]
        %v1694 = vld [vmem:[#allocation4 + $0x1a0] sm:$0xff]
        %v1695 = vld [vmem:[#allocation4 + $0x1a8] sm:$0xff]
        %v1696 = vld [vmem:[#allocation4 + $0x1b0] sm:$0xff]
        %v1697 = vld [vmem:[#allocation4 + $0x1b8] sm:$0xff]
        %v1698 = vld [vmem:[#allocation4 + $0x1c0] sm:$0xff]
        %v1699 = vld [vmem:[#allocation4 + $0x1c8] sm:$0xff]
        %v1700 = vld [vmem:[#allocation4 + $0x1d0] sm:$0xff]
        %v1701 = vld [vmem:[#allocation4 + $0x1d8] sm:$0xff]
        %v1702 = vld [vmem:[#allocation4 + $0x1e0] sm:$0xff]
        %v1703 = vld [vmem:[#allocation4 + $0x1e8] sm:$0xff]
        %v1704 = vld [vmem:[#allocation4 + $0x1f0] sm:$0xff]
        %v1705 = vld [vmem:[#allocation4 + $0x1f8] sm:$0xff]
        %v1707 = vcombine.high %v1641, %v1641
        %1709 = vmatprep.subr.mxu0 %v1673
        %1710 = vmatpush1.msra.mxu0 %v1672
        %1711 = vmatprep.subr.mxu0 %v1671
        %1712 = vmatpush1.msra.mxu0 %v1670
        %1713 = vmatprep.subr.mxu0 %v1669
        %1714 = vmatpush1.msra.mxu0 %v1668
        %1715 = vmatprep.subr.mxu0 %v1667
        %1716 = vmatpush1.msra.mxu0 %v1666
        %1717 = vmatprep.subr.mxu0 %v1665
        %1718 = vmatpush1.msra.mxu0 %v1664
        %1719 = vmatprep.subr.mxu0 %v1663
        %1720 = vmatpush1.msra.mxu0 %v1662
        %1721 = vmatprep.subr.mxu0 %v1661
        %1722 = vmatpush1.msra.mxu0 %v1660
        %1723 = vmatprep.subr.mxu0 %v1659
        %1724 = vmatpush1.msra.mxu0 %v1658
        %1725 = vmatprep.subr.mxu0 %v1657
        %1726 = vmatpush1.msra.mxu0 %v1656
        %1727 = vmatprep.subr.mxu0 %v1655
        %1728 = vmatpush1.msra.mxu0 %v1654
        %1729 = vmatprep.subr.mxu0 %v1653
        %1730 = vmatpush1.msra.mxu0 %v1652
        %1731 = vmatprep.subr.mxu0 %v1651
        %1732 = vmatpush1.msra.mxu0 %v1650
        %1733 = vmatprep.subr.mxu0 %v1649
        %1734 = vmatpush1.msra.mxu0 %v1648
        %1735 = vmatprep.subr.mxu0 %v1647
        %1736 = vmatpush1.msra.mxu0 %v1646
        %1737 = vmatprep.subr.mxu0 %v1645
        %1738 = vmatpush1.msra.mxu0 %v1644
        %1739 = vmatprep.subr.mxu0 %v1643
        %1740 = vmatpush1.msra.mxu0 %v1642
        %1741 = vmatprep.subr.mxu0 %v1705
        %1742 = vmatpush2.msra.mxu0 %v1704
        %1743 = vmatprep.subr.mxu0 %v1703
        %1744 = vmatpush2.msra.mxu0 %v1702
        %1745 = vmatprep.subr.mxu0 %v1701
        %1746 = vmatpush2.msra.mxu0 %v1700
        %1747 = vmatprep.subr.mxu0 %v1699
        %1748 = vmatpush2.msra.mxu0 %v1698
        %1749 = vmatprep.subr.mxu0 %v1697
        %1750 = vmatpush2.msra.mxu0 %v1696
        %1751 = vmatprep.subr.mxu0 %v1695
        %1752 = vmatpush2.msra.mxu0 %v1694
        %1753 = vmatprep.subr.mxu0 %v1693
        %1754 = vmatpush2.msra.mxu0 %v1692
        %1755 = vmatprep.subr.mxu0 %v1691
        %1756 = vmatpush2.msra.mxu0 %v1690
        %1757 = vmatprep.subr.mxu0 %v1689
        %1758 = vmatpush2.msra.mxu0 %v1688
        %1759 = vmatprep.subr.mxu0 %v1687
        %1760 = vmatpush2.msra.mxu0 %v1686
        %1761 = vmatprep.subr.mxu0 %v1685
        %1762 = vmatpush2.msra.mxu0 %v1684
        %1763 = vmatprep.subr.mxu0 %v1683
        %1764 = vmatpush2.msra.mxu0 %v1682
        %1765 = vmatprep.subr.mxu0 %v1681
        %1766 = vmatpush2.msra.mxu0 %v1680
        %1767 = vmatprep.subr.mxu0 %v1679
        %1768 = vmatpush2.msra.mxu0 %v1678
        %1769 = vmatprep.subr.mxu0 %v1677
        %1770 = vmatpush2.msra.mxu0 %v1676
        %1771 = vmatprep.subr.mxu0 %v1675
        %1772 = vmatpush2.msra.mxu0 %v1674
        %1773 = vmatprep.mubr.f32.mxu0 %v1707
        %1774 = vmatmul.mubr.f32.gmra.mxu0 %v1641
        %v1775 = vpop.f32.mrf.mxu0
        %v1776 = vadd.f32 0.0, %v1775
        %v1777 = vpop.f32.mrf.mxu0
        %v1778 = vadd.f32 0.0, %v1777
        %1779 = vdwg.mxu0
        %v1780 = vld [vmem:[%s9] sm:$0xf]
        %vm1781 = vcmask 31744
        %v1783 = vsel %vm1781, %v1780, 0
        %vm1785 = vcmask 1043456
        %v1786 = vsel %vm1785, %v1641, 0
        %v1788 = vsel %vm1785, %v1707, 0
        %1790 = vmatprep.subr.mxu0 0.0
        %1791 = vmatpush1.msra.mxu0 0.0
        %1792 = vmatprep.subr.mxu0 0.0
        %1793 = vmatpush1.msra.mxu0 0.0
        %1794 = vmatprep.subr.mxu0 0.0
        %1795 = vmatpush1.msra.mxu0 0.0
        %1796 = vmatprep.subr.mxu0 0.0
        %1797 = vmatpush1.msra.mxu0 0.0
        %1798 = vmatprep.subr.mxu0 0.0
        %1799 = vmatpush1.msra.mxu0 0.0
        %1800 = vmatprep.subr.mxu0 0.0
        %1801 = vmatpush1.msra.mxu0 0.0
        %1802 = vmatprep.subr.mxu0 0.0
        %1803 = vmatpush1.msra.mxu0 0.0
        %1804 = vmatprep.subr.mxu0 0.0
        %1805 = vmatpush1.msra.mxu0 0.0
        %1806 = vmatprep.subr.mxu0 0.0
        %1807 = vmatpush1.msra.mxu0 0.0
        %1808 = vmatprep.subr.mxu0 0.0
        %1809 = vmatpush1.msra.mxu0 0.0
        %1810 = vmatprep.subr.mxu0 0.0
        %1811 = vmatpush1.msra.mxu0 0.0
        %1812 = vmatprep.subr.mxu0 0.0
        %1813 = vmatpush1.msra.mxu0 0.0
        %1814 = vmatprep.subr.mxu0 0.0
        %1815 = vmatpush1.msra.mxu0 0.0
        %1816 = vmatprep.subr.mxu0 0.0
        %1817 = vmatpush1.msra.mxu0 0.0
        %1818 = vmatprep.subr.mxu0 0.0
        %1819 = vmatpush1.msra.mxu0 0.0
        %1820 = vmatprep.subr.mxu0 %v1788
        %1821 = vmatpush1.msra.mxu0 %v1786
        %1822 = vmatprep.subr.mxu0 0.0
        %1823 = vmatpush2.msra.mxu0 0.0
        %1824 = vmatprep.subr.mxu0 0.0
        %1825 = vmatpush2.msra.mxu0 0.0
        %1826 = vmatprep.subr.mxu0 0.0
        %1827 = vmatpush2.msra.mxu0 0.0
        %1828 = vmatprep.subr.mxu0 0.0
        %1829 = vmatpush2.msra.mxu0 0.0
        %1830 = vmatprep.subr.mxu0 0.0
        %1831 = vmatpush2.msra.mxu0 0.0
        %1832 = vmatprep.subr.mxu0 0.0
        %1833 = vmatpush2.msra.mxu0 0.0
        %1834 = vmatprep.subr.mxu0 0.0
        %1835 = vmatpush2.msra.mxu0 0.0
        %1836 = vmatprep.subr.mxu0 0.0
        %1837 = vmatpush2.msra.mxu0 0.0
        %1838 = vmatprep.subr.mxu0 0.0
        %1839 = vmatpush2.msra.mxu0 0.0
        %1840 = vmatprep.subr.mxu0 0.0
        %1841 = vmatpush2.msra.mxu0 0.0
        %1842 = vmatprep.subr.mxu0 0.0
        %1843 = vmatpush2.msra.mxu0 0.0
        %1844 = vmatprep.subr.mxu0 0.0
        %1845 = vmatpush2.msra.mxu0 0.0
        %1846 = vmatprep.subr.mxu0 0.0
        %1847 = vmatpush2.msra.mxu0 0.0
        %1848 = vmatprep.subr.mxu0 0.0
        %1849 = vmatpush2.msra.mxu0 0.0
        %1850 = vmatprep.subr.mxu0 0.0
        %1851 = vmatpush2.msra.mxu0 0.0
        %1852 = vmatprep.subr.mxu0 0.0
        %1853 = vmatpush2.msra.mxu0 0.0
        %1854 = vmatprep.mubr.f32.mxu0 0.0
        %1855 = vmatmul.mubr.f32.gmra.mxu0 %v1783
        %v1856 = vpop.f32.mrf.mxu0
        %v1857 = vadd.f32 0.0, %v1856
        %v1858 = vpop.f32.mrf.mxu0
        %v1859 = vadd.f32 0.0, %v1858
        %1860 = vdwg.mxu0
        %v1861 = vld [vmem:[#allocation3] sm:$0xff]
        %v1864 = vcombine.low %v1776, %v1778
        %v1866 = vsub.f32 %v1861, %v1864
        %v1869 = vcombine.low %v1857, %v1859
        %v1871 = vsub.f32 %v1866, %v1869
        %v1872 = vstv %s1640
        %v1873 = vmul.f32 %v1872, %v1871
        %v1874 = vadd.f32 %v1641, %v1873
        %v1875 = vld [vmem:[%s10] sm:$0xf]
        %v1877 = vcombine.high %v1874, %v1874
        %v1879 = vsel %vm1781, %v1875, 0
        %v1881 = vsel %vm1785, %v1874, 0
        %v1883 = vsel %vm1785, %v1877, 0
        %1885 = vmatprep.subr.mxu0 0.0
        %1886 = vmatpush1.msra.mxu0 0.0
        %1887 = vmatprep.subr.mxu0 0.0
        %1888 = vmatpush1.msra.mxu0 0.0
        %1889 = vmatprep.subr.mxu0 0.0
        %1890 = vmatpush1.msra.mxu0 0.0
        %1891 = vmatprep.subr.mxu0 0.0
        %1892 = vmatpush1.msra.mxu0 0.0
        %1893 = vmatprep.subr.mxu0 0.0
        %1894 = vmatpush1.msra.mxu0 0.0
        %1895 = vmatprep.subr.mxu0 0.0
        %1896 = vmatpush1.msra.mxu0 0.0
        %1897 = vmatprep.subr.mxu0 0.0
        %1898 = vmatpush1.msra.mxu0 0.0
        %1899 = vmatprep.subr.mxu0 0.0
        %1900 = vmatpush1.msra.mxu0 0.0
        %1901 = vmatprep.subr.mxu0 0.0
        %1902 = vmatpush1.msra.mxu0 0.0
        %1903 = vmatprep.subr.mxu0 0.0
        %1904 = vmatpush1.msra.mxu0 0.0
        %1905 = vmatprep.subr.mxu0 0.0
        %1906 = vmatpush1.msra.mxu0 0.0
        %1907 = vmatprep.subr.mxu0 0.0
        %1908 = vmatpush1.msra.mxu0 0.0
        %1909 = vmatprep.subr.mxu0 0.0
        %1910 = vmatpush1.msra.mxu0 0.0
        %1911 = vmatprep.subr.mxu0 0.0
        %1912 = vmatpush1.msra.mxu0 0.0
        %1913 = vmatprep.subr.mxu0 0.0
        %1914 = vmatpush1.msra.mxu0 0.0
        %1915 = vmatprep.subr.mxu0 %v1883
        %1916 = vmatpush1.msra.mxu0 %v1881
        %1917 = vmatprep.subr.mxu0 0.0
        %1918 = vmatpush2.msra.mxu0 0.0
        %1919 = vmatprep.subr.mxu0 0.0
        %1920 = vmatpush2.msra.mxu0 0.0
        %1921 = vmatprep.subr.mxu0 0.0
        %1922 = vmatpush2.msra.mxu0 0.0
        %1923 = vmatprep.subr.mxu0 0.0
        %1924 = vmatpush2.msra.mxu0 0.0
        %1925 = vmatprep.subr.mxu0 0.0
        %1926 = vmatpush2.msra.mxu0 0.0
        %1927 = vmatprep.subr.mxu0 0.0
        %1928 = vmatpush2.msra.mxu0 0.0
        %1929 = vmatprep.subr.mxu0 0.0
        %1930 = vmatpush2.msra.mxu0 0.0
        %1931 = vmatprep.subr.mxu0 0.0
        %1932 = vmatpush2.msra.mxu0 0.0
        %1933 = vmatprep.subr.mxu0 0.0
        %1934 = vmatpush2.msra.mxu0 0.0
        %1935 = vmatprep.subr.mxu0 0.0
        %1936 = vmatpush2.msra.mxu0 0.0
        %1937 = vmatprep.subr.mxu0 0.0
        %1938 = vmatpush2.msra.mxu0 0.0
        %1939 = vmatprep.subr.mxu0 0.0
        %1940 = vmatpush2.msra.mxu0 0.0
        %1941 = vmatprep.subr.mxu0 0.0
        %1942 = vmatpush2.msra.mxu0 0.0
        %1943 = vmatprep.subr.mxu0 0.0
        %1944 = vmatpush2.msra.mxu0 0.0
        %1945 = vmatprep.subr.mxu0 0.0
        %1946 = vmatpush2.msra.mxu0 0.0
        %1947 = vmatprep.subr.mxu0 0.0
        %1948 = vmatpush2.msra.mxu0 0.0
        %1949 = vmatprep.mubr.f32.mxu0 0.0
        %1950 = vmatmul.mubr.f32.gmra.mxu0 %v1879
        %v1951 = vpop.f32.mrf.mxu0
        %v1952 = vadd.f32 0.0, %v1951
        %v1953 = vpop.f32.mrf.mxu0
        %v1954 = vadd.f32 0.0, %v1953
        %1955 = vdwg.mxu0
        %v1958 = vcombine.low %v1952, %v1954
        %1960 = vst [vmem:[#allocation2] sm:$0xff] %v1958
        %1961 = vst [vmem:[%s533] sm:$0xff] %v1958
        %p1962 = scmp.lt.s32.totalorder %s28, 1
        %s1963 = scalar_select %p1962, %s28, 1
        %s1964 = smul.addr %s1963, 2
        %s1965 = smul.addr %s1964, 4
        %s1966 = scalar_lea.vmem %s12, %s1965
        // Predicated region
        $region77: #{fandd_forward.3} parent=67 // pred_check
          %p1967 = pneg %p336
        $region78: #{fandd_forward.3} parent=67 // pred_check_branch
          %1969 = sbr.rel (%p1967) target = $region80
        $region79: #{fandd_forward.3} parent=67 // pred_region
          _
        $region80: #{fandd_forward.3} parent=67 // pred_fallthru
          _
      $region68: #{fandd_forward.3} parent=5 // pred_fallthru
        _
      %p1970 = scmp.le.s32.totalorder 2, %s19
      // Predicated region
      $region81: #{fandd_forward.3} parent=5 // pred_check
        %p1971 = pneg %p1970
      $region82: #{fandd_forward.3} parent=5 // pred_check_branch
        %1973 = sbr.rel (%p1971) target = $region84
      $region83: #{fandd_forward.3} parent=5 // pred_region
        %s1974 = ssub.s32 %s19, 2
        // Predicated region
        $region85: #{fandd_forward.3} parent=83 // pred_check
          %p1975 = pneg %p342
        $region86: #{fandd_forward.3} parent=83 // pred_check_branch
          %1977 = sbr.rel (%p1975) target = $region88
        $region87: #{fandd_forward.3} parent=83 // pred_region
          %p1978 = scmp.lt.s32.totalorder %s30, 1
          %s1979 = scalar_select %p1978, %s30, 1
          %s1980 = smul.addr %s1979, 2
          %s1981 = smul.addr %s1980, 4
          %s1982 = scalar_lea.vmem %s12, %s1981
        $region88: #{fandd_forward.3} parent=83 // pred_fallthru
          _
      $region84: #{fandd_forward.3} parent=5 // pred_fallthru
        _
    $region6: #{fandd_forward.3} parent=1 // loop_footer
      %s23 = sadd.s32 1, %s19
    $region7: #{fandd_forward.3} parent=1 // loop_footer_branch
      %18 = sbr.rel target = $region3
    $region8: #{fandd_forward.3} parent=1 // loop_exit
      _
    %1983 = vsyncpa [#allocation6], 1
    %s1984 = scalar_lea.sflag [#allocation6], 1
    %1985 = vsyncpa %s1984, 1

</llo_original>
